<compile_context>
chip_gen: v5e
topology: v5e:2x2
jax: 0.10.0
libtpu: 0.0.40
codegen_flags: <defaults>
</compile_context>

<pallas_src>
import functools

import jax
import jax.numpy as jnp
from jax.experimental import pallas as pl
from jax.experimental.pallas import tpu as pltpu

F32 = jnp.float32
BF16 = jnp.bfloat16

# ---- scaled-down configuration (stand-ins for the real DeepLabV3 sizes) ----
NUM_CLASSES = 4          # configer('data','num_classes')
PROJ_DIM    = 8          # configer('contrast','proj_dim')  (256 -> 8)
C_STAGES    = (8, 16, 32, 64)   # backbone stage channels (256,512,1024,2048)/32
DSN_MID     = 16         # 512 -> 16
ASPP_INNER  = 16         # 512 -> 16
ASPP_OUT    = 8          # 256 -> 8
DILATIONS   = (12, 24, 36)

# Tile budget: tn=256 matches the 2x256x256 MXU on v6e/v7x (use TN_MAX=128 on
# v5e's 4x128x128 MXUs); tm=tk=512 keeps each bf16 stream ~0.5 MiB so the whole
# pipeline fits comfortably under v7x's 64 MiB VMEM / v5e's 16 MiB scoped limit.
TM_MAX, TN_MAX, TK_MAX = 512, 256, 512


def _round_up(x, m):
    return (x + m - 1) // m * m


def _tile_m(M):
    return M if M <= TM_MAX else TM_MAX


def _tile_n(N):
    return N if N <= TN_MAX else TN_MAX


def _tile_k(K):
    """Returns (tk, K_padded).  K padding only when K-tiling is active and K
    is not a multiple of TK_MAX (never at real DeepLab sizes)."""
    if K <= TK_MAX:
        return K, K
    if K % TK_MAX == 0:
        return TK_MAX, K
    if K <= 2 * TK_MAX:
        return K, K
    return TK_MAX, _round_up(K, TK_MAX)


def _fold_bn(wmat, bias, bn):
    """Fold eval-mode BN (scale, beta) and conv bias into (W', shift)."""
    O = wmat.shape[1]
    scale = bn[0] if bn is not None else jnp.ones((O,), F32)
    beta = bn[1] if bn is not None else jnp.zeros((O,), F32)
    b = bias if bias is not None else jnp.zeros((O,), F32)
    return wmat.astype(F32) * scale[None, :], b * scale + beta


# ----------------------------- Pallas kernels -------------------------------
def _mm_bn_act_kernel(x_ref, w_ref, s_ref, o_ref, acc_ref, *, relu):
    # bf16 x bf16 -> f32 accumulate on the MXU; epilogue: +shift (+ReLU).
    @pl.when(pl.program_id(2) == 0)
    def _():
        acc_ref[...] = jnp.zeros_like(acc_ref)

    acc_ref[...] += jnp.dot(x_ref[...], w_ref[...],
                            preferred_element_type=jnp.float32)

    @pl.when(pl.program_id(2) == pl.num_programs(2) - 1)
    def _():
        y = acc_ref[...] + s_ref[...]
        if relu:
            y = jnp.maximum(y, 0.0)
        o_ref[...] = y.astype(o_ref.dtype)


def fused_matmul(x, w, shift, relu=False, out_dtype=F32):
    """y = relu?(x @ w + shift); x:(M,K), w:(K,N), shift:(N,).  BN/bias are
    pre-folded into w/shift.  bf16 MXU inputs, f32 accumulation."""
    M, K = x.shape
    N = w.shape[1]
    tm, tn = _tile_m(M), _tile_n(N)
    tk, Kp = _tile_k(K)

    xb = x.astype(BF16)
    wb = w.astype(BF16)
    if Kp != K:  # zero-pad K only when K-tiling needs it (zeros are exact)
        xb = jnp.pad(xb, ((0, 0), (0, Kp - K)))
        wb = jnp.pad(wb, ((0, Kp - K), (0, 0)))

    grid = (pl.cdiv(M, tm), pl.cdiv(N, tn), Kp // tk)
    return pl.pallas_call(
        functools.partial(_mm_bn_act_kernel, relu=relu),
        out_shape=jax.ShapeDtypeStruct((M, N), out_dtype),
        grid=grid,
        in_specs=[
            pl.BlockSpec((tm, tk), lambda i, j, k: (i, k)),
            pl.BlockSpec((tk, tn), lambda i, j, k: (k, j)),
            pl.BlockSpec((1, tn), lambda i, j, k: (0, j)),
        ],
        out_specs=pl.BlockSpec((tm, tn), lambda i, j, k: (i, j)),
        scratch_shapes=[pltpu.VMEM((tm, tn), jnp.float32)],
        compiler_params=pltpu.CompilerParams(
            dimension_semantics=("parallel", "parallel", "arbitrary")),
    )(xb, wb, shift.reshape(1, N).astype(F32))


def _head_fused_kernel(x_ref, w1_ref, s1_ref, w2_ref, b2_ref, o_ref, acc_ref,
                       *, relu1, normalize):
    # (x @ W1 + shift1, ReLU) kept in VMEM, then the tiny-N second matmul
    # (+bias, + optional L2 normalize) — no HBM round trip of the intermediate.
    @pl.when(pl.program_id(1) == 0)
    def _():
        acc_ref[...] = jnp.zeros_like(acc_ref)

    acc_ref[...] += jnp.dot(x_ref[...], w1_ref[...],
                            preferred_element_type=jnp.float32)

    @pl.when(pl.program_id(1) == pl.num_programs(1) - 1)
    def _():
        h = acc_ref[...] + s1_ref[...]
        if relu1:
            h = jnp.maximum(h, 0.0)
        y = jnp.dot(h.astype(w2_ref.dtype), w2_ref[...],
                    preferred_element_type=jnp.float32) + b2_ref[...]
        if normalize:  # F.normalize(p=2, dim=channel), kept in f32
            y = y * jax.lax.rsqrt(
                jnp.maximum(jnp.sum(y * y, axis=-1, keepdims=True), 1e-24))
        o_ref[...] = y.astype(o_ref.dtype)


def fused_head(x, w1, shift1, w2, b2, relu1=True, normalize=False,
               out_dtype=F32):
    """y = (relu(x@w1+shift1) @ w2 + b2) [then L2-normalize rows]."""
    M, K = x.shape
    N1, N2 = w1.shape[1], w2.shape[1]
    tm = _tile_m(M)
    tk, Kp = _tile_k(K)

    xb = x.astype(BF16)
    w1b = w1.astype(BF16)
    if Kp != K:
        xb = jnp.pad(xb, ((0, 0), (0, Kp - K)))
        w1b = jnp.pad(w1b, ((0, Kp - K), (0, 0)))

    grid = (pl.cdiv(M, tm), Kp // tk)
    return pl.pallas_call(
        functools.partial(_head_fused_kernel, relu1=relu1, normalize=normalize),
        out_shape=jax.ShapeDtypeStruct((M, N2), out_dtype),
        grid=grid,
        in_specs=[
            pl.BlockSpec((tm, tk), lambda i, k: (i, k)),
            pl.BlockSpec((tk, N1), lambda i, k: (k, 0)),
            pl.BlockSpec((1, N1), lambda i, k: (0, 0)),
            pl.BlockSpec((N1, N2), lambda i, k: (0, 0)),
            pl.BlockSpec((1, N2), lambda i, k: (0, 0)),
        ],
        out_specs=pl.BlockSpec((tm, N2), lambda i, k: (i, 0)),
        scratch_shapes=[pltpu.VMEM((tm, N1), jnp.float32)],
        compiler_params=pltpu.CompilerParams(
            dimension_semantics=("parallel", "arbitrary")),
    )(xb, w1b, shift1.reshape(1, N1).astype(F32),
      w2.astype(BF16), b2.reshape(1, N2).astype(F32))


def _aspp_bottleneck_kernel(f1_ref, f2_ref, f3_ref, f4_ref, f5_ref,
                            w1_ref, w2_ref, w3_ref, w4_ref, w5_ref,
                            s_ref, o_ref):
    # 1x1 conv on the (never-materialized) 5-way concat == sum_b feat_b @ W_b.
    acc = jnp.dot(f1_ref[...], w1_ref[...], preferred_element_type=jnp.float32)
    acc += jnp.dot(f2_ref[...], w2_ref[...], preferred_element_type=jnp.float32)
    acc += jnp.dot(f3_ref[...], w3_ref[...], preferred_element_type=jnp.float32)
    acc += jnp.dot(f4_ref[...], w4_ref[...], preferred_element_type=jnp.float32)
    acc += jnp.dot(f5_ref[...], w5_ref[...], preferred_element_type=jnp.float32)
    o_ref[...] = jnp.maximum(acc + s_ref[...], 0.0).astype(o_ref.dtype)


def aspp_bottleneck(feats2d, w_chunks, shift, out_dtype=BF16):
    M, C = feats2d[0].shape
    N = w_chunks[0].shape[1]
    tm = _tile_m(M)
    fspec = pl.BlockSpec((tm, C), lambda i: (i, 0))
    wspec = pl.BlockSpec((C, N), lambda i: (0, 0))
    return pl.pallas_call(
        _aspp_bottleneck_kernel,
        out_shape=jax.ShapeDtypeStruct((M, N), out_dtype),
        grid=(pl.cdiv(M, tm),),
        in_specs=[fspec] * 5 + [wspec] * 5
                 + [pl.BlockSpec((1, N), lambda i: (0, 0))],
        out_specs=pl.BlockSpec((tm, N), lambda i: (i, 0)),
        compiler_params=pltpu.CompilerParams(dimension_semantics=("parallel",)),
    )(*[f.astype(BF16) for f in feats2d],
      *[w.astype(BF16) for w in w_chunks],
      shift.reshape(1, N).astype(F32))


# ------------------------ conv = im2col + Pallas matmul ----------------------
# TODO(synk): in-kernel tap accumulation (im2col-free conv) would cut activation
# HBM traffic ~9x for 3x3/dilated convs; kept bf16 im2col glue for robustness.
def _im2col(x, kh, kw, stride, padding, dilation, Ho, Wo):
    if kh == 1 and kw == 1 and stride == 1 and padding == 0:
        return x
    xp = jnp.pad(x, ((0, 0), (padding, padding), (padding, padding), (0, 0)))
    patches = []
    for i in range(kh):
        for j in range(kw):
            h0, w0 = i * dilation, j * dilation
            patches.append(
                xp[:, h0:h0 + (Ho - 1) * stride + 1:stride,
                      w0:w0 + (Wo - 1) * stride + 1:stride, :])
    return jnp.concatenate(patches, axis=-1)        # (N,Ho,Wo,kh*kw*C) bf16


def conv2d(x, w, bias=None, stride=1, padding=0, dilation=1,
           bn=None, relu=False, out_dtype=F32):
    """x: NHWC, w: (O,I,kh,kw) PyTorch layout.  BN/bias folded into W/shift."""
    N, H, W, C = x.shape
    O, I, kh, kw = w.shape
    assert I == C
    Ho = (H + 2 * padding - dilation * (kh - 1) - 1) // stride + 1
    Wo = (W + 2 * padding - dilation * (kw - 1) - 1) // stride + 1
    xcol = _im2col(x.astype(BF16), kh, kw, stride, padding, dilation, Ho, Wo)
    K = kh * kw * C
    wmat = jnp.transpose(w, (2, 3, 1, 0)).reshape(K, O)
    wfold, shift = _fold_bn(wmat, bias, bn)
    y = fused_matmul(xcol.reshape(-1, K), wfold, shift,
                     relu=relu, out_dtype=out_dtype)
    return y.reshape(N, Ho, Wo, O)


def conv_bn_relu(x, w, bn, bias=None, stride=1, padding=0, dilation=1):
    # intermediate activations stored bf16 (halves HBM traffic for next layer)
    return conv2d(x, w, bias=bias, stride=stride, padding=padding,
                  dilation=dilation, bn=bn, relu=True, out_dtype=BF16)


def head_conv(x, w1, b1, bn1, w2, b2, padding=0, dilation=1,
              normalize=False, out_dtype=F32):
    """conv(w1)+BN+ReLU fused with the following 1x1 conv(w2) (+L2 norm)."""
    N, H, W, C = x.shape
    O1, _, kh, kw = w1.shape
    O2 = w2.shape[0]
    Ho = H + 2 * padding - dilation * (kh - 1)
    Wo = W + 2 * padding - dilation * (kw - 1)
    xcol = _im2col(x.astype(BF16), kh, kw, 1, padding, dilation, Ho, Wo)
    K = kh * kw * C
    w1mat = jnp.transpose(w1, (2, 3, 1, 0)).reshape(K, O1)
    w1f, shift1 = _fold_bn(w1mat, b1, bn1)
    w2mat = jnp.transpose(w2, (2, 3, 1, 0)).reshape(O1, O2).astype(F32)
    b2v = b2 if b2 is not None else jnp.zeros((O2,), F32)
    y = fused_head(xcol.reshape(-1, K), w1f, shift1, w2mat, b2v,
                   relu1=True, normalize=normalize, out_dtype=out_dtype)
    return y.reshape(N, Ho, Wo, O2)


# ------------------------------- parameters ---------------------------------
def init_params(key):
    keys = iter(jax.random.split(key, 64))
    nk = lambda: next(keys)

    def conv_w(o, i, k):  # kaiming_normal_, fan_in
        std = (2.0 / (i * k * k)) ** 0.5
        return jax.random.normal(nk(), (o, i, k, k), F32) * std

    def bn(c):            # eval BN folded into (scale, shift); mean=0, var=1
        gamma = 1.0 + 0.1 * jax.random.normal(nk(), (c,), F32)
        beta = 0.1 * jax.random.normal(nk(), (c,), F32)
        scale = gamma / jnp.sqrt(jnp.ones((c,), F32) + 1e-5)
        return scale, beta

    C1, C2, C3, C4 = C_STAGES
    backbone = {
        'stem': (conv_w(C1, 3, 3), bn(C1)),
        'l1':   (conv_w(C1, C1, 3), bn(C1)),
        'l2':   (conv_w(C2, C1, 3), bn(C2)),
        'l3':   (conv_w(C3, C2, 3), bn(C3)),
        'l4':   (conv_w(C4, C3, 3), bn(C4)),
    }
    proj = {
        'p1_w': conv_w(C4, C4, 1), 'p1_b': jnp.zeros((C4,), F32), 'p1_bn': bn(C4),
        'p2_w': conv_w(PROJ_DIM, C4, 1), 'p2_b': jnp.zeros((PROJ_DIM,), F32),
    }
    dec = {
        'dsn1_w': conv_w(DSN_MID, C3, 3), 'dsn1_b': jnp.zeros((DSN_MID,), F32),
        'dsn1_bn': bn(DSN_MID),
        'dsn2_w': conv_w(NUM_CLASSES, DSN_MID, 1),
        'dsn2_b': jnp.zeros((NUM_CLASSES,), F32),
        'aspp1_w': conv_w(ASPP_INNER, C4, 1), 'aspp1_bn': bn(ASPP_INNER),
        'aspp2_w': conv_w(ASPP_INNER, C4, 1), 'aspp2_bn': bn(ASPP_INNER),
        'aspp3_w': conv_w(ASPP_INNER, C4, 3), 'aspp3_bn': bn(ASPP_INNER),
        'aspp4_w': conv_w(ASPP_INNER, C4, 3), 'aspp4_bn': bn(ASPP_INNER),
        'aspp5_w': conv_w(ASPP_INNER, C4, 3), 'aspp5_bn': bn(ASPP_INNER),
        'bott_w': conv_w(ASPP_OUT, ASPP_INNER * 5, 1), 'bott_bn': bn(ASPP_OUT),
        'ref1_w': conv_w(ASPP_OUT, ASPP_OUT, 1),
        'ref1_b': jnp.zeros((ASPP_OUT,), F32), 'ref1_bn': bn(ASPP_OUT),
        'ref2_w': conv_w(NUM_CLASSES, ASPP_OUT, 1),
        'ref2_b': jnp.zeros((NUM_CLASSES,), F32),
    }
    return {'backbone': backbone, 'proj': proj, 'decoder': dec}


# -------------------------------- forward -----------------------------------
# TODO(synk): the real backbone is a ResNet-101 picked by BackboneSelector;
# here it is a small synthetic multi-stage dilated CNN with the same stage
# structure (strides 4,8,8,8; last two stages feed the decoder / proj head).
def backbone_forward(p, x):
    h = conv_bn_relu(x, p['stem'][0], p['stem'][1], stride=2, padding=1)
    s1 = conv_bn_relu(h, p['l1'][0], p['l1'][1], stride=2, padding=1)
    s2 = conv_bn_relu(s1, p['l2'][0], p['l2'][1], stride=2, padding=1)
    s3 = conv_bn_relu(s2, p['l3'][0], p['l3'][1], stride=1, padding=2, dilation=2)
    s4 = conv_bn_relu(s3, p['l4'][0], p['l4'][1], stride=1, padding=4, dilation=4)
    return [s1, s2, s3, s4]


def proj_head_forward(p, x):
    # 1x1 conv+BN+ReLU -> 1x1 conv -> F.normalize, all fused in one kernel.
    return head_conv(x, p['p1_w'], p['p1_b'], p['p1_bn'],
                     p['p2_w'], p['p2_b'], normalize=True, out_dtype=F32)


def aspp_forward(p, x):
    N, H, W, C = x.shape
    # AdaptiveAvgPool2d((1,1)): trivially mem-bound, kept in XLA.
    # TODO(synk): a monolithic Pallas GAP block would exceed v7x VMEM at real sizes.
    pooled = jnp.mean(x.astype(F32), axis=(1, 2), keepdims=True)       # (N,1,1,C)
    feat1 = conv_bn_relu(pooled, p['aspp1_w'], p['aspp1_bn'])
    # bilinear align_corners=True upsample of a 1x1 map is a pure broadcast
    feat1 = jnp.broadcast_to(feat1, (N, H, W, feat1.shape[-1]))
    feat2 = conv_bn_relu(x, p['aspp2_w'], p['aspp2_bn'])
    feat3 = conv_bn_relu(x, p['aspp3_w'], p['aspp3_bn'],
                         padding=DILATIONS[0], dilation=DILATIONS[0])
    feat4 = conv_bn_relu(x, p['aspp4_w'], p['aspp4_bn'],
                         padding=DILATIONS[1], dilation=DILATIONS[1])
    feat5 = conv_bn_relu(x, p['aspp5_w'], p['aspp5_bn'],
                         padding=DILATIONS[2], dilation=DILATIONS[2])
    # concat + 1x1 bottleneck, fused: the 5-way concat is never materialized.
    Ci = feat2.shape[-1]
    wmat = jnp.transpose(p['bott_w'], (2, 3, 1, 0)).reshape(5 * Ci, ASPP_OUT)
    wfold, shift = _fold_bn(wmat, None, p['bott_bn'])
    w_chunks = [wfold[b * Ci:(b + 1) * Ci] for b in range(5)]
    feats2d = [f.reshape(-1, Ci) for f in (feat1, feat2, feat3, feat4, feat5)]
    bottle = aspp_bottleneck(feats2d, w_chunks, shift, out_dtype=BF16)
    # TODO(synk): Dropout2d(0.1) treated as identity (eval-mode behavior).
    return bottle.reshape(N, H, W, ASPP_OUT)


def decoder_forward(p, feats):
    # DSN aux head: 3x3 conv+BN+ReLU fused with the 1x1 -> num_classes conv.
    x_dsn = head_conv(feats[-2], p['dsn1_w'], p['dsn1_b'], p['dsn1_bn'],
                      p['dsn2_w'], p['dsn2_b'], padding=1, out_dtype=F32)
    a = aspp_forward(p, feats[-1])
    # refine head: 1x1 conv+BN+ReLU fused with the 1x1 -> num_classes conv.
    seg = head_conv(a, p['ref1_w'], p['ref1_b'], p['ref1_bn'],
                    p['ref2_w'], p['ref2_b'], out_dtype=F32)
    return seg, x_dsn     # [seg, seg_aux]


def deeplabv3_contrast_forward(params, x_nchw, with_embed=False, is_eval=False):
    x = jnp.transpose(x_nchw.astype(F32), (0, 2, 3, 1))           # NCHW -> NHWC
    feats = backbone_forward(params['backbone'], x)
    embedding = None
    if with_embed and not is_eval:
        emb = proj_head_forward(params['proj'], feats[-1])
        embedding = jnp.transpose(emb, (0, 3, 1, 2))              # back to NCHW
    seg, seg_aux = decoder_forward(params['decoder'], feats[-4:])
    return {'embedding': embedding,
            'seg_aux': jnp.transpose(seg_aux, (0, 3, 1, 2)),
            'seg': jnp.transpose(seg, (0, 3, 1, 2))}


# ----------------------------------- main ------------------------------------
if __name__ == "__main__":
    key = jax.random.PRNGKey(0)
    pkey, xkey, tk1, tk2, tk3, tk4, tk5 = jax.random.split(key, 7)
    params = init_params(pkey)
    x = jax.random.normal(xkey, (2, 3, 32, 32), F32)              # small NCHW input

    fwd = jax.jit(lambda p, xi: deeplabv3_contrast_forward(
        p, xi, with_embed=True, is_eval=False))
    out = fwd(params, x)
    jax.block_until_ready(out['seg'])
    jax.block_until_ready(out['seg_aux'])
    jax.block_until_ready(out['embedding'])

    assert out['seg'].shape == (2, NUM_CLASSES, 4, 4)
    assert out['seg_aux'].shape == (2, NUM_CLASSES, 4, 4)
    assert out['embedding'].shape == (2, PROJ_DIM, 4, 4)
    # embedding rows are unit-norm (F.normalize over channel dim, kept in f32)
    norms = jnp.sqrt(jnp.sum(out['embedding'].astype(F32) ** 2, axis=1))
    assert bool(jnp.all(jnp.abs(norms - 1.0) < 1e-4))

    hi = jax.lax.Precision.HIGHEST

    # --- self-test: K/N/M-tiled matmul path at non-toy, ragged dimensions ---
    a = jax.random.normal(tk1, (640, 1024), F32)       # 2 M-tiles (ragged tail)
    b = jax.random.normal(tk2, (1024, 384), F32)       # 2 K-steps, 2 N-tiles
    sh = jax.random.normal(tk3, (384,), F32)
    y = fused_matmul(a, b, sh, relu=True)
    ref = jnp.maximum(
        jnp.dot(a.astype(BF16).astype(F32), b.astype(BF16).astype(F32),
                precision=hi) + sh, 0.0)
    err = float(jnp.max(jnp.abs(y - ref)))
    assert err <= 5e-2 + 5e-3 * float(jnp.max(jnp.abs(ref))), err

    # --- self-test: fused (wide conv -> tiny-N head) kernel, K-tiled ---
    xh = jax.random.normal(tk4, (600, 1024), F32)
    w1 = jax.random.normal(tk5, (1024, 128), F32) * 0.03
    s1 = jnp.zeros((128,), F32)
    w2 = jax.random.normal(tk1, (128, 8), F32) * 0.1
    b2 = jnp.zeros((8,), F32)
    yh = fused_head(xh, w1, s1, w2, b2, relu1=True, normalize=False)
    h_ref = jnp.maximum(
        jnp.dot(xh.astype(BF16).astype(F32), w1.astype(BF16).astype(F32),
                precision=hi) + s1, 0.0)
    y_ref = jnp.dot(h_ref.astype(BF16).astype(F32),
                    w2.astype(BF16).astype(F32), precision=hi) + b2
    errh = float(jnp.max(jnp.abs(yh - y_ref)))
    assert errh <= 5e-2 + 5e-3 * float(jnp.max(jnp.abs(y_ref))), errh

    print("KERNEL_OK")
</pallas_src>

<mosaic_0001>
module attributes {stable_mosaic.version = 11 : i64} {
  func.func @_mm_bn_act_kernel(%arg0: i32, %arg1: i32, %arg2: i32, %arg3: memref<512x27xbf16, #tpu.memory_space<vmem>>, %arg4: memref<27x8xbf16, #tpu.memory_space<vmem>>, %arg5: memref<1x8xf32, #tpu.memory_space<vmem>>, %arg6: memref<512x8xbf16, #tpu.memory_space<vmem>>, %arg7: memref<512x8xf32, #tpu.memory_space<vmem>>) attributes {dimension_semantics = [#tpu.dimension_semantics<parallel>, #tpu.dimension_semantics<parallel>, #tpu.dimension_semantics<arbitrary>], iteration_bounds = array<i64: 1, 1, 1>, scalar_prefetch = 0 : i64, scratch_operands = 1 : i64, tpu.core_type = #tpu.core_type<tc>, window_params = [{transform_indices = @transform_0, window_bounds = array<i64: 512, 27>}, {transform_indices = @transform_1, window_bounds = array<i64: 27, 8>}, {transform_indices = @transform_2, window_bounds = array<i64: 1, 8>}, {transform_indices = @transform_3, window_bounds = array<i64: 512, 8>}]} {
    %c0_i32 = arith.constant 0 : i32
    %0 = arith.cmpi eq, %arg2, %c0_i32 : i32
    %1 = arith.extui %0 : i1 to i32
    %c0_i32_0 = arith.constant 0 : i32
    %2 = arith.cmpi ne, %1, %c0_i32_0 : i32
    scf.if %2 {
      %cst_10 = arith.constant 0.000000e+00 : f32
      %12 = vector.broadcast %cst_10 : f32 to vector<512x8xf32>
      %c0_11 = arith.constant 0 : index
      %c0_12 = arith.constant 0 : index
      %13 = vector.load %arg7[%c0_11, %c0_12] : memref<512x8xf32, #tpu.memory_space<vmem>>, vector<512x8xf32>
      tpu.vector_store %arg7[%c0_11, %c0_12], %12 {strides = array<i32>} : memref<512x8xf32, #tpu.memory_space<vmem>>, vector<512x8xf32>,
    } else {
    }
    %c0 = arith.constant 0 : index
    %c0_1 = arith.constant 0 : index
    %3 = vector.load %arg7[%c0, %c0_1] : memref<512x8xf32, #tpu.memory_space<vmem>>, vector<512x8xf32>
    %c0_2 = arith.constant 0 : index
    %c0_3 = arith.constant 0 : index
    %4 = vector.load %arg3[%c0_2, %c0_3] : memref<512x27xbf16, #tpu.memory_space<vmem>>, vector<512x27xbf16>
    %c0_4 = arith.constant 0 : index
    %c0_5 = arith.constant 0 : index
    %5 = vector.load %arg4[%c0_4, %c0_5] : memref<27x8xbf16, #tpu.memory_space<vmem>>, vector<27x8xbf16>
    %cst = arith.constant dense<0.000000e+00> : vector<512x8xf32>
    %6 = tpu.matmul %4, %5, %cst {dimension_numbers = #tpu.dot_dimension_numbers<[1], [0], [0], [1], [0, 0, 1, 1], [], []>} : vector<512x27xbf16>, vector<27x8xbf16>, vector<512x8xf32> -> vector<512x8xf32>
    %7 = arith.addf %3, %6 : vector<512x8xf32>
    %c0_6 = arith.constant 0 : index
    %c0_7 = arith.constant 0 : index
    %8 = vector.load %arg7[%c0_6, %c0_7] : memref<512x8xf32, #tpu.memory_space<vmem>>, vector<512x8xf32>
    tpu.vector_store %arg7[%c0_6, %c0_7], %7 {strides = array<i32>} : memref<512x8xf32, #tpu.memory_space<vmem>>, vector<512x8xf32>,
    %c0_i32_8 = arith.constant 0 : i32
    %9 = arith.cmpi eq, %arg2, %c0_i32_8 : i32
    %10 = arith.extui %9 : i1 to i32
    %c0_i32_9 = arith.constant 0 : i32
    %11 = arith.cmpi ne, %10, %c0_i32_9 : i32
    scf.if %11 {
      %c0_10 = arith.constant 0 : index
      %c0_11 = arith.constant 0 : index
      %12 = vector.load %arg7[%c0_10, %c0_11] : memref<512x8xf32, #tpu.memory_space<vmem>>, vector<512x8xf32>
      %c0_12 = arith.constant 0 : index
      %c0_13 = arith.constant 0 : index
      %13 = vector.load %arg5[%c0_12, %c0_13] : memref<1x8xf32, #tpu.memory_space<vmem>>, vector<1x8xf32>
      %14 = vector.broadcast %13 : vector<1x8xf32> to vector<512x8xf32>
      %15 = arith.addf %12, %14 : vector<512x8xf32>
      %cst_14 = arith.constant 0.000000e+00 : f32
      %16 = vector.broadcast %cst_14 : f32 to vector<512x8xf32>
      %17 = arith.maximumf %15, %16 : vector<512x8xf32>
      %18 = arith.truncf %17 : vector<512x8xf32> to vector<512x8xbf16>
      %c0_15 = arith.constant 0 : index
      %c0_16 = arith.constant 0 : index
      %19 = vector.load %arg6[%c0_15, %c0_16] : memref<512x8xbf16, #tpu.memory_space<vmem>>, vector<512x8xbf16>
      tpu.vector_store %arg6[%c0_15, %c0_16], %18 {strides = array<i32>} : memref<512x8xbf16, #tpu.memory_space<vmem>>, vector<512x8xbf16>,
    } else {
    }
    return
  }
  func.func @transform_0(%arg0: i32, %arg1: i32, %arg2: i32) -> (i32, i32) {
    %c0_i32 = arith.constant 0 : i32
    return %arg0, %arg2 : i32, i32
  }
  func.func @transform_1(%arg0: i32, %arg1: i32, %arg2: i32) -> (i32, i32) {
    %c0_i32 = arith.constant 0 : i32
    return %arg2, %arg1 : i32, i32
  }
  func.func @transform_2(%arg0: i32, %arg1: i32, %arg2: i32) -> (i32, i32) {
    %c0_i32 = arith.constant 0 : i32
    %c0_i32_0 = arith.constant 0 : i32
    return %c0_i32, %arg1 : i32, i32
  }
  func.func @transform_3(%arg0: i32, %arg1: i32, %arg2: i32) -> (i32, i32) {
    %c0_i32 = arith.constant 0 : i32
    return %arg0, %arg1 : i32, i32
  }
}

module attributes {stable_mosaic.version = 11 : i64} {
  func.func @_mm_bn_act_kernel(%arg0: i32, %arg1: i32, %arg2: i32, %arg3: memref<128x72xbf16, #tpu.memory_space<vmem>>, %arg4: memref<72x8xbf16, #tpu.memory_space<vmem>>, %arg5: memref<1x8xf32, #tpu.memory_space<vmem>>, %arg6: memref<128x8xbf16, #tpu.memory_space<vmem>>, %arg7: memref<128x8xf32, #tpu.memory_space<vmem>>) attributes {dimension_semantics = [#tpu.dimension_semantics<parallel>, #tpu.dimension_semantics<parallel>, #tpu.dimension_semantics<arbitrary>], iteration_bounds = array<i64: 1, 1, 1>, scalar_prefetch = 0 : i64, scratch_operands = 1 : i64, tpu.core_type = #tpu.core_type<tc>, window_params = [{transform_indices = @transform_0, window_bounds = array<i64: 128, 72>}, {transform_indices = @transform_1, window_bounds = array<i64: 72, 8>}, {transform_indices = @transform_2, window_bounds = array<i64: 1, 8>}, {transform_indices = @transform_3, window_bounds = array<i64: 128, 8>}]} {
    %c0_i32 = arith.constant 0 : i32
    %0 = arith.cmpi eq, %arg2, %c0_i32 : i32
    %1 = arith.extui %0 : i1 to i32
    %c0_i32_0 = arith.constant 0 : i32
    %2 = arith.cmpi ne, %1, %c0_i32_0 : i32
    scf.if %2 {
      %cst_10 = arith.constant 0.000000e+00 : f32
      %12 = vector.broadcast %cst_10 : f32 to vector<128x8xf32>
      %c0_11 = arith.constant 0 : index
      %c0_12 = arith.constant 0 : index
      %13 = vector.load %arg7[%c0_11, %c0_12] : memref<128x8xf32, #tpu.memory_space<vmem>>, vector<128x8xf32>
      tpu.vector_store %arg7[%c0_11, %c0_12], %12 {strides = array<i32>} : memref<128x8xf32, #tpu.memory_space<vmem>>, vector<128x8xf32>,
    } else {
    }
    %c0 = arith.constant 0 : index
    %c0_1 = arith.constant 0 : index
    %3 = vector.load %arg7[%c0, %c0_1] : memref<128x8xf32, #tpu.memory_space<vmem>>, vector<128x8xf32>
    %c0_2 = arith.constant 0 : index
    %c0_3 = arith.constant 0 : index
    %4 = vector.load %arg3[%c0_2, %c0_3] : memref<128x72xbf16, #tpu.memory_space<vmem>>, vector<128x72xbf16>
    %c0_4 = arith.constant 0 : index
    %c0_5 = arith.constant 0 : index
    %5 = vector.load %arg4[%c0_4, %c0_5] : memref<72x8xbf16, #tpu.memory_space<vmem>>, vector<72x8xbf16>
    %cst = arith.constant dense<0.000000e+00> : vector<128x8xf32>
    %6 = tpu.matmul %4, %5, %cst {dimension_numbers = #tpu.dot_dimension_numbers<[1], [0], [0], [1], [0, 0, 1, 1], [], []>} : vector<128x72xbf16>, vector<72x8xbf16>, vector<128x8xf32> -> vector<128x8xf32>
    %7 = arith.addf %3, %6 : vector<128x8xf32>
    %c0_6 = arith.constant 0 : index
    %c0_7 = arith.constant 0 : index
    %8 = vector.load %arg7[%c0_6, %c0_7] : memref<128x8xf32, #tpu.memory_space<vmem>>, vector<128x8xf32>
    tpu.vector_store %arg7[%c0_6, %c0_7], %7 {strides = array<i32>} : memref<128x8xf32, #tpu.memory_space<vmem>>, vector<128x8xf32>,
    %c0_i32_8 = arith.constant 0 : i32
    %9 = arith.cmpi eq, %arg2, %c0_i32_8 : i32
    %10 = arith.extui %9 : i1 to i32
    %c0_i32_9 = arith.constant 0 : i32
    %11 = arith.cmpi ne, %10, %c0_i32_9 : i32
    scf.if %11 {
      %c0_10 = arith.constant 0 : index
      %c0_11 = arith.constant 0 : index
      %12 = vector.load %arg7[%c0_10, %c0_11] : memref<128x8xf32, #tpu.memory_space<vmem>>, vector<128x8xf32>
      %c0_12 = arith.constant 0 : index
      %c0_13 = arith.constant 0 : index
      %13 = vector.load %arg5[%c0_12, %c0_13] : memref<1x8xf32, #tpu.memory_space<vmem>>, vector<1x8xf32>
      %14 = vector.broadcast %13 : vector<1x8xf32> to vector<128x8xf32>
      %15 = arith.addf %12, %14 : vector<128x8xf32>
      %cst_14 = arith.constant 0.000000e+00 : f32
      %16 = vector.broadcast %cst_14 : f32 to vector<128x8xf32>
      %17 = arith.maximumf %15, %16 : vector<128x8xf32>
      %18 = arith.truncf %17 : vector<128x8xf32> to vector<128x8xbf16>
      %c0_15 = arith.constant 0 : index
      %c0_16 = arith.constant 0 : index
      %19 = vector.load %arg6[%c0_15, %c0_16] : memref<128x8xbf16, #tpu.memory_space<vmem>>, vector<128x8xbf16>
      tpu.vector_store %arg6[%c0_15, %c0_16], %18 {strides = array<i32>} : memref<128x8xbf16, #tpu.memory_space<vmem>>, vector<128x8xbf16>,
    } else {
    }
    return
  }
  func.func @transform_0(%arg0: i32, %arg1: i32, %arg2: i32) -> (i32, i32) {
    %c0_i32 = arith.constant 0 : i32
    return %arg0, %arg2 : i32, i32
  }
  func.func @transform_1(%arg0: i32, %arg1: i32, %arg2: i32) -> (i32, i32) {
    %c0_i32 = arith.constant 0 : i32
    return %arg2, %arg1 : i32, i32
  }
  func.func @transform_2(%arg0: i32, %arg1: i32, %arg2: i32) -> (i32, i32) {
    %c0_i32 = arith.constant 0 : i32
    %c0_i32_0 = arith.constant 0 : i32
    return %c0_i32, %arg1 : i32, i32
  }
  func.func @transform_3(%arg0: i32, %arg1: i32, %arg2: i32) -> (i32, i32) {
    %c0_i32 = arith.constant 0 : i32
    return %arg0, %arg1 : i32, i32
  }
}

module attributes {stable_mosaic.version = 11 : i64} {
  func.func @_mm_bn_act_kernel(%arg0: i32, %arg1: i32, %arg2: i32, %arg3: memref<32x72xbf16, #tpu.memory_space<vmem>>, %arg4: memref<72x16xbf16, #tpu.memory_space<vmem>>, %arg5: memref<1x16xf32, #tpu.memory_space<vmem>>, %arg6: memref<32x16xbf16, #tpu.memory_space<vmem>>, %arg7: memref<32x16xf32, #tpu.memory_space<vmem>>) attributes {dimension_semantics = [#tpu.dimension_semantics<parallel>, #tpu.dimension_semantics<parallel>, #tpu.dimension_semantics<arbitrary>], iteration_bounds = array<i64: 1, 1, 1>, scalar_prefetch = 0 : i64, scratch_operands = 1 : i64, tpu.core_type = #tpu.core_type<tc>, window_params = [{transform_indices = @transform_0, window_bounds = array<i64: 32, 72>}, {transform_indices = @transform_1, window_bounds = array<i64: 72, 16>}, {transform_indices = @transform_2, window_bounds = array<i64: 1, 16>}, {transform_indices = @transform_3, window_bounds = array<i64: 32, 16>}]} {
    %c0_i32 = arith.constant 0 : i32
    %0 = arith.cmpi eq, %arg2, %c0_i32 : i32
    %1 = arith.extui %0 : i1 to i32
    %c0_i32_0 = arith.constant 0 : i32
    %2 = arith.cmpi ne, %1, %c0_i32_0 : i32
    scf.if %2 {
      %cst_10 = arith.constant 0.000000e+00 : f32
      %12 = vector.broadcast %cst_10 : f32 to vector<32x16xf32>
      %c0_11 = arith.constant 0 : index
      %c0_12 = arith.constant 0 : index
      %13 = vector.load %arg7[%c0_11, %c0_12] : memref<32x16xf32, #tpu.memory_space<vmem>>, vector<32x16xf32>
      tpu.vector_store %arg7[%c0_11, %c0_12], %12 {strides = array<i32>} : memref<32x16xf32, #tpu.memory_space<vmem>>, vector<32x16xf32>,
    } else {
    }
    %c0 = arith.constant 0 : index
    %c0_1 = arith.constant 0 : index
    %3 = vector.load %arg7[%c0, %c0_1] : memref<32x16xf32, #tpu.memory_space<vmem>>, vector<32x16xf32>
    %c0_2 = arith.constant 0 : index
    %c0_3 = arith.constant 0 : index
    %4 = vector.load %arg3[%c0_2, %c0_3] : memref<32x72xbf16, #tpu.memory_space<vmem>>, vector<32x72xbf16>
    %c0_4 = arith.constant 0 : index
    %c0_5 = arith.constant 0 : index
    %5 = vector.load %arg4[%c0_4, %c0_5] : memref<72x16xbf16, #tpu.memory_space<vmem>>, vector<72x16xbf16>
    %cst = arith.constant dense<0.000000e+00> : vector<32x16xf32>
    %6 = tpu.matmul %4, %5, %cst {dimension_numbers = #tpu.dot_dimension_numbers<[1], [0], [0], [1], [0, 0, 1, 1], [], []>} : vector<32x72xbf16>, vector<72x16xbf16>, vector<32x16xf32> -> vector<32x16xf32>
    %7 = arith.addf %3, %6 : vector<32x16xf32>
    %c0_6 = arith.constant 0 : index
    %c0_7 = arith.constant 0 : index
    %8 = vector.load %arg7[%c0_6, %c0_7] : memref<32x16xf32, #tpu.memory_space<vmem>>, vector<32x16xf32>
    tpu.vector_store %arg7[%c0_6, %c0_7], %7 {strides = array<i32>} : memref<32x16xf32, #tpu.memory_space<vmem>>, vector<32x16xf32>,
    %c0_i32_8 = arith.constant 0 : i32
    %9 = arith.cmpi eq, %arg2, %c0_i32_8 : i32
    %10 = arith.extui %9 : i1 to i32
    %c0_i32_9 = arith.constant 0 : i32
    %11 = arith.cmpi ne, %10, %c0_i32_9 : i32
    scf.if %11 {
      %c0_10 = arith.constant 0 : index
      %c0_11 = arith.constant 0 : index
      %12 = vector.load %arg7[%c0_10, %c0_11] : memref<32x16xf32, #tpu.memory_space<vmem>>, vector<32x16xf32>
      %c0_12 = arith.constant 0 : index
      %c0_13 = arith.constant 0 : index
      %13 = vector.load %arg5[%c0_12, %c0_13] : memref<1x16xf32, #tpu.memory_space<vmem>>, vector<1x16xf32>
      %14 = vector.broadcast %13 : vector<1x16xf32> to vector<32x16xf32>
      %15 = arith.addf %12, %14 : vector<32x16xf32>
      %cst_14 = arith.constant 0.000000e+00 : f32
      %16 = vector.broadcast %cst_14 : f32 to vector<32x16xf32>
      %17 = arith.maximumf %15, %16 : vector<32x16xf32>
      %18 = arith.truncf %17 : vector<32x16xf32> to vector<32x16xbf16>
      %c0_15 = arith.constant 0 : index
      %c0_16 = arith.constant 0 : index
      %19 = vector.load %arg6[%c0_15, %c0_16] : memref<32x16xbf16, #tpu.memory_space<vmem>>, vector<32x16xbf16>
      tpu.vector_store %arg6[%c0_15, %c0_16], %18 {strides = array<i32>} : memref<32x16xbf16, #tpu.memory_space<vmem>>, vector<32x16xbf16>,
    } else {
    }
    return
  }
  func.func @transform_0(%arg0: i32, %arg1: i32, %arg2: i32) -> (i32, i32) {
    %c0_i32 = arith.constant 0 : i32
    return %arg0, %arg2 : i32, i32
  }
  func.func @transform_1(%arg0: i32, %arg1: i32, %arg2: i32) -> (i32, i32) {
    %c0_i32 = arith.constant 0 : i32
    return %arg2, %arg1 : i32, i32
  }
  func.func @transform_2(%arg0: i32, %arg1: i32, %arg2: i32) -> (i32, i32) {
    %c0_i32 = arith.constant 0 : i32
    %c0_i32_0 = arith.constant 0 : i32
    return %c0_i32, %arg1 : i32, i32
  }
  func.func @transform_3(%arg0: i32, %arg1: i32, %arg2: i32) -> (i32, i32) {
    %c0_i32 = arith.constant 0 : i32
    return %arg0, %arg1 : i32, i32
  }
}

module attributes {stable_mosaic.version = 11 : i64} {
  func.func @_mm_bn_act_kernel(%arg0: i32, %arg1: i32, %arg2: i32, %arg3: memref<32x144xbf16, #tpu.memory_space<vmem>>, %arg4: memref<144x32xbf16, #tpu.memory_space<vmem>>, %arg5: memref<1x32xf32, #tpu.memory_space<vmem>>, %arg6: memref<32x32xbf16, #tpu.memory_space<vmem>>, %arg7: memref<32x32xf32, #tpu.memory_space<vmem>>) attributes {dimension_semantics = [#tpu.dimension_semantics<parallel>, #tpu.dimension_semantics<parallel>, #tpu.dimension_semantics<arbitrary>], iteration_bounds = array<i64: 1, 1, 1>, scalar_prefetch = 0 : i64, scratch_operands = 1 : i64, tpu.core_type = #tpu.core_type<tc>, window_params = [{transform_indices = @transform_0, window_bounds = array<i64: 32, 144>}, {transform_indices = @transform_1, window_bounds = array<i64: 144, 32>}, {transform_indices = @transform_2, window_bounds = array<i64: 1, 32>}, {transform_indices = @transform_3, window_bounds = array<i64: 32, 32>}]} {
    %c0_i32 = arith.constant 0 : i32
    %0 = arith.cmpi eq, %arg2, %c0_i32 : i32
    %1 = arith.extui %0 : i1 to i32
    %c0_i32_0 = arith.constant 0 : i32
    %2 = arith.cmpi ne, %1, %c0_i32_0 : i32
    scf.if %2 {
      %cst_10 = arith.constant 0.000000e+00 : f32
      %12 = vector.broadcast %cst_10 : f32 to vector<32x32xf32>
      %c0_11 = arith.constant 0 : index
      %c0_12 = arith.constant 0 : index
      %13 = vector.load %arg7[%c0_11, %c0_12] : memref<32x32xf32, #tpu.memory_space<vmem>>, vector<32x32xf32>
      tpu.vector_store %arg7[%c0_11, %c0_12], %12 {strides = array<i32>} : memref<32x32xf32, #tpu.memory_space<vmem>>, vector<32x32xf32>,
    } else {
    }
    %c0 = arith.constant 0 : index
    %c0_1 = arith.constant 0 : index
    %3 = vector.load %arg7[%c0, %c0_1] : memref<32x32xf32, #tpu.memory_space<vmem>>, vector<32x32xf32>
    %c0_2 = arith.constant 0 : index
    %c0_3 = arith.constant 0 : index
    %4 = vector.load %arg3[%c0_2, %c0_3] : memref<32x144xbf16, #tpu.memory_space<vmem>>, vector<32x144xbf16>
    %c0_4 = arith.constant 0 : index
    %c0_5 = arith.constant 0 : index
    %5 = vector.load %arg4[%c0_4, %c0_5] : memref<144x32xbf16, #tpu.memory_space<vmem>>, vector<144x32xbf16>
    %cst = arith.constant dense<0.000000e+00> : vector<32x32xf32>
    %6 = tpu.matmul %4, %5, %cst {dimension_numbers = #tpu.dot_dimension_numbers<[1], [0], [0], [1], [0, 0, 1, 1], [], []>} : vector<32x144xbf16>, vector<144x32xbf16>, vector<32x32xf32> -> vector<32x32xf32>
    %7 = arith.addf %3, %6 : vector<32x32xf32>
    %c0_6 = arith.constant 0 : index
    %c0_7 = arith.constant 0 : index
    %8 = vector.load %arg7[%c0_6, %c0_7] : memref<32x32xf32, #tpu.memory_space<vmem>>, vector<32x32xf32>
    tpu.vector_store %arg7[%c0_6, %c0_7], %7 {strides = array<i32>} : memref<32x32xf32, #tpu.memory_space<vmem>>, vector<32x32xf32>,
    %c0_i32_8 = arith.constant 0 : i32
    %9 = arith.cmpi eq, %arg2, %c0_i32_8 : i32
    %10 = arith.extui %9 : i1 to i32
    %c0_i32_9 = arith.constant 0 : i32
    %11 = arith.cmpi ne, %10, %c0_i32_9 : i32
    scf.if %11 {
      %c0_10 = arith.constant 0 : index
      %c0_11 = arith.constant 0 : index
      %12 = vector.load %arg7[%c0_10, %c0_11] : memref<32x32xf32, #tpu.memory_space<vmem>>, vector<32x32xf32>
      %c0_12 = arith.constant 0 : index
      %c0_13 = arith.constant 0 : index
      %13 = vector.load %arg5[%c0_12, %c0_13] : memref<1x32xf32, #tpu.memory_space<vmem>>, vector<1x32xf32>
      %14 = vector.broadcast %13 : vector<1x32xf32> to vector<32x32xf32>
      %15 = arith.addf %12, %14 : vector<32x32xf32>
      %cst_14 = arith.constant 0.000000e+00 : f32
      %16 = vector.broadcast %cst_14 : f32 to vector<32x32xf32>
      %17 = arith.maximumf %15, %16 : vector<32x32xf32>
      %18 = arith.truncf %17 : vector<32x32xf32> to vector<32x32xbf16>
      %c0_15 = arith.constant 0 : index
      %c0_16 = arith.constant 0 : index
      %19 = vector.load %arg6[%c0_15, %c0_16] : memref<32x32xbf16, #tpu.memory_space<vmem>>, vector<32x32xbf16>
      tpu.vector_store %arg6[%c0_15, %c0_16], %18 {strides = array<i32>} : memref<32x32xbf16, #tpu.memory_space<vmem>>, vector<32x32xbf16>,
    } else {
    }
    return
  }
  func.func @transform_0(%arg0: i32, %arg1: i32, %arg2: i32) -> (i32, i32) {
    %c0_i32 = arith.constant 0 : i32
    return %arg0, %arg2 : i32, i32
  }
  func.func @transform_1(%arg0: i32, %arg1: i32, %arg2: i32) -> (i32, i32) {
    %c0_i32 = arith.constant 0 : i32
    return %arg2, %arg1 : i32, i32
  }
  func.func @transform_2(%arg0: i32, %arg1: i32, %arg2: i32) -> (i32, i32) {
    %c0_i32 = arith.constant 0 : i32
    %c0_i32_0 = arith.constant 0 : i32
    return %c0_i32, %arg1 : i32, i32
  }
  func.func @transform_3(%arg0: i32, %arg1: i32, %arg2: i32) -> (i32, i32) {
    %c0_i32 = arith.constant 0 : i32
    return %arg0, %arg1 : i32, i32
  }
}

module attributes {stable_mosaic.version = 11 : i64} {
  func.func @_head_fused_kernel(%arg0: i32, %arg1: i32, %arg2: memref<32x288xbf16, #tpu.memory_space<vmem>>, %arg3: memref<288x16xbf16, #tpu.memory_space<vmem>>, %arg4: memref<1x16xf32, #tpu.memory_space<vmem>>, %arg5: memref<16x4xbf16, #tpu.memory_space<vmem>>, %arg6: memref<1x4xf32, #tpu.memory_space<vmem>>, %arg7: memref<32x4xf32, #tpu.memory_space<vmem>>, %arg8: memref<32x16xf32, #tpu.memory_space<vmem>>) attributes {dimension_semantics = [#tpu.dimension_semantics<parallel>, #tpu.dimension_semantics<arbitrary>], iteration_bounds = array<i64: 1, 1>, scalar_prefetch = 0 : i64, scratch_operands = 1 : i64, tpu.core_type = #tpu.core_type<tc>, window_params = [{transform_indices = @transform_0, window_bounds = array<i64: 32, 288>}, {transform_indices = @transform_1, window_bounds = array<i64: 288, 16>}, {pipeline_mode = #tpu.pipeline_mode<synchronous>, transform_indices = @transform_2, window_bounds = array<i64: 1, 16>}, {pipeline_mode = #tpu.pipeline_mode<synchronous>, transform_indices = @transform_3, window_bounds = array<i64: 16, 4>}, {pipeline_mode = #tpu.pipeline_mode<synchronous>, transform_indices = @transform_4, window_bounds = array<i64: 1, 4>}, {transform_indices = @transform_5, window_bounds = array<i64: 32, 4>}]} {
    %c0_i32 = arith.constant 0 : i32
    %0 = arith.cmpi eq, %arg1, %c0_i32 : i32
    %1 = arith.extui %0 : i1 to i32
    %c0_i32_0 = arith.constant 0 : i32
    %2 = arith.cmpi ne, %1, %c0_i32_0 : i32
    scf.if %2 {
      %cst_10 = arith.constant 0.000000e+00 : f32
      %12 = vector.broadcast %cst_10 : f32 to vector<32x16xf32>
      %c0_11 = arith.constant 0 : index
      %c0_12 = arith.constant 0 : index
      %13 = vector.load %arg8[%c0_11, %c0_12] : memref<32x16xf32, #tpu.memory_space<vmem>>, vector<32x16xf32>
      tpu.vector_store %arg8[%c0_11, %c0_12], %12 {strides = array<i32>} : memref<32x16xf32, #tpu.memory_space<vmem>>, vector<32x16xf32>,
    } else {
    }
    %c0 = arith.constant 0 : index
    %c0_1 = arith.constant 0 : index
    %3 = vector.load %arg8[%c0, %c0_1] : memref<32x16xf32, #tpu.memory_space<vmem>>, vector<32x16xf32>
    %c0_2 = arith.constant 0 : index
    %c0_3 = arith.constant 0 : index
    %4 = vector.load %arg2[%c0_2, %c0_3] : memref<32x288xbf16, #tpu.memory_space<vmem>>, vector<32x288xbf16>
    %c0_4 = arith.constant 0 : index
    %c0_5 = arith.constant 0 : index
    %5 = vector.load %arg3[%c0_4, %c0_5] : memref<288x16xbf16, #tpu.memory_space<vmem>>, vector<288x16xbf16>
    %cst = arith.constant dense<0.000000e+00> : vector<32x16xf32>
    %6 = tpu.matmul %4, %5, %cst {dimension_numbers = #tpu.dot_dimension_numbers<[1], [0], [0], [1], [0, 0, 1, 1], [], []>} : vector<32x288xbf16>, vector<288x16xbf16>, vector<32x16xf32> -> vector<32x16xf32>
    %7 = arith.addf %3, %6 : vector<32x16xf32>
    %c0_6 = arith.constant 0 : index
    %c0_7 = arith.constant 0 : index
    %8 = vector.load %arg8[%c0_6, %c0_7] : memref<32x16xf32, #tpu.memory_space<vmem>>, vector<32x16xf32>
    tpu.vector_store %arg8[%c0_6, %c0_7], %7 {strides = array<i32>} : memref<32x16xf32, #tpu.memory_space<vmem>>, vector<32x16xf32>,
    %c0_i32_8 = arith.constant 0 : i32
    %9 = arith.cmpi eq, %arg1, %c0_i32_8 : i32
    %10 = arith.extui %9 : i1 to i32
    %c0_i32_9 = arith.constant 0 : i32
    %11 = arith.cmpi ne, %10, %c0_i32_9 : i32
    scf.if %11 {
      %c0_10 = arith.constant 0 : index
      %c0_11 = arith.constant 0 : index
      %12 = vector.load %arg8[%c0_10, %c0_11] : memref<32x16xf32, #tpu.memory_space<vmem>>, vector<32x16xf32>
      %c0_12 = arith.constant 0 : index
      %c0_13 = arith.constant 0 : index
      %13 = vector.load %arg4[%c0_12, %c0_13] : memref<1x16xf32, #tpu.memory_space<vmem>>, vector<1x16xf32>
      %14 = vector.broadcast %13 : vector<1x16xf32> to vector<32x16xf32>
      %15 = arith.addf %12, %14 : vector<32x16xf32>
      %cst_14 = arith.constant 0.000000e+00 : f32
      %16 = vector.broadcast %cst_14 : f32 to vector<32x16xf32>
      %17 = arith.maximumf %15, %16 : vector<32x16xf32>
      %18 = arith.truncf %17 : vector<32x16xf32> to vector<32x16xbf16>
      %c0_15 = arith.constant 0 : index
      %c0_16 = arith.constant 0 : index
      %19 = vector.load %arg5[%c0_15, %c0_16] : memref<16x4xbf16, #tpu.memory_space<vmem>>, vector<16x4xbf16>
      %cst_17 = arith.constant dense<0.000000e+00> : vector<32x4xf32>
      %20 = tpu.matmul %18, %19, %cst_17 {dimension_numbers = #tpu.dot_dimension_numbers<[1], [0], [0], [1], [0, 0, 1, 1], [], []>} : vector<32x16xbf16>, vector<16x4xbf16>, vector<32x4xf32> -> vector<32x4xf32>
      %c0_18 = arith.constant 0 : index
      %c0_19 = arith.constant 0 : index
      %21 = vector.load %arg6[%c0_18, %c0_19] : memref<1x4xf32, #tpu.memory_space<vmem>>, vector<1x4xf32>
      %22 = vector.broadcast %21 : vector<1x4xf32> to vector<32x4xf32>
      %23 = arith.addf %20, %22 : vector<32x4xf32>
      %c0_20 = arith.constant 0 : index
      %c0_21 = arith.constant 0 : index
      %24 = vector.load %arg7[%c0_20, %c0_21] : memref<32x4xf32, #tpu.memory_space<vmem>>, vector<32x4xf32>
      tpu.vector_store %arg7[%c0_20, %c0_21], %23 {strides = array<i32>} : memref<32x4xf32, #tpu.memory_space<vmem>>, vector<32x4xf32>,
    } else {
    }
    return
  }
  func.func @transform_0(%arg0: i32, %arg1: i32) -> (i32, i32) {
    %c0_i32 = arith.constant 0 : i32
    return %arg0, %arg1 : i32, i32
  }
  func.func @transform_1(%arg0: i32, %arg1: i32) -> (i32, i32) {
    %c0_i32 = arith.constant 0 : i32
    %c0_i32_0 = arith.constant 0 : i32
    return %arg1, %c0_i32 : i32, i32
  }
  func.func @transform_2(%arg0: i32, %arg1: i32) -> (i32, i32) {
    %c0_i32 = arith.constant 0 : i32
    %c0_i32_0 = arith.constant 0 : i32
    %c0_i32_1 = arith.constant 0 : i32
    return %c0_i32, %c0_i32_0 : i32, i32
  }
  func.func @transform_3(%arg0: i32, %arg1: i32) -> (i32, i32) {
    %c0_i32 = arith.constant 0 : i32
    %c0_i32_0 = arith.constant 0 : i32
    %c0_i32_1 = arith.constant 0 : i32
    return %c0_i32, %c0_i32_0 : i32, i32
  }
  func.func @transform_4(%arg0: i32, %arg1: i32) -> (i32, i32) {
    %c0_i32 = arith.constant 0 : i32
    %c0_i32_0 = arith.constant 0 : i32
    %c0_i32_1 = arith.constant 0 : i32
    return %c0_i32, %c0_i32_0 : i32, i32
  }
  func.func @transform_5(%arg0: i32, %arg1: i32) -> (i32, i32) {
    %c0_i32 = arith.constant 0 : i32
    %c0_i32_0 = arith.constant 0 : i32
    return %arg0, %c0_i32 : i32, i32
  }
}

module attributes {stable_mosaic.version = 11 : i64} {
  func.func @_mm_bn_act_kernel(%arg0: i32, %arg1: i32, %arg2: i32, %arg3: memref<32x288xbf16, #tpu.memory_space<vmem>>, %arg4: memref<288x64xbf16, #tpu.memory_space<vmem>>, %arg5: memref<1x64xf32, #tpu.memory_space<vmem>>, %arg6: memref<32x64xbf16, #tpu.memory_space<vmem>>, %arg7: memref<32x64xf32, #tpu.memory_space<vmem>>) attributes {dimension_semantics = [#tpu.dimension_semantics<parallel>, #tpu.dimension_semantics<parallel>, #tpu.dimension_semantics<arbitrary>], iteration_bounds = array<i64: 1, 1, 1>, scalar_prefetch = 0 : i64, scratch_operands = 1 : i64, tpu.core_type = #tpu.core_type<tc>, window_params = [{transform_indices = @transform_0, window_bounds = array<i64: 32, 288>}, {transform_indices = @transform_1, window_bounds = array<i64: 288, 64>}, {transform_indices = @transform_2, window_bounds = array<i64: 1, 64>}, {transform_indices = @transform_3, window_bounds = array<i64: 32, 64>}]} {
    %c0_i32 = arith.constant 0 : i32
    %0 = arith.cmpi eq, %arg2, %c0_i32 : i32
    %1 = arith.extui %0 : i1 to i32
    %c0_i32_0 = arith.constant 0 : i32
    %2 = arith.cmpi ne, %1, %c0_i32_0 : i32
    scf.if %2 {
      %cst_10 = arith.constant 0.000000e+00 : f32
      %12 = vector.broadcast %cst_10 : f32 to vector<32x64xf32>
      %c0_11 = arith.constant 0 : index
      %c0_12 = arith.constant 0 : index
      %13 = vector.load %arg7[%c0_11, %c0_12] : memref<32x64xf32, #tpu.memory_space<vmem>>, vector<32x64xf32>
      tpu.vector_store %arg7[%c0_11, %c0_12], %12 {strides = array<i32>} : memref<32x64xf32, #tpu.memory_space<vmem>>, vector<32x64xf32>,
    } else {
    }
    %c0 = arith.constant 0 : index
    %c0_1 = arith.constant 0 : index
    %3 = vector.load %arg7[%c0, %c0_1] : memref<32x64xf32, #tpu.memory_space<vmem>>, vector<32x64xf32>
    %c0_2 = arith.constant 0 : index
    %c0_3 = arith.constant 0 : index
    %4 = vector.load %arg3[%c0_2, %c0_3] : memref<32x288xbf16, #tpu.memory_space<vmem>>, vector<32x288xbf16>
    %c0_4 = arith.constant 0 : index
    %c0_5 = arith.constant 0 : index
    %5 = vector.load %arg4[%c0_4, %c0_5] : memref<288x64xbf16, #tpu.memory_space<vmem>>, vector<288x64xbf16>
    %cst = arith.constant dense<0.000000e+00> : vector<32x64xf32>
    %6 = tpu.matmul %4, %5, %cst {dimension_numbers = #tpu.dot_dimension_numbers<[1], [0], [0], [1], [0, 0, 1, 1], [], []>} : vector<32x288xbf16>, vector<288x64xbf16>, vector<32x64xf32> -> vector<32x64xf32>
    %7 = arith.addf %3, %6 : vector<32x64xf32>
    %c0_6 = arith.constant 0 : index
    %c0_7 = arith.constant 0 : index
    %8 = vector.load %arg7[%c0_6, %c0_7] : memref<32x64xf32, #tpu.memory_space<vmem>>, vector<32x64xf32>
    tpu.vector_store %arg7[%c0_6, %c0_7], %7 {strides = array<i32>} : memref<32x64xf32, #tpu.memory_space<vmem>>, vector<32x64xf32>,
    %c0_i32_8 = arith.constant 0 : i32
    %9 = arith.cmpi eq, %arg2, %c0_i32_8 : i32
    %10 = arith.extui %9 : i1 to i32
    %c0_i32_9 = arith.constant 0 : i32
    %11 = arith.cmpi ne, %10, %c0_i32_9 : i32
    scf.if %11 {
      %c0_10 = arith.constant 0 : index
      %c0_11 = arith.constant 0 : index
      %12 = vector.load %arg7[%c0_10, %c0_11] : memref<32x64xf32, #tpu.memory_space<vmem>>, vector<32x64xf32>
      %c0_12 = arith.constant 0 : index
      %c0_13 = arith.constant 0 : index
      %13 = vector.load %arg5[%c0_12, %c0_13] : memref<1x64xf32, #tpu.memory_space<vmem>>, vector<1x64xf32>
      %14 = vector.broadcast %13 : vector<1x64xf32> to vector<32x64xf32>
      %15 = arith.addf %12, %14 : vector<32x64xf32>
      %cst_14 = arith.constant 0.000000e+00 : f32
      %16 = vector.broadcast %cst_14 : f32 to vector<32x64xf32>
      %17 = arith.maximumf %15, %16 : vector<32x64xf32>
      %18 = arith.truncf %17 : vector<32x64xf32> to vector<32x64xbf16>
      %c0_15 = arith.constant 0 : index
      %c0_16 = arith.constant 0 : index
      %19 = vector.load %arg6[%c0_15, %c0_16] : memref<32x64xbf16, #tpu.memory_space<vmem>>, vector<32x64xbf16>
      tpu.vector_store %arg6[%c0_15, %c0_16], %18 {strides = array<i32>} : memref<32x64xbf16, #tpu.memory_space<vmem>>, vector<32x64xbf16>,
    } else {
    }
    return
  }
  func.func @transform_0(%arg0: i32, %arg1: i32, %arg2: i32) -> (i32, i32) {
    %c0_i32 = arith.constant 0 : i32
    return %arg0, %arg2 : i32, i32
  }
  func.func @transform_1(%arg0: i32, %arg1: i32, %arg2: i32) -> (i32, i32) {
    %c0_i32 = arith.constant 0 : i32
    return %arg2, %arg1 : i32, i32
  }
  func.func @transform_2(%arg0: i32, %arg1: i32, %arg2: i32) -> (i32, i32) {
    %c0_i32 = arith.constant 0 : i32
    %c0_i32_0 = arith.constant 0 : i32
    return %c0_i32, %arg1 : i32, i32
  }
  func.func @transform_3(%arg0: i32, %arg1: i32, %arg2: i32) -> (i32, i32) {
    %c0_i32 = arith.constant 0 : i32
    return %arg0, %arg1 : i32, i32
  }
}

module attributes {stable_mosaic.version = 11 : i64} {
  func.func @_mm_bn_act_kernel(%arg0: i32, %arg1: i32, %arg2: i32, %arg3: memref<32x576xbf16, #tpu.memory_space<vmem>>, %arg4: memref<576x16xbf16, #tpu.memory_space<vmem>>, %arg5: memref<1x16xf32, #tpu.memory_space<vmem>>, %arg6: memref<32x16xbf16, #tpu.memory_space<vmem>>, %arg7: memref<32x16xf32, #tpu.memory_space<vmem>>) attributes {dimension_semantics = [#tpu.dimension_semantics<parallel>, #tpu.dimension_semantics<parallel>, #tpu.dimension_semantics<arbitrary>], iteration_bounds = array<i64: 1, 1, 1>, scalar_prefetch = 0 : i64, scratch_operands = 1 : i64, tpu.core_type = #tpu.core_type<tc>, window_params = [{transform_indices = @transform_0, window_bounds = array<i64: 32, 576>}, {transform_indices = @transform_1, window_bounds = array<i64: 576, 16>}, {transform_indices = @transform_2, window_bounds = array<i64: 1, 16>}, {transform_indices = @transform_3, window_bounds = array<i64: 32, 16>}]} {
    %c0_i32 = arith.constant 0 : i32
    %0 = arith.cmpi eq, %arg2, %c0_i32 : i32
    %1 = arith.extui %0 : i1 to i32
    %c0_i32_0 = arith.constant 0 : i32
    %2 = arith.cmpi ne, %1, %c0_i32_0 : i32
    scf.if %2 {
      %cst_10 = arith.constant 0.000000e+00 : f32
      %12 = vector.broadcast %cst_10 : f32 to vector<32x16xf32>
      %c0_11 = arith.constant 0 : index
      %c0_12 = arith.constant 0 : index
      %13 = vector.load %arg7[%c0_11, %c0_12] : memref<32x16xf32, #tpu.memory_space<vmem>>, vector<32x16xf32>
      tpu.vector_store %arg7[%c0_11, %c0_12], %12 {strides = array<i32>} : memref<32x16xf32, #tpu.memory_space<vmem>>, vector<32x16xf32>,
    } else {
    }
    %c0 = arith.constant 0 : index
    %c0_1 = arith.constant 0 : index
    %3 = vector.load %arg7[%c0, %c0_1] : memref<32x16xf32, #tpu.memory_space<vmem>>, vector<32x16xf32>
    %c0_2 = arith.constant 0 : index
    %c0_3 = arith.constant 0 : index
    %4 = vector.load %arg3[%c0_2, %c0_3] : memref<32x576xbf16, #tpu.memory_space<vmem>>, vector<32x576xbf16>
    %c0_4 = arith.constant 0 : index
    %c0_5 = arith.constant 0 : index
    %5 = vector.load %arg4[%c0_4, %c0_5] : memref<576x16xbf16, #tpu.memory_space<vmem>>, vector<576x16xbf16>
    %cst = arith.constant dense<0.000000e+00> : vector<32x16xf32>
    %6 = tpu.matmul %4, %5, %cst {dimension_numbers = #tpu.dot_dimension_numbers<[1], [0], [0], [1], [0, 0, 1, 1], [], []>} : vector<32x576xbf16>, vector<576x16xbf16>, vector<32x16xf32> -> vector<32x16xf32>
    %7 = arith.addf %3, %6 : vector<32x16xf32>
    %c0_6 = arith.constant 0 : index
    %c0_7 = arith.constant 0 : index
    %8 = vector.load %arg7[%c0_6, %c0_7] : memref<32x16xf32, #tpu.memory_space<vmem>>, vector<32x16xf32>
    tpu.vector_store %arg7[%c0_6, %c0_7], %7 {strides = array<i32>} : memref<32x16xf32, #tpu.memory_space<vmem>>, vector<32x16xf32>,
    %c0_i32_8 = arith.constant 0 : i32
    %9 = arith.cmpi eq, %arg2, %c0_i32_8 : i32
    %10 = arith.extui %9 : i1 to i32
    %c0_i32_9 = arith.constant 0 : i32
    %11 = arith.cmpi ne, %10, %c0_i32_9 : i32
    scf.if %11 {
      %c0_10 = arith.constant 0 : index
      %c0_11 = arith.constant 0 : index
      %12 = vector.load %arg7[%c0_10, %c0_11] : memref<32x16xf32, #tpu.memory_space<vmem>>, vector<32x16xf32>
      %c0_12 = arith.constant 0 : index
      %c0_13 = arith.constant 0 : index
      %13 = vector.load %arg5[%c0_12, %c0_13] : memref<1x16xf32, #tpu.memory_space<vmem>>, vector<1x16xf32>
      %14 = vector.broadcast %13 : vector<1x16xf32> to vector<32x16xf32>
      %15 = arith.addf %12, %14 : vector<32x16xf32>
      %cst_14 = arith.constant 0.000000e+00 : f32
      %16 = vector.broadcast %cst_14 : f32 to vector<32x16xf32>
      %17 = arith.maximumf %15, %16 : vector<32x16xf32>
      %18 = arith.truncf %17 : vector<32x16xf32> to vector<32x16xbf16>
      %c0_15 = arith.constant 0 : index
      %c0_16 = arith.constant 0 : index
      %19 = vector.load %arg6[%c0_15, %c0_16] : memref<32x16xbf16, #tpu.memory_space<vmem>>, vector<32x16xbf16>
      tpu.vector_store %arg6[%c0_15, %c0_16], %18 {strides = array<i32>} : memref<32x16xbf16, #tpu.memory_space<vmem>>, vector<32x16xbf16>,
    } else {
    }
    return
  }
  func.func @transform_0(%arg0: i32, %arg1: i32, %arg2: i32) -> (i32, i32) {
    %c0_i32 = arith.constant 0 : i32
    return %arg0, %arg2 : i32, i32
  }
  func.func @transform_1(%arg0: i32, %arg1: i32, %arg2: i32) -> (i32, i32) {
    %c0_i32 = arith.constant 0 : i32
    return %arg2, %arg1 : i32, i32
  }
  func.func @transform_2(%arg0: i32, %arg1: i32, %arg2: i32) -> (i32, i32) {
    %c0_i32 = arith.constant 0 : i32
    %c0_i32_0 = arith.constant 0 : i32
    return %c0_i32, %arg1 : i32, i32
  }
  func.func @transform_3(%arg0: i32, %arg1: i32, %arg2: i32) -> (i32, i32) {
    %c0_i32 = arith.constant 0 : i32
    return %arg0, %arg1 : i32, i32
  }
}

module attributes {stable_mosaic.version = 11 : i64} {
  func.func @_mm_bn_act_kernel(%arg0: i32, %arg1: i32, %arg2: i32, %arg3: memref<32x64xbf16, #tpu.memory_space<vmem>>, %arg4: memref<64x16xbf16, #tpu.memory_space<vmem>>, %arg5: memref<1x16xf32, #tpu.memory_space<vmem>>, %arg6: memref<32x16xbf16, #tpu.memory_space<vmem>>, %arg7: memref<32x16xf32, #tpu.memory_space<vmem>>) attributes {dimension_semantics = [#tpu.dimension_semantics<parallel>, #tpu.dimension_semantics<parallel>, #tpu.dimension_semantics<arbitrary>], iteration_bounds = array<i64: 1, 1, 1>, scalar_prefetch = 0 : i64, scratch_operands = 1 : i64, tpu.core_type = #tpu.core_type<tc>, window_params = [{transform_indices = @transform_0, window_bounds = array<i64: 32, 64>}, {transform_indices = @transform_1, window_bounds = array<i64: 64, 16>}, {transform_indices = @transform_2, window_bounds = array<i64: 1, 16>}, {transform_indices = @transform_3, window_bounds = array<i64: 32, 16>}]} {
    %c0_i32 = arith.constant 0 : i32
    %0 = arith.cmpi eq, %arg2, %c0_i32 : i32
    %1 = arith.extui %0 : i1 to i32
    %c0_i32_0 = arith.constant 0 : i32
    %2 = arith.cmpi ne, %1, %c0_i32_0 : i32
    scf.if %2 {
      %cst_10 = arith.constant 0.000000e+00 : f32
      %12 = vector.broadcast %cst_10 : f32 to vector<32x16xf32>
      %c0_11 = arith.constant 0 : index
      %c0_12 = arith.constant 0 : index
      %13 = vector.load %arg7[%c0_11, %c0_12] : memref<32x16xf32, #tpu.memory_space<vmem>>, vector<32x16xf32>
      tpu.vector_store %arg7[%c0_11, %c0_12], %12 {strides = array<i32>} : memref<32x16xf32, #tpu.memory_space<vmem>>, vector<32x16xf32>,
    } else {
    }
    %c0 = arith.constant 0 : index
    %c0_1 = arith.constant 0 : index
    %3 = vector.load %arg7[%c0, %c0_1] : memref<32x16xf32, #tpu.memory_space<vmem>>, vector<32x16xf32>
    %c0_2 = arith.constant 0 : index
    %c0_3 = arith.constant 0 : index
    %4 = vector.load %arg3[%c0_2, %c0_3] : memref<32x64xbf16, #tpu.memory_space<vmem>>, vector<32x64xbf16>
    %c0_4 = arith.constant 0 : index
    %c0_5 = arith.constant 0 : index
    %5 = vector.load %arg4[%c0_4, %c0_5] : memref<64x16xbf16, #tpu.memory_space<vmem>>, vector<64x16xbf16>
    %cst = arith.constant dense<0.000000e+00> : vector<32x16xf32>
    %6 = tpu.matmul %4, %5, %cst {dimension_numbers = #tpu.dot_dimension_numbers<[1], [0], [0], [1], [0, 0, 1, 1], [], []>} : vector<32x64xbf16>, vector<64x16xbf16>, vector<32x16xf32> -> vector<32x16xf32>
    %7 = arith.addf %3, %6 : vector<32x16xf32>
    %c0_6 = arith.constant 0 : index
    %c0_7 = arith.constant 0 : index
    %8 = vector.load %arg7[%c0_6, %c0_7] : memref<32x16xf32, #tpu.memory_space<vmem>>, vector<32x16xf32>
    tpu.vector_store %arg7[%c0_6, %c0_7], %7 {strides = array<i32>} : memref<32x16xf32, #tpu.memory_space<vmem>>, vector<32x16xf32>,
    %c0_i32_8 = arith.constant 0 : i32
    %9 = arith.cmpi eq, %arg2, %c0_i32_8 : i32
    %10 = arith.extui %9 : i1 to i32
    %c0_i32_9 = arith.constant 0 : i32
    %11 = arith.cmpi ne, %10, %c0_i32_9 : i32
    scf.if %11 {
      %c0_10 = arith.constant 0 : index
      %c0_11 = arith.constant 0 : index
      %12 = vector.load %arg7[%c0_10, %c0_11] : memref<32x16xf32, #tpu.memory_space<vmem>>, vector<32x16xf32>
      %c0_12 = arith.constant 0 : index
      %c0_13 = arith.constant 0 : index
      %13 = vector.load %arg5[%c0_12, %c0_13] : memref<1x16xf32, #tpu.memory_space<vmem>>, vector<1x16xf32>
      %14 = vector.broadcast %13 : vector<1x16xf32> to vector<32x16xf32>
      %15 = arith.addf %12, %14 : vector<32x16xf32>
      %cst_14 = arith.constant 0.000000e+00 : f32
      %16 = vector.broadcast %cst_14 : f32 to vector<32x16xf32>
      %17 = arith.maximumf %15, %16 : vector<32x16xf32>
      %18 = arith.truncf %17 : vector<32x16xf32> to vector<32x16xbf16>
      %c0_15 = arith.constant 0 : index
      %c0_16 = arith.constant 0 : index
      %19 = vector.load %arg6[%c0_15, %c0_16] : memref<32x16xbf16, #tpu.memory_space<vmem>>, vector<32x16xbf16>
      tpu.vector_store %arg6[%c0_15, %c0_16], %18 {strides = array<i32>} : memref<32x16xbf16, #tpu.memory_space<vmem>>, vector<32x16xbf16>,
    } else {
    }
    return
  }
  func.func @transform_0(%arg0: i32, %arg1: i32, %arg2: i32) -> (i32, i32) {
    %c0_i32 = arith.constant 0 : i32
    return %arg0, %arg2 : i32, i32
  }
  func.func @transform_1(%arg0: i32, %arg1: i32, %arg2: i32) -> (i32, i32) {
    %c0_i32 = arith.constant 0 : i32
    return %arg2, %arg1 : i32, i32
  }
  func.func @transform_2(%arg0: i32, %arg1: i32, %arg2: i32) -> (i32, i32) {
    %c0_i32 = arith.constant 0 : i32
    %c0_i32_0 = arith.constant 0 : i32
    return %c0_i32, %arg1 : i32, i32
  }
  func.func @transform_3(%arg0: i32, %arg1: i32, %arg2: i32) -> (i32, i32) {
    %c0_i32 = arith.constant 0 : i32
    return %arg0, %arg1 : i32, i32
  }
}

module attributes {stable_mosaic.version = 11 : i64} {
  func.func @_mm_bn_act_kernel(%arg0: i32, %arg1: i32, %arg2: i32, %arg3: memref<2x64xbf16, #tpu.memory_space<vmem>>, %arg4: memref<64x16xbf16, #tpu.memory_space<vmem>>, %arg5: memref<1x16xf32, #tpu.memory_space<vmem>>, %arg6: memref<2x16xbf16, #tpu.memory_space<vmem>>, %arg7: memref<2x16xf32, #tpu.memory_space<vmem>>) attributes {dimension_semantics = [#tpu.dimension_semantics<parallel>, #tpu.dimension_semantics<parallel>, #tpu.dimension_semantics<arbitrary>], iteration_bounds = array<i64: 1, 1, 1>, scalar_prefetch = 0 : i64, scratch_operands = 1 : i64, tpu.core_type = #tpu.core_type<tc>, window_params = [{transform_indices = @transform_0, window_bounds = array<i64: 2, 64>}, {transform_indices = @transform_1, window_bounds = array<i64: 64, 16>}, {transform_indices = @transform_2, window_bounds = array<i64: 1, 16>}, {transform_indices = @transform_3, window_bounds = array<i64: 2, 16>}]} {
    %c0_i32 = arith.constant 0 : i32
    %0 = arith.cmpi eq, %arg2, %c0_i32 : i32
    %1 = arith.extui %0 : i1 to i32
    %c0_i32_0 = arith.constant 0 : i32
    %2 = arith.cmpi ne, %1, %c0_i32_0 : i32
    scf.if %2 {
      %cst_10 = arith.constant 0.000000e+00 : f32
      %12 = vector.broadcast %cst_10 : f32 to vector<2x16xf32>
      %c0_11 = arith.constant 0 : index
      %c0_12 = arith.constant 0 : index
      %13 = vector.load %arg7[%c0_11, %c0_12] : memref<2x16xf32, #tpu.memory_space<vmem>>, vector<2x16xf32>
      tpu.vector_store %arg7[%c0_11, %c0_12], %12 {strides = array<i32>} : memref<2x16xf32, #tpu.memory_space<vmem>>, vector<2x16xf32>,
    } else {
    }
    %c0 = arith.constant 0 : index
    %c0_1 = arith.constant 0 : index
    %3 = vector.load %arg7[%c0, %c0_1] : memref<2x16xf32, #tpu.memory_space<vmem>>, vector<2x16xf32>
    %c0_2 = arith.constant 0 : index
    %c0_3 = arith.constant 0 : index
    %4 = vector.load %arg3[%c0_2, %c0_3] : memref<2x64xbf16, #tpu.memory_space<vmem>>, vector<2x64xbf16>
    %c0_4 = arith.constant 0 : index
    %c0_5 = arith.constant 0 : index
    %5 = vector.load %arg4[%c0_4, %c0_5] : memref<64x16xbf16, #tpu.memory_space<vmem>>, vector<64x16xbf16>
    %cst = arith.constant dense<0.000000e+00> : vector<2x16xf32>
    %6 = tpu.matmul %4, %5, %cst {dimension_numbers = #tpu.dot_dimension_numbers<[1], [0], [0], [1], [0, 0, 1, 1], [], []>} : vector<2x64xbf16>, vector<64x16xbf16>, vector<2x16xf32> -> vector<2x16xf32>
    %7 = arith.addf %3, %6 : vector<2x16xf32>
    %c0_6 = arith.constant 0 : index
    %c0_7 = arith.constant 0 : index
    %8 = vector.load %arg7[%c0_6, %c0_7] : memref<2x16xf32, #tpu.memory_space<vmem>>, vector<2x16xf32>
    tpu.vector_store %arg7[%c0_6, %c0_7], %7 {strides = array<i32>} : memref<2x16xf32, #tpu.memory_space<vmem>>, vector<2x16xf32>,
    %c0_i32_8 = arith.constant 0 : i32
    %9 = arith.cmpi eq, %arg2, %c0_i32_8 : i32
    %10 = arith.extui %9 : i1 to i32
    %c0_i32_9 = arith.constant 0 : i32
    %11 = arith.cmpi ne, %10, %c0_i32_9 : i32
    scf.if %11 {
      %c0_10 = arith.constant 0 : index
      %c0_11 = arith.constant 0 : index
      %12 = vector.load %arg7[%c0_10, %c0_11] : memref<2x16xf32, #tpu.memory_space<vmem>>, vector<2x16xf32>
      %c0_12 = arith.constant 0 : index
      %c0_13 = arith.constant 0 : index
      %13 = vector.load %arg5[%c0_12, %c0_13] : memref<1x16xf32, #tpu.memory_space<vmem>>, vector<1x16xf32>
      %14 = vector.broadcast %13 : vector<1x16xf32> to vector<2x16xf32>
      %15 = arith.addf %12, %14 : vector<2x16xf32>
      %cst_14 = arith.constant 0.000000e+00 : f32
      %16 = vector.broadcast %cst_14 : f32 to vector<2x16xf32>
      %17 = arith.maximumf %15, %16 : vector<2x16xf32>
      %18 = arith.truncf %17 : vector<2x16xf32> to vector<2x16xbf16>
      %c0_15 = arith.constant 0 : index
      %c0_16 = arith.constant 0 : index
      %19 = vector.load %arg6[%c0_15, %c0_16] : memref<2x16xbf16, #tpu.memory_space<vmem>>, vector<2x16xbf16>
      tpu.vector_store %arg6[%c0_15, %c0_16], %18 {strides = array<i32>} : memref<2x16xbf16, #tpu.memory_space<vmem>>, vector<2x16xbf16>,
    } else {
    }
    return
  }
  func.func @transform_0(%arg0: i32, %arg1: i32, %arg2: i32) -> (i32, i32) {
    %c0_i32 = arith.constant 0 : i32
    return %arg0, %arg2 : i32, i32
  }
  func.func @transform_1(%arg0: i32, %arg1: i32, %arg2: i32) -> (i32, i32) {
    %c0_i32 = arith.constant 0 : i32
    return %arg2, %arg1 : i32, i32
  }
  func.func @transform_2(%arg0: i32, %arg1: i32, %arg2: i32) -> (i32, i32) {
    %c0_i32 = arith.constant 0 : i32
    %c0_i32_0 = arith.constant 0 : i32
    return %c0_i32, %arg1 : i32, i32
  }
  func.func @transform_3(%arg0: i32, %arg1: i32, %arg2: i32) -> (i32, i32) {
    %c0_i32 = arith.constant 0 : i32
    return %arg0, %arg1 : i32, i32
  }
}

module attributes {stable_mosaic.version = 11 : i64} {
  func.func @_aspp_bottleneck_kernel(%arg0: i32, %arg1: memref<32x16xbf16, #tpu.memory_space<vmem>>, %arg2: memref<32x16xbf16, #tpu.memory_space<vmem>>, %arg3: memref<32x16xbf16, #tpu.memory_space<vmem>>, %arg4: memref<32x16xbf16, #tpu.memory_space<vmem>>, %arg5: memref<32x16xbf16, #tpu.memory_space<vmem>>, %arg6: memref<16x8xbf16, #tpu.memory_space<vmem>>, %arg7: memref<16x8xbf16, #tpu.memory_space<vmem>>, %arg8: memref<16x8xbf16, #tpu.memory_space<vmem>>, %arg9: memref<16x8xbf16, #tpu.memory_space<vmem>>, %arg10: memref<16x8xbf16, #tpu.memory_space<vmem>>, %arg11: memref<1x8xf32, #tpu.memory_space<vmem>>, %arg12: memref<32x8xbf16, #tpu.memory_space<vmem>>) attributes {dimension_semantics = [#tpu.dimension_semantics<parallel>], iteration_bounds = array<i64: 1>, scalar_prefetch = 0 : i64, scratch_operands = 0 : i64, tpu.core_type = #tpu.core_type<tc>, window_params = [{transform_indices = @transform_0, window_bounds = array<i64: 32, 16>}, {transform_indices = @transform_1, window_bounds = array<i64: 32, 16>}, {transform_indices = @transform_2, window_bounds = array<i64: 32, 16>}, {transform_indices = @transform_3, window_bounds = array<i64: 32, 16>}, {transform_indices = @transform_4, window_bounds = array<i64: 32, 16>}, {pipeline_mode = #tpu.pipeline_mode<synchronous>, transform_indices = @transform_5, window_bounds = array<i64: 16, 8>}, {pipeline_mode = #tpu.pipeline_mode<synchronous>, transform_indices = @transform_6, window_bounds = array<i64: 16, 8>}, {pipeline_mode = #tpu.pipeline_mode<synchronous>, transform_indices = @transform_7, window_bounds = array<i64: 16, 8>}, {pipeline_mode = #tpu.pipeline_mode<synchronous>, transform_indices = @transform_8, window_bounds = array<i64: 16, 8>}, {pipeline_mode = #tpu.pipeline_mode<synchronous>, transform_indices = @transform_9, window_bounds = array<i64: 16, 8>}, {pipeline_mode = #tpu.pipeline_mode<synchronous>, transform_indices = @transform_10, window_bounds = array<i64: 1, 8>}, {transform_indices = @transform_11, window_bounds = array<i64: 32, 8>}]} {
    %c0 = arith.constant 0 : index
    %c0_0 = arith.constant 0 : index
    %0 = vector.load %arg1[%c0, %c0_0] : memref<32x16xbf16, #tpu.memory_space<vmem>>, vector<32x16xbf16>
    %c0_1 = arith.constant 0 : index
    %c0_2 = arith.constant 0 : index
    %1 = vector.load %arg6[%c0_1, %c0_2] : memref<16x8xbf16, #tpu.memory_space<vmem>>, vector<16x8xbf16>
    %cst = arith.constant dense<0.000000e+00> : vector<32x8xf32>
    %2 = tpu.matmul %0, %1, %cst {dimension_numbers = #tpu.dot_dimension_numbers<[1], [0], [0], [1], [0, 0, 1, 1], [], []>} : vector<32x16xbf16>, vector<16x8xbf16>, vector<32x8xf32> -> vector<32x8xf32>
    %c0_3 = arith.constant 0 : index
    %c0_4 = arith.constant 0 : index
    %3 = vector.load %arg2[%c0_3, %c0_4] : memref<32x16xbf16, #tpu.memory_space<vmem>>, vector<32x16xbf16>
    %c0_5 = arith.constant 0 : index
    %c0_6 = arith.constant 0 : index
    %4 = vector.load %arg7[%c0_5, %c0_6] : memref<16x8xbf16, #tpu.memory_space<vmem>>, vector<16x8xbf16>
    %cst_7 = arith.constant dense<0.000000e+00> : vector<32x8xf32>
    %5 = tpu.matmul %3, %4, %cst_7 {dimension_numbers = #tpu.dot_dimension_numbers<[1], [0], [0], [1], [0, 0, 1, 1], [], []>} : vector<32x16xbf16>, vector<16x8xbf16>, vector<32x8xf32> -> vector<32x8xf32>
    %6 = arith.addf %2, %5 : vector<32x8xf32>
    %c0_8 = arith.constant 0 : index
    %c0_9 = arith.constant 0 : index
    %7 = vector.load %arg3[%c0_8, %c0_9] : memref<32x16xbf16, #tpu.memory_space<vmem>>, vector<32x16xbf16>
    %c0_10 = arith.constant 0 : index
    %c0_11 = arith.constant 0 : index
    %8 = vector.load %arg8[%c0_10, %c0_11] : memref<16x8xbf16, #tpu.memory_space<vmem>>, vector<16x8xbf16>
    %cst_12 = arith.constant dense<0.000000e+00> : vector<32x8xf32>
    %9 = tpu.matmul %7, %8, %cst_12 {dimension_numbers = #tpu.dot_dimension_numbers<[1], [0], [0], [1], [0, 0, 1, 1], [], []>} : vector<32x16xbf16>, vector<16x8xbf16>, vector<32x8xf32> -> vector<32x8xf32>
    %10 = arith.addf %6, %9 : vector<32x8xf32>
    %c0_13 = arith.constant 0 : index
    %c0_14 = arith.constant 0 : index
    %11 = vector.load %arg4[%c0_13, %c0_14] : memref<32x16xbf16, #tpu.memory_space<vmem>>, vector<32x16xbf16>
    %c0_15 = arith.constant 0 : index
    %c0_16 = arith.constant 0 : index
    %12 = vector.load %arg9[%c0_15, %c0_16] : memref<16x8xbf16, #tpu.memory_space<vmem>>, vector<16x8xbf16>
    %cst_17 = arith.constant dense<0.000000e+00> : vector<32x8xf32>
    %13 = tpu.matmul %11, %12, %cst_17 {dimension_numbers = #tpu.dot_dimension_numbers<[1], [0], [0], [1], [0, 0, 1, 1], [], []>} : vector<32x16xbf16>, vector<16x8xbf16>, vector<32x8xf32> -> vector<32x8xf32>
    %14 = arith.addf %10, %13 : vector<32x8xf32>
    %c0_18 = arith.constant 0 : index
    %c0_19 = arith.constant 0 : index
    %15 = vector.load %arg5[%c0_18, %c0_19] : memref<32x16xbf16, #tpu.memory_space<vmem>>, vector<32x16xbf16>
    %c0_20 = arith.constant 0 : index
    %c0_21 = arith.constant 0 : index
    %16 = vector.load %arg10[%c0_20, %c0_21] : memref<16x8xbf16, #tpu.memory_space<vmem>>, vector<16x8xbf16>
    %cst_22 = arith.constant dense<0.000000e+00> : vector<32x8xf32>
    %17 = tpu.matmul %15, %16, %cst_22 {dimension_numbers = #tpu.dot_dimension_numbers<[1], [0], [0], [1], [0, 0, 1, 1], [], []>} : vector<32x16xbf16>, vector<16x8xbf16>, vector<32x8xf32> -> vector<32x8xf32>
    %18 = arith.addf %14, %17 : vector<32x8xf32>
    %c0_23 = arith.constant 0 : index
    %c0_24 = arith.constant 0 : index
    %19 = vector.load %arg11[%c0_23, %c0_24] : memref<1x8xf32, #tpu.memory_space<vmem>>, vector<1x8xf32>
    %20 = vector.broadcast %19 : vector<1x8xf32> to vector<32x8xf32>
    %21 = arith.addf %18, %20 : vector<32x8xf32>
    %cst_25 = arith.constant 0.000000e+00 : f32
    %22 = vector.broadcast %cst_25 : f32 to vector<32x8xf32>
    %23 = arith.maximumf %21, %22 : vector<32x8xf32>
    %24 = arith.truncf %23 : vector<32x8xf32> to vector<32x8xbf16>
    %c0_26 = arith.constant 0 : index
    %c0_27 = arith.constant 0 : index
    %25 = vector.load %arg12[%c0_26, %c0_27] : memref<32x8xbf16, #tpu.memory_space<vmem>>, vector<32x8xbf16>
    tpu.vector_store %arg12[%c0_26, %c0_27], %24 {strides = array<i32>} : memref<32x8xbf16, #tpu.memory_space<vmem>>, vector<32x8xbf16>,
    return
  }
  func.func @transform_0(%arg0: i32) -> (i32, i32) {
    %c0_i32 = arith.constant 0 : i32
    %c0_i32_0 = arith.constant 0 : i32
    return %arg0, %c0_i32 : i32, i32
  }
  func.func @transform_1(%arg0: i32) -> (i32, i32) {
    %c0_i32 = arith.constant 0 : i32
    %c0_i32_0 = arith.constant 0 : i32
    return %arg0, %c0_i32 : i32, i32
  }
  func.func @transform_2(%arg0: i32) -> (i32, i32) {
    %c0_i32 = arith.constant 0 : i32
    %c0_i32_0 = arith.constant 0 : i32
    return %arg0, %c0_i32 : i32, i32
  }
  func.func @transform_3(%arg0: i32) -> (i32, i32) {
    %c0_i32 = arith.constant 0 : i32
    %c0_i32_0 = arith.constant 0 : i32
    return %arg0, %c0_i32 : i32, i32
  }
  func.func @transform_4(%arg0: i32) -> (i32, i32) {
    %c0_i32 = arith.constant 0 : i32
    %c0_i32_0 = arith.constant 0 : i32
    return %arg0, %c0_i32 : i32, i32
  }
  func.func @transform_5(%arg0: i32) -> (i32, i32) {
    %c0_i32 = arith.constant 0 : i32
    %c0_i32_0 = arith.constant 0 : i32
    %c0_i32_1 = arith.constant 0 : i32
    return %c0_i32, %c0_i32_0 : i32, i32
  }
  func.func @transform_6(%arg0: i32) -> (i32, i32) {
    %c0_i32 = arith.constant 0 : i32
    %c0_i32_0 = arith.constant 0 : i32
    %c0_i32_1 = arith.constant 0 : i32
    return %c0_i32, %c0_i32_0 : i32, i32
  }
  func.func @transform_7(%arg0: i32) -> (i32, i32) {
    %c0_i32 = arith.constant 0 : i32
    %c0_i32_0 = arith.constant 0 : i32
    %c0_i32_1 = arith.constant 0 : i32
    return %c0_i32, %c0_i32_0 : i32, i32
  }
  func.func @transform_8(%arg0: i32) -> (i32, i32) {
    %c0_i32 = arith.constant 0 : i32
    %c0_i32_0 = arith.constant 0 : i32
    %c0_i32_1 = arith.constant 0 : i32
    return %c0_i32, %c0_i32_0 : i32, i32
  }
  func.func @transform_9(%arg0: i32) -> (i32, i32) {
    %c0_i32 = arith.constant 0 : i32
    %c0_i32_0 = arith.constant 0 : i32
    %c0_i32_1 = arith.constant 0 : i32
    return %c0_i32, %c0_i32_0 : i32, i32
  }
  func.func @transform_10(%arg0: i32) -> (i32, i32) {
    %c0_i32 = arith.constant 0 : i32
    %c0_i32_0 = arith.constant 0 : i32
    %c0_i32_1 = arith.constant 0 : i32
    return %c0_i32, %c0_i32_0 : i32, i32
  }
  func.func @transform_11(%arg0: i32) -> (i32, i32) {
    %c0_i32 = arith.constant 0 : i32
    %c0_i32_0 = arith.constant 0 : i32
    return %arg0, %c0_i32 : i32, i32
  }
}

module attributes {stable_mosaic.version = 11 : i64} {
  func.func @_head_fused_kernel(%arg0: i32, %arg1: i32, %arg2: memref<32x8xbf16, #tpu.memory_space<vmem>>, %arg3: memref<8x8xbf16, #tpu.memory_space<vmem>>, %arg4: memref<1x8xf32, #tpu.memory_space<vmem>>, %arg5: memref<8x4xbf16, #tpu.memory_space<vmem>>, %arg6: memref<1x4xf32, #tpu.memory_space<vmem>>, %arg7: memref<32x4xf32, #tpu.memory_space<vmem>>, %arg8: memref<32x8xf32, #tpu.memory_space<vmem>>) attributes {dimension_semantics = [#tpu.dimension_semantics<parallel>, #tpu.dimension_semantics<arbitrary>], iteration_bounds = array<i64: 1, 1>, scalar_prefetch = 0 : i64, scratch_operands = 1 : i64, tpu.core_type = #tpu.core_type<tc>, window_params = [{transform_indices = @transform_0, window_bounds = array<i64: 32, 8>}, {transform_indices = @transform_1, window_bounds = array<i64: 8, 8>}, {pipeline_mode = #tpu.pipeline_mode<synchronous>, transform_indices = @transform_2, window_bounds = array<i64: 1, 8>}, {pipeline_mode = #tpu.pipeline_mode<synchronous>, transform_indices = @transform_3, window_bounds = array<i64: 8, 4>}, {pipeline_mode = #tpu.pipeline_mode<synchronous>, transform_indices = @transform_4, window_bounds = array<i64: 1, 4>}, {transform_indices = @transform_5, window_bounds = array<i64: 32, 4>}]} {
    %c0_i32 = arith.constant 0 : i32
    %0 = arith.cmpi eq, %arg1, %c0_i32 : i32
    %1 = arith.extui %0 : i1 to i32
    %c0_i32_0 = arith.constant 0 : i32
    %2 = arith.cmpi ne, %1, %c0_i32_0 : i32
    scf.if %2 {
      %cst_10 = arith.constant 0.000000e+00 : f32
      %12 = vector.broadcast %cst_10 : f32 to vector<32x8xf32>
      %c0_11 = arith.constant 0 : index
      %c0_12 = arith.constant 0 : index
      %13 = vector.load %arg8[%c0_11, %c0_12] : memref<32x8xf32, #tpu.memory_space<vmem>>, vector<32x8xf32>
      tpu.vector_store %arg8[%c0_11, %c0_12], %12 {strides = array<i32>} : memref<32x8xf32, #tpu.memory_space<vmem>>, vector<32x8xf32>,
    } else {
    }
    %c0 = arith.constant 0 : index
    %c0_1 = arith.constant 0 : index
    %3 = vector.load %arg8[%c0, %c0_1] : memref<32x8xf32, #tpu.memory_space<vmem>>, vector<32x8xf32>
    %c0_2 = arith.constant 0 : index
    %c0_3 = arith.constant 0 : index
    %4 = vector.load %arg2[%c0_2, %c0_3] : memref<32x8xbf16, #tpu.memory_space<vmem>>, vector<32x8xbf16>
    %c0_4 = arith.constant 0 : index
    %c0_5 = arith.constant 0 : index
    %5 = vector.load %arg3[%c0_4, %c0_5] : memref<8x8xbf16, #tpu.memory_space<vmem>>, vector<8x8xbf16>
    %cst = arith.constant dense<0.000000e+00> : vector<32x8xf32>
    %6 = tpu.matmul %4, %5, %cst {dimension_numbers = #tpu.dot_dimension_numbers<[1], [0], [0], [1], [0, 0, 1, 1], [], []>} : vector<32x8xbf16>, vector<8x8xbf16>, vector<32x8xf32> -> vector<32x8xf32>
    %7 = arith.addf %3, %6 : vector<32x8xf32>
    %c0_6 = arith.constant 0 : index
    %c0_7 = arith.constant 0 : index
    %8 = vector.load %arg8[%c0_6, %c0_7] : memref<32x8xf32, #tpu.memory_space<vmem>>, vector<32x8xf32>
    tpu.vector_store %arg8[%c0_6, %c0_7], %7 {strides = array<i32>} : memref<32x8xf32, #tpu.memory_space<vmem>>, vector<32x8xf32>,
    %c0_i32_8 = arith.constant 0 : i32
    %9 = arith.cmpi eq, %arg1, %c0_i32_8 : i32
    %10 = arith.extui %9 : i1 to i32
    %c0_i32_9 = arith.constant 0 : i32
    %11 = arith.cmpi ne, %10, %c0_i32_9 : i32
    scf.if %11 {
      %c0_10 = arith.constant 0 : index
      %c0_11 = arith.constant 0 : index
      %12 = vector.load %arg8[%c0_10, %c0_11] : memref<32x8xf32, #tpu.memory_space<vmem>>, vector<32x8xf32>
      %c0_12 = arith.constant 0 : index
      %c0_13 = arith.constant 0 : index
      %13 = vector.load %arg4[%c0_12, %c0_13] : memref<1x8xf32, #tpu.memory_space<vmem>>, vector<1x8xf32>
      %14 = vector.broadcast %13 : vector<1x8xf32> to vector<32x8xf32>
      %15 = arith.addf %12, %14 : vector<32x8xf32>
      %cst_14 = arith.constant 0.000000e+00 : f32
      %16 = vector.broadcast %cst_14 : f32 to vector<32x8xf32>
      %17 = arith.maximumf %15, %16 : vector<32x8xf32>
      %18 = arith.truncf %17 : vector<32x8xf32> to vector<32x8xbf16>
      %c0_15 = arith.constant 0 : index
      %c0_16 = arith.constant 0 : index
      %19 = vector.load %arg5[%c0_15, %c0_16] : memref<8x4xbf16, #tpu.memory_space<vmem>>, vector<8x4xbf16>
      %cst_17 = arith.constant dense<0.000000e+00> : vector<32x4xf32>
      %20 = tpu.matmul %18, %19, %cst_17 {dimension_numbers = #tpu.dot_dimension_numbers<[1], [0], [0], [1], [0, 0, 1, 1], [], []>} : vector<32x8xbf16>, vector<8x4xbf16>, vector<32x4xf32> -> vector<32x4xf32>
      %c0_18 = arith.constant 0 : index
      %c0_19 = arith.constant 0 : index
      %21 = vector.load %arg6[%c0_18, %c0_19] : memref<1x4xf32, #tpu.memory_space<vmem>>, vector<1x4xf32>
      %22 = vector.broadcast %21 : vector<1x4xf32> to vector<32x4xf32>
      %23 = arith.addf %20, %22 : vector<32x4xf32>
      %c0_20 = arith.constant 0 : index
      %c0_21 = arith.constant 0 : index
      %24 = vector.load %arg7[%c0_20, %c0_21] : memref<32x4xf32, #tpu.memory_space<vmem>>, vector<32x4xf32>
      tpu.vector_store %arg7[%c0_20, %c0_21], %23 {strides = array<i32>} : memref<32x4xf32, #tpu.memory_space<vmem>>, vector<32x4xf32>,
    } else {
    }
    return
  }
  func.func @transform_0(%arg0: i32, %arg1: i32) -> (i32, i32) {
    %c0_i32 = arith.constant 0 : i32
    return %arg0, %arg1 : i32, i32
  }
  func.func @transform_1(%arg0: i32, %arg1: i32) -> (i32, i32) {
    %c0_i32 = arith.constant 0 : i32
    %c0_i32_0 = arith.constant 0 : i32
    return %arg1, %c0_i32 : i32, i32
  }
  func.func @transform_2(%arg0: i32, %arg1: i32) -> (i32, i32) {
    %c0_i32 = arith.constant 0 : i32
    %c0_i32_0 = arith.constant 0 : i32
    %c0_i32_1 = arith.constant 0 : i32
    return %c0_i32, %c0_i32_0 : i32, i32
  }
  func.func @transform_3(%arg0: i32, %arg1: i32) -> (i32, i32) {
    %c0_i32 = arith.constant 0 : i32
    %c0_i32_0 = arith.constant 0 : i32
    %c0_i32_1 = arith.constant 0 : i32
    return %c0_i32, %c0_i32_0 : i32, i32
  }
  func.func @transform_4(%arg0: i32, %arg1: i32) -> (i32, i32) {
    %c0_i32 = arith.constant 0 : i32
    %c0_i32_0 = arith.constant 0 : i32
    %c0_i32_1 = arith.constant 0 : i32
    return %c0_i32, %c0_i32_0 : i32, i32
  }
  func.func @transform_5(%arg0: i32, %arg1: i32) -> (i32, i32) {
    %c0_i32 = arith.constant 0 : i32
    %c0_i32_0 = arith.constant 0 : i32
    return %arg0, %c0_i32 : i32, i32
  }
}

module attributes {stable_mosaic.version = 11 : i64} {
  func.func @_head_fused_kernel(%arg0: i32, %arg1: i32, %arg2: memref<32x64xbf16, #tpu.memory_space<vmem>>, %arg3: memref<64x64xbf16, #tpu.memory_space<vmem>>, %arg4: memref<1x64xf32, #tpu.memory_space<vmem>>, %arg5: memref<64x8xbf16, #tpu.memory_space<vmem>>, %arg6: memref<1x8xf32, #tpu.memory_space<vmem>>, %arg7: memref<32x8xf32, #tpu.memory_space<vmem>>, %arg8: memref<32x64xf32, #tpu.memory_space<vmem>>) attributes {dimension_semantics = [#tpu.dimension_semantics<parallel>, #tpu.dimension_semantics<arbitrary>], iteration_bounds = array<i64: 1, 1>, scalar_prefetch = 0 : i64, scratch_operands = 1 : i64, tpu.core_type = #tpu.core_type<tc>, window_params = [{transform_indices = @transform_0, window_bounds = array<i64: 32, 64>}, {transform_indices = @transform_1, window_bounds = array<i64: 64, 64>}, {pipeline_mode = #tpu.pipeline_mode<synchronous>, transform_indices = @transform_2, window_bounds = array<i64: 1, 64>}, {pipeline_mode = #tpu.pipeline_mode<synchronous>, transform_indices = @transform_3, window_bounds = array<i64: 64, 8>}, {pipeline_mode = #tpu.pipeline_mode<synchronous>, transform_indices = @transform_4, window_bounds = array<i64: 1, 8>}, {transform_indices = @transform_5, window_bounds = array<i64: 32, 8>}]} {
    %c0_i32 = arith.constant 0 : i32
    %0 = arith.cmpi eq, %arg1, %c0_i32 : i32
    %1 = arith.extui %0 : i1 to i32
    %c0_i32_0 = arith.constant 0 : i32
    %2 = arith.cmpi ne, %1, %c0_i32_0 : i32
    scf.if %2 {
      %cst_10 = arith.constant 0.000000e+00 : f32
      %12 = vector.broadcast %cst_10 : f32 to vector<32x64xf32>
      %c0_11 = arith.constant 0 : index
      %c0_12 = arith.constant 0 : index
      %13 = vector.load %arg8[%c0_11, %c0_12] : memref<32x64xf32, #tpu.memory_space<vmem>>, vector<32x64xf32>
      tpu.vector_store %arg8[%c0_11, %c0_12], %12 {strides = array<i32>} : memref<32x64xf32, #tpu.memory_space<vmem>>, vector<32x64xf32>,
    } else {
    }
    %c0 = arith.constant 0 : index
    %c0_1 = arith.constant 0 : index
    %3 = vector.load %arg8[%c0, %c0_1] : memref<32x64xf32, #tpu.memory_space<vmem>>, vector<32x64xf32>
    %c0_2 = arith.constant 0 : index
    %c0_3 = arith.constant 0 : index
    %4 = vector.load %arg2[%c0_2, %c0_3] : memref<32x64xbf16, #tpu.memory_space<vmem>>, vector<32x64xbf16>
    %c0_4 = arith.constant 0 : index
    %c0_5 = arith.constant 0 : index
    %5 = vector.load %arg3[%c0_4, %c0_5] : memref<64x64xbf16, #tpu.memory_space<vmem>>, vector<64x64xbf16>
    %cst = arith.constant dense<0.000000e+00> : vector<32x64xf32>
    %6 = tpu.matmul %4, %5, %cst {dimension_numbers = #tpu.dot_dimension_numbers<[1], [0], [0], [1], [0, 0, 1, 1], [], []>} : vector<32x64xbf16>, vector<64x64xbf16>, vector<32x64xf32> -> vector<32x64xf32>
    %7 = arith.addf %3, %6 : vector<32x64xf32>
    %c0_6 = arith.constant 0 : index
    %c0_7 = arith.constant 0 : index
    %8 = vector.load %arg8[%c0_6, %c0_7] : memref<32x64xf32, #tpu.memory_space<vmem>>, vector<32x64xf32>
    tpu.vector_store %arg8[%c0_6, %c0_7], %7 {strides = array<i32>} : memref<32x64xf32, #tpu.memory_space<vmem>>, vector<32x64xf32>,
    %c0_i32_8 = arith.constant 0 : i32
    %9 = arith.cmpi eq, %arg1, %c0_i32_8 : i32
    %10 = arith.extui %9 : i1 to i32
    %c0_i32_9 = arith.constant 0 : i32
    %11 = arith.cmpi ne, %10, %c0_i32_9 : i32
    scf.if %11 {
      %c0_10 = arith.constant 0 : index
      %c0_11 = arith.constant 0 : index
      %12 = vector.load %arg8[%c0_10, %c0_11] : memref<32x64xf32, #tpu.memory_space<vmem>>, vector<32x64xf32>
      %c0_12 = arith.constant 0 : index
      %c0_13 = arith.constant 0 : index
      %13 = vector.load %arg4[%c0_12, %c0_13] : memref<1x64xf32, #tpu.memory_space<vmem>>, vector<1x64xf32>
      %14 = vector.broadcast %13 : vector<1x64xf32> to vector<32x64xf32>
      %15 = arith.addf %12, %14 : vector<32x64xf32>
      %cst_14 = arith.constant 0.000000e+00 : f32
      %16 = vector.broadcast %cst_14 : f32 to vector<32x64xf32>
      %17 = arith.maximumf %15, %16 : vector<32x64xf32>
      %18 = arith.truncf %17 : vector<32x64xf32> to vector<32x64xbf16>
      %c0_15 = arith.constant 0 : index
      %c0_16 = arith.constant 0 : index
      %19 = vector.load %arg5[%c0_15, %c0_16] : memref<64x8xbf16, #tpu.memory_space<vmem>>, vector<64x8xbf16>
      %cst_17 = arith.constant dense<0.000000e+00> : vector<32x8xf32>
      %20 = tpu.matmul %18, %19, %cst_17 {dimension_numbers = #tpu.dot_dimension_numbers<[1], [0], [0], [1], [0, 0, 1, 1], [], []>} : vector<32x64xbf16>, vector<64x8xbf16>, vector<32x8xf32> -> vector<32x8xf32>
      %c0_18 = arith.constant 0 : index
      %c0_19 = arith.constant 0 : index
      %21 = vector.load %arg6[%c0_18, %c0_19] : memref<1x8xf32, #tpu.memory_space<vmem>>, vector<1x8xf32>
      %22 = vector.broadcast %21 : vector<1x8xf32> to vector<32x8xf32>
      %23 = arith.addf %20, %22 : vector<32x8xf32>
      %24 = arith.mulf %23, %23 : vector<32x8xf32>
      %cst_20 = arith.constant dense<0.000000e+00> : vector<32xf32>
      %25 = vector.multi_reduction <add>, %24, %cst_20 [1] : vector<32x8xf32> to vector<32xf32>
      %26 = vector.shape_cast %25 : vector<32xf32> to vector<32x1xf32>
      %cst_21 = arith.constant 1.000000e-24 : f32
      %27 = vector.broadcast %cst_21 : f32 to vector<32x1xf32>
      %28 = arith.maximumf %26, %27 : vector<32x1xf32>
      %29 = math.rsqrt %28 : vector<32x1xf32>
      %30 = vector.broadcast %29 : vector<32x1xf32> to vector<32x8xf32>
      %31 = arith.mulf %23, %30 : vector<32x8xf32>
      %c0_22 = arith.constant 0 : index
      %c0_23 = arith.constant 0 : index
      %32 = vector.load %arg7[%c0_22, %c0_23] : memref<32x8xf32, #tpu.memory_space<vmem>>, vector<32x8xf32>
      tpu.vector_store %arg7[%c0_22, %c0_23], %31 {strides = array<i32>} : memref<32x8xf32, #tpu.memory_space<vmem>>, vector<32x8xf32>,
    } else {
    }
    return
  }
  func.func @transform_0(%arg0: i32, %arg1: i32) -> (i32, i32) {
    %c0_i32 = arith.constant 0 : i32
    return %arg0, %arg1 : i32, i32
  }
  func.func @transform_1(%arg0: i32, %arg1: i32) -> (i32, i32) {
    %c0_i32 = arith.constant 0 : i32
    %c0_i32_0 = arith.constant 0 : i32
    return %arg1, %c0_i32 : i32, i32
  }
  func.func @transform_2(%arg0: i32, %arg1: i32) -> (i32, i32) {
    %c0_i32 = arith.constant 0 : i32
    %c0_i32_0 = arith.constant 0 : i32
    %c0_i32_1 = arith.constant 0 : i32
    return %c0_i32, %c0_i32_0 : i32, i32
  }
  func.func @transform_3(%arg0: i32, %arg1: i32) -> (i32, i32) {
    %c0_i32 = arith.constant 0 : i32
    %c0_i32_0 = arith.constant 0 : i32
    %c0_i32_1 = arith.constant 0 : i32
    return %c0_i32, %c0_i32_0 : i32, i32
  }
  func.func @transform_4(%arg0: i32, %arg1: i32) -> (i32, i32) {
    %c0_i32 = arith.constant 0 : i32
    %c0_i32_0 = arith.constant 0 : i32
    %c0_i32_1 = arith.constant 0 : i32
    return %c0_i32, %c0_i32_0 : i32, i32
  }
  func.func @transform_5(%arg0: i32, %arg1: i32) -> (i32, i32) {
    %c0_i32 = arith.constant 0 : i32
    %c0_i32_0 = arith.constant 0 : i32
    return %arg0, %c0_i32 : i32, i32
  }
}

</mosaic_0001>

<llo_original>
// kernel: _lambda_.15
$region0: #{_lambda_.15}
  #allocation0 [shape = 'u32[]', space=smem, size = 0x4, offset = 0x4, fixed_abs, tag = 'smem constant byte address 0x4 - core index']
  #allocation1 [shape = 'u32[72,128]{1,0:T(1,128)}', space=vmem, size = 0x9000, scoped, tag = 'internal scratch']
  #allocation2 [shape = 'f32[128,8]{1,0:T(8,128)}', space=vmem, size = 0x10000, scoped, tag = 'scratch operand']
  %s0 = inlined_call_operand.vmem [shape: bf16[128,72], index: 0, kind: input, shape index: {}]
  %s1 = inlined_call_operand.vmem [shape: bf16[72,8], index: 1, kind: input, shape index: {}]
  %s2 = inlined_call_operand.vmem [shape: f32[1,8], index: 2, kind: input, shape index: {}]
  %s3 = inlined_call_operand.vmem [shape: bf16[128,8], index: 3, kind: output, shape index: {}]
  %s4 = sld [smem:[#allocation0]]
  $region30: #{_lambda_.15} parent=0
    _
  %s6 = ssub.s32 1, %s4
  %s7 = scalar_select 0, %s6, %s4
  // Predicated region
  $region2: #{_lambda_.15} parent=0 // pred_check
    _
  $region3: #{_lambda_.15} parent=0 // pred_check_branch
    %9 = sbr.rel (0) target = $region5
  $region4: #{_lambda_.15} parent=0 // pred_region
    _
  $region5: #{_lambda_.15} parent=0 // pred_fallthru
    _
  // Predicated region
  $region6: #{_lambda_.15} parent=0 // pred_check
    _
  $region7: #{_lambda_.15} parent=0 // pred_check_branch
    %11 = sbr.rel (0) target = $region9
  $region8: #{_lambda_.15} parent=0 // pred_region
    _
  $region9: #{_lambda_.15} parent=0 // pred_fallthru
    _
  // Predicated region
  $region10: #{_lambda_.15} parent=0 // pred_check
    _
  $region11: #{_lambda_.15} parent=0 // pred_check_branch
    %13 = sbr.rel (0) target = $region13
  $region12: #{_lambda_.15} parent=0 // pred_region
    _
  $region13: #{_lambda_.15} parent=0 // pred_fallthru
    _
  %p15 = scmp.eq.s32.totalorder 0, 0
  // Predicated region
  $region14: #{_lambda_.15} parent=0 // pred_check
    %p16 = pneg %p15
  $region15: #{_lambda_.15} parent=0 // pred_check_branch
    %18 = sbr.rel (%p16) target = $region17
  $region16: #{_lambda_.15} parent=0 // pred_region
    %vm19 = vcmask 64512
    %20 = vst.msk [vmem:[#allocation2] sm:$0xff] %vm19, 0.0
    %21 = vst.msk [vmem:[#allocation2 + $0x8] sm:$0xff] %vm19, 0.0
    %22 = vst.msk [vmem:[#allocation2 + $0x10] sm:$0xff] %vm19, 0.0
    %23 = vst.msk [vmem:[#allocation2 + $0x18] sm:$0xff] %vm19, 0.0
    %24 = vst.msk [vmem:[#allocation2 + $0x20] sm:$0xff] %vm19, 0.0
    %25 = vst.msk [vmem:[#allocation2 + $0x28] sm:$0xff] %vm19, 0.0
    %26 = vst.msk [vmem:[#allocation2 + $0x30] sm:$0xff] %vm19, 0.0
    %27 = vst.msk [vmem:[#allocation2 + $0x38] sm:$0xff] %vm19, 0.0
    %28 = vst.msk [vmem:[#allocation2 + $0x40] sm:$0xff] %vm19, 0.0
    %29 = vst.msk [vmem:[#allocation2 + $0x48] sm:$0xff] %vm19, 0.0
    %30 = vst.msk [vmem:[#allocation2 + $0x50] sm:$0xff] %vm19, 0.0
    %31 = vst.msk [vmem:[#allocation2 + $0x58] sm:$0xff] %vm19, 0.0
    %32 = vst.msk [vmem:[#allocation2 + $0x60] sm:$0xff] %vm19, 0.0
    %33 = vst.msk [vmem:[#allocation2 + $0x68] sm:$0xff] %vm19, 0.0
    %34 = vst.msk [vmem:[#allocation2 + $0x70] sm:$0xff] %vm19, 0.0
    %35 = vst.msk [vmem:[#allocation2 + $0x78] sm:$0xff] %vm19, 0.0
  $region17: #{_lambda_.15} parent=0 // pred_fallthru
    _
  %v36 = vld [vmem:[#allocation2] sm:$0xff]
  %v37 = vld [vmem:[#allocation2 + $0x8] sm:$0xff]
  %v38 = vld [vmem:[#allocation2 + $0x10] sm:$0xff]
  %v39 = vld [vmem:[#allocation2 + $0x18] sm:$0xff]
  %v40 = vld [vmem:[#allocation2 + $0x20] sm:$0xff]
  %v41 = vld [vmem:[#allocation2 + $0x28] sm:$0xff]
  %v42 = vld [vmem:[#allocation2 + $0x30] sm:$0xff]
  %v43 = vld [vmem:[#allocation2 + $0x38] sm:$0xff]
  %v44 = vld [vmem:[#allocation2 + $0x40] sm:$0xff]
  %v45 = vld [vmem:[#allocation2 + $0x48] sm:$0xff]
  %v46 = vld [vmem:[#allocation2 + $0x50] sm:$0xff]
  %v47 = vld [vmem:[#allocation2 + $0x58] sm:$0xff]
  %v48 = vld [vmem:[#allocation2 + $0x60] sm:$0xff]
  %v49 = vld [vmem:[#allocation2 + $0x68] sm:$0xff]
  %v50 = vld [vmem:[#allocation2 + $0x70] sm:$0xff]
  %v51 = vld [vmem:[#allocation2 + $0x78] sm:$0xff]
  %v52 = vld [vmem:[%s0] sm:$0xf]
  %v53 = vld [vmem:[%s0 + $0x4] sm:$0xf]
  %v54 = vld [vmem:[%s0 + $0x8] sm:$0xf]
  %v55 = vld [vmem:[%s0 + $0xc] sm:$0xf]
  %v56 = vld [vmem:[%s0 + $0x10] sm:$0xf]
  %v57 = vld [vmem:[%s0 + $0x14] sm:$0xf]
  %v58 = vld [vmem:[%s0 + $0x18] sm:$0xf]
  %v59 = vld [vmem:[%s0 + $0x1c] sm:$0xf]
  %v60 = vld [vmem:[%s0 + $0x20] sm:$0xf]
  %v61 = vld [vmem:[%s0 + $0x24] sm:$0xf]
  %v62 = vld [vmem:[%s0 + $0x28] sm:$0xf]
  %v63 = vld [vmem:[%s0 + $0x2c] sm:$0xf]
  %v64 = vld [vmem:[%s0 + $0x30] sm:$0xf]
  %v65 = vld [vmem:[%s0 + $0x34] sm:$0xf]
  %v66 = vld [vmem:[%s0 + $0x38] sm:$0xf]
  %v67 = vld [vmem:[%s0 + $0x3c] sm:$0xf]
  %v68 = vld [vmem:[%s1] sm:$0xf]
  %v69 = vld [vmem:[%s1 + $0x4] sm:$0xf]
  %v70 = vld [vmem:[%s1 + $0x8] sm:$0xf]
  %v71 = vld [vmem:[%s1 + $0xc] sm:$0xf]
  %v72 = vld [vmem:[%s1 + $0x10] sm:$0xf]
  %v73 = vld [vmem:[%s1 + $0x14] sm:$0xf]
  %v74 = vld [vmem:[%s1 + $0x18] sm:$0xf]
  %v75 = vld [vmem:[%s1 + $0x1c] sm:$0xf]
  %v76 = vld [vmem:[%s1 + $0x20] sm:$0xf]
  %v93 = vunpack.c.l.b16 %v52
  %v94 = vunpack.c.l.b16 %v53
  %v95 = vunpack.c.l.b16 %v54
  %v96 = vunpack.c.l.b16 %v55
  %v97 = vunpack.c.l.b16 %v56
  %v98 = vunpack.c.l.b16 %v57
  %v99 = vunpack.c.l.b16 %v58
  %v100 = vunpack.c.l.b16 %v59
  %v101 = vunpack.c.l.b16 %v60
  %v102 = vunpack.c.l.b16 %v61
  %v103 = vunpack.c.l.b16 %v62
  %v104 = vunpack.c.l.b16 %v63
  %v105 = vunpack.c.l.b16 %v64
  %v106 = vunpack.c.l.b16 %v65
  %v107 = vunpack.c.l.b16 %v66
  %v108 = vunpack.c.l.b16 %v67
  %v109 = vpack.c.b16 %v94, %v93
  %v110 = vpack.c.b16 %v96, %v95
  %v111 = vpack.c.b16 %v98, %v97
  %v112 = vpack.c.b16 %v100, %v99
  %v113 = vpack.c.b16 %v102, %v101
  %v114 = vpack.c.b16 %v104, %v103
  %v115 = vpack.c.b16 %v106, %v105
  %v116 = vpack.c.b16 %v108, %v107
  %v126 = vunpack.c.l.b16 %v68
  %v127 = vunpack.c.l.b16 %v69
  %v128 = vunpack.c.l.b16 %v70
  %v129 = vunpack.c.l.b16 %v71
  %v130 = vunpack.c.l.b16 %v72
  %v131 = vunpack.c.l.b16 %v73
  %v132 = vunpack.c.l.b16 %v74
  %v133 = vunpack.c.l.b16 %v75
  %v134 = vunpack.c.l.b16 %v76
  %v135 = vpack.c.b16 %v127, %v126
  %v136 = vpack.c.b16 %v129, %v128
  %v137 = vpack.c.b16 %v131, %v130
  %v138 = vpack.c.b16 %v133, %v132
  %v139 = vpack.c.b16 %v134, %v134
  %vm144 = vcmask 588800
  %v146 = vsel %vm144, %v109, 0
  %v149 = vsel %vm144, %v110, 0
  %v152 = vsel %vm144, %v111, 0
  %v155 = vsel %vm144, %v112, 0
  %v158 = vsel %vm144, %v113, 0
  %v161 = vsel %vm144, %v114, 0
  %v164 = vsel %vm144, %v115, 0
  %v167 = vsel %vm144, %v116, 0
  %vm169 = vcmask 1043456
  %v171 = vsel %vm169, %v139, 0
  %173 = vmatpush.bf16.msra.mxu0 0
  %174 = vmatpush.bf16.msra.mxu0 0
  %175 = vmatpush.bf16.msra.mxu0 0
  %176 = vmatpush.bf16.msra.mxu0 %v171
  %177 = vmatpush.bf16.msra.mxu0 %v138
  %178 = vmatpush.bf16.msra.mxu0 %v137
  %179 = vmatpush.bf16.msra.mxu0 %v136
  %180 = vmatpush.bf16.msra.mxu0 %v135
  %181 = vmatmul.bf16.gmra.mxu0 %v146
  %v182 = vpop.f32.mrf.mxu0
  %v183 = vadd.f32 0.0, %v182
  %v184 = vpop.f32.mrf.mxu0
  %v185 = vadd.f32 0.0, %v184
  %186 = vmatmul.bf16.gmra.mxu0 %v149
  %v187 = vpop.f32.mrf.mxu0
  %v188 = vadd.f32 0.0, %v187
  %v189 = vpop.f32.mrf.mxu0
  %v190 = vadd.f32 0.0, %v189
  %191 = vmatmul.bf16.gmra.mxu0 %v152
  %v192 = vpop.f32.mrf.mxu0
  %v193 = vadd.f32 0.0, %v192
  %v194 = vpop.f32.mrf.mxu0
  %v195 = vadd.f32 0.0, %v194
  %196 = vmatmul.bf16.gmra.mxu0 %v155
  %v197 = vpop.f32.mrf.mxu0
  %v198 = vadd.f32 0.0, %v197
  %v199 = vpop.f32.mrf.mxu0
  %v200 = vadd.f32 0.0, %v199
  %201 = vmatmul.bf16.gmra.mxu0 %v158
  %v202 = vpop.f32.mrf.mxu0
  %v203 = vadd.f32 0.0, %v202
  %v204 = vpop.f32.mrf.mxu0
  %v205 = vadd.f32 0.0, %v204
  %206 = vmatmul.bf16.gmra.mxu0 %v161
  %v207 = vpop.f32.mrf.mxu0
  %v208 = vadd.f32 0.0, %v207
  %v209 = vpop.f32.mrf.mxu0
  %v210 = vadd.f32 0.0, %v209
  %211 = vmatmul.bf16.gmra.mxu0 %v164
  %v212 = vpop.f32.mrf.mxu0
  %v213 = vadd.f32 0.0, %v212
  %v214 = vpop.f32.mrf.mxu0
  %v215 = vadd.f32 0.0, %v214
  %216 = vmatmul.bf16.gmra.mxu0 %v167
  %v217 = vpop.f32.mrf.mxu0
  %v218 = vadd.f32 0.0, %v217
  %v219 = vpop.f32.mrf.mxu0
  %v220 = vadd.f32 0.0, %v219
  %221 = vdwg.mxu0
  %v222 = vadd.f32 %v36, %v183
  %v223 = vadd.f32 %v37, %v185
  %v224 = vadd.f32 %v38, %v188
  %v225 = vadd.f32 %v39, %v190
  %v226 = vadd.f32 %v40, %v193
  %v227 = vadd.f32 %v41, %v195
  %v228 = vadd.f32 %v42, %v198
  %v229 = vadd.f32 %v43, %v200
  %v230 = vadd.f32 %v44, %v203
  %v231 = vadd.f32 %v45, %v205
  %v232 = vadd.f32 %v46, %v208
  %v233 = vadd.f32 %v47, %v210
  %v234 = vadd.f32 %v48, %v213
  %v235 = vadd.f32 %v49, %v215
  %v236 = vadd.f32 %v50, %v218
  %v237 = vadd.f32 %v51, %v220
  %vm238 = vcmask 64512
  %239 = vst.msk [vmem:[#allocation2] sm:$0xff] %vm238, %v222
  %240 = vst.msk [vmem:[#allocation2 + $0x8] sm:$0xff] %vm238, %v223
  %241 = vst.msk [vmem:[#allocation2 + $0x10] sm:$0xff] %vm238, %v224
  %242 = vst.msk [vmem:[#allocation2 + $0x18] sm:$0xff] %vm238, %v225
  %243 = vst.msk [vmem:[#allocation2 + $0x20] sm:$0xff] %vm238, %v226
  %244 = vst.msk [vmem:[#allocation2 + $0x28] sm:$0xff] %vm238, %v227
  %245 = vst.msk [vmem:[#allocation2 + $0x30] sm:$0xff] %vm238, %v228
  %246 = vst.msk [vmem:[#allocation2 + $0x38] sm:$0xff] %vm238, %v229
  %247 = vst.msk [vmem:[#allocation2 + $0x40] sm:$0xff] %vm238, %v230
  %248 = vst.msk [vmem:[#allocation2 + $0x48] sm:$0xff] %vm238, %v231
  %249 = vst.msk [vmem:[#allocation2 + $0x50] sm:$0xff] %vm238, %v232
  %250 = vst.msk [vmem:[#allocation2 + $0x58] sm:$0xff] %vm238, %v233
  %251 = vst.msk [vmem:[#allocation2 + $0x60] sm:$0xff] %vm238, %v234
  %252 = vst.msk [vmem:[#allocation2 + $0x68] sm:$0xff] %vm238, %v235
  %253 = vst.msk [vmem:[#allocation2 + $0x70] sm:$0xff] %vm238, %v236
  %254 = vst.msk [vmem:[#allocation2 + $0x78] sm:$0xff] %vm238, %v237
  // Predicated region
  $region18: #{_lambda_.15} parent=0 // pred_check
    %p255 = pneg %p15
  $region19: #{_lambda_.15} parent=0 // pred_check_branch
    %257 = sbr.rel (%p255) target = $region21
  $region20: #{_lambda_.15} parent=0 // pred_region
    %v258 = vld [vmem:[#allocation2] sm:$0xff]
    %v259 = vld [vmem:[#allocation2 + $0x8] sm:$0xff]
    %v260 = vld [vmem:[#allocation2 + $0x10] sm:$0xff]
    %v261 = vld [vmem:[#allocation2 + $0x18] sm:$0xff]
    %v262 = vld [vmem:[#allocation2 + $0x20] sm:$0xff]
    %v263 = vld [vmem:[#allocation2 + $0x28] sm:$0xff]
    %v264 = vld [vmem:[#allocation2 + $0x30] sm:$0xff]
    %v265 = vld [vmem:[#allocation2 + $0x38] sm:$0xff]
    %v266 = vld [vmem:[#allocation2 + $0x40] sm:$0xff]
    %v267 = vld [vmem:[#allocation2 + $0x48] sm:$0xff]
    %v268 = vld [vmem:[#allocation2 + $0x50] sm:$0xff]
    %v269 = vld [vmem:[#allocation2 + $0x58] sm:$0xff]
    %v270 = vld [vmem:[#allocation2 + $0x60] sm:$0xff]
    %v271 = vld [vmem:[#allocation2 + $0x68] sm:$0xff]
    %v272 = vld [vmem:[#allocation2 + $0x70] sm:$0xff]
    %v273 = vld [vmem:[#allocation2 + $0x78] sm:$0xff]
    %v274 = vld [vmem:[%s2] sm:$0x1]
    %v276 = vperm.slane %v274, 0
    %v278 = vadd.f32 %v258, %v276
    %v279 = vadd.f32 %v259, %v276
    %v280 = vadd.f32 %v260, %v276
    %v281 = vadd.f32 %v261, %v276
    %v282 = vadd.f32 %v262, %v276
    %v283 = vadd.f32 %v263, %v276
    %v284 = vadd.f32 %v264, %v276
    %v285 = vadd.f32 %v265, %v276
    %v286 = vadd.f32 %v266, %v276
    %v287 = vadd.f32 %v267, %v276
    %v288 = vadd.f32 %v268, %v276
    %v289 = vadd.f32 %v269, %v276
    %v290 = vadd.f32 %v270, %v276
    %v291 = vadd.f32 %v271, %v276
    %v292 = vadd.f32 %v272, %v276
    %v293 = vadd.f32 %v273, %v276
    %v294 = vmax.f32 %v278, 0.0
    %v295 = vmax.f32 %v279, 0.0
    %v296 = vmax.f32 %v280, 0.0
    %v297 = vmax.f32 %v281, 0.0
    %v298 = vmax.f32 %v282, 0.0
    %v299 = vmax.f32 %v283, 0.0
    %v300 = vmax.f32 %v284, 0.0
    %v301 = vmax.f32 %v285, 0.0
    %v302 = vmax.f32 %v286, 0.0
    %v303 = vmax.f32 %v287, 0.0
    %v304 = vmax.f32 %v288, 0.0
    %v305 = vmax.f32 %v289, 0.0
    %v306 = vmax.f32 %v290, 0.0
    %v307 = vmax.f32 %v291, 0.0
    %v308 = vmax.f32 %v292, 0.0
    %v309 = vmax.f32 %v293, 0.0
    %v310 = vpack.c.bf16 %v294, %v294
    %v311 = vpack.c.bf16 %v295, %v295
    %v312 = vpack.c.bf16 %v296, %v296
    %v313 = vpack.c.bf16 %v297, %v297
    %v314 = vpack.c.bf16 %v298, %v298
    %v315 = vpack.c.bf16 %v299, %v299
    %v316 = vpack.c.bf16 %v300, %v300
    %v317 = vpack.c.bf16 %v301, %v301
    %v318 = vpack.c.bf16 %v302, %v302
    %v319 = vpack.c.bf16 %v303, %v303
    %v320 = vpack.c.bf16 %v304, %v304
    %v321 = vpack.c.bf16 %v305, %v305
    %v322 = vpack.c.bf16 %v306, %v306
    %v323 = vpack.c.bf16 %v307, %v307
    %v324 = vpack.c.bf16 %v308, %v308
    %v325 = vpack.c.bf16 %v309, %v309
    %vm326 = vcmask 60416
    %327 = vst.msk [vmem:[%s3] sm:$0xf] %vm326, %v310
    %328 = vst.msk [vmem:[%s3 + $0x4] sm:$0xf] %vm326, %v311
    %329 = vst.msk [vmem:[%s3 + $0x8] sm:$0xf] %vm326, %v312
    %330 = vst.msk [vmem:[%s3 + $0xc] sm:$0xf] %vm326, %v313
    %331 = vst.msk [vmem:[%s3 + $0x10] sm:$0xf] %vm326, %v314
    %332 = vst.msk [vmem:[%s3 + $0x14] sm:$0xf] %vm326, %v315
    %333 = vst.msk [vmem:[%s3 + $0x18] sm:$0xf] %vm326, %v316
    %334 = vst.msk [vmem:[%s3 + $0x1c] sm:$0xf] %vm326, %v317
    %335 = vst.msk [vmem:[%s3 + $0x20] sm:$0xf] %vm326, %v318
    %336 = vst.msk [vmem:[%s3 + $0x24] sm:$0xf] %vm326, %v319
    %337 = vst.msk [vmem:[%s3 + $0x28] sm:$0xf] %vm326, %v320
    %338 = vst.msk [vmem:[%s3 + $0x2c] sm:$0xf] %vm326, %v321
    %339 = vst.msk [vmem:[%s3 + $0x30] sm:$0xf] %vm326, %v322
    %340 = vst.msk [vmem:[%s3 + $0x34] sm:$0xf] %vm326, %v323
    %341 = vst.msk [vmem:[%s3 + $0x38] sm:$0xf] %vm326, %v324
    %342 = vst.msk [vmem:[%s3 + $0x3c] sm:$0xf] %vm326, %v325
  $region21: #{_lambda_.15} parent=0 // pred_fallthru
    _
  // Predicated region
  $region22: #{_lambda_.15} parent=0 // pred_check
    _
  $region23: #{_lambda_.15} parent=0 // pred_check_branch
    %344 = sbr.rel (0) target = $region25
  $region24: #{_lambda_.15} parent=0 // pred_region
    _
  $region25: #{_lambda_.15} parent=0 // pred_fallthru
    _
  // Predicated region
  $region26: #{_lambda_.15} parent=0 // pred_check
    _
  $region27: #{_lambda_.15} parent=0 // pred_check_branch
    %346 = sbr.rel (0) target = $region29
  $region28: #{_lambda_.15} parent=0 // pred_region
    _
  $region29: #{_lambda_.15} parent=0 // pred_fallthru
    _

// kernel: _lambda_.14
$region0: #{_lambda_.14}
  #allocation0 [shape = 'u32[]', space=smem, size = 0x4, offset = 0x4, fixed_abs, tag = 'smem constant byte address 0x4 - core index']
  #allocation1 [shape = 'u32[72,128]{1,0:T(1,128)}', space=vmem, size = 0x9000, scoped, tag = 'internal scratch']
  #allocation2 [shape = 'f32[512,8]{1,0:T(8,128)}', space=vmem, size = 0x40000, scoped, tag = 'scratch operand']
  %s0 = inlined_call_operand.vmem [shape: bf16[512,27], index: 0, kind: input, shape index: {}]
  %s1 = inlined_call_operand.vmem [shape: bf16[27,8], index: 1, kind: input, shape index: {}]
  %s2 = inlined_call_operand.vmem [shape: f32[1,8], index: 2, kind: input, shape index: {}]
  %s3 = inlined_call_operand.vmem [shape: bf16[512,8], index: 3, kind: output, shape index: {}]
  %s4 = sld [smem:[#allocation0]]
  $region30: #{_lambda_.14} parent=0
    _
  %s6 = ssub.s32 1, %s4
  %s7 = scalar_select 0, %s6, %s4
  // Predicated region
  $region2: #{_lambda_.14} parent=0 // pred_check
    _
  $region3: #{_lambda_.14} parent=0 // pred_check_branch
    %9 = sbr.rel (0) target = $region5
  $region4: #{_lambda_.14} parent=0 // pred_region
    _
  $region5: #{_lambda_.14} parent=0 // pred_fallthru
    _
  // Predicated region
  $region6: #{_lambda_.14} parent=0 // pred_check
    _
  $region7: #{_lambda_.14} parent=0 // pred_check_branch
    %11 = sbr.rel (0) target = $region9
  $region8: #{_lambda_.14} parent=0 // pred_region
    _
  $region9: #{_lambda_.14} parent=0 // pred_fallthru
    _
  // Predicated region
  $region10: #{_lambda_.14} parent=0 // pred_check
    _
  $region11: #{_lambda_.14} parent=0 // pred_check_branch
    %13 = sbr.rel (0) target = $region13
  $region12: #{_lambda_.14} parent=0 // pred_region
    _
  $region13: #{_lambda_.14} parent=0 // pred_fallthru
    _
  %p15 = scmp.eq.s32.totalorder 0, 0
  // Predicated region
  $region14: #{_lambda_.14} parent=0 // pred_check
    %p16 = pneg %p15
  $region15: #{_lambda_.14} parent=0 // pred_check_branch
    %18 = sbr.rel (%p16) target = $region17
  $region16: #{_lambda_.14} parent=0 // pred_region
    %vm19 = vcmask 64512
    %20 = vst.msk [vmem:[#allocation2] sm:$0xff] %vm19, 0.0
    %21 = vst.msk [vmem:[#allocation2 + $0x8] sm:$0xff] %vm19, 0.0
    %22 = vst.msk [vmem:[#allocation2 + $0x10] sm:$0xff] %vm19, 0.0
    %23 = vst.msk [vmem:[#allocation2 + $0x18] sm:$0xff] %vm19, 0.0
    %24 = vst.msk [vmem:[#allocation2 + $0x20] sm:$0xff] %vm19, 0.0
    %25 = vst.msk [vmem:[#allocation2 + $0x28] sm:$0xff] %vm19, 0.0
    %26 = vst.msk [vmem:[#allocation2 + $0x30] sm:$0xff] %vm19, 0.0
    %27 = vst.msk [vmem:[#allocation2 + $0x38] sm:$0xff] %vm19, 0.0
    %28 = vst.msk [vmem:[#allocation2 + $0x40] sm:$0xff] %vm19, 0.0
    %29 = vst.msk [vmem:[#allocation2 + $0x48] sm:$0xff] %vm19, 0.0
    %30 = vst.msk [vmem:[#allocation2 + $0x50] sm:$0xff] %vm19, 0.0
    %31 = vst.msk [vmem:[#allocation2 + $0x58] sm:$0xff] %vm19, 0.0
    %32 = vst.msk [vmem:[#allocation2 + $0x60] sm:$0xff] %vm19, 0.0
    %33 = vst.msk [vmem:[#allocation2 + $0x68] sm:$0xff] %vm19, 0.0
    %34 = vst.msk [vmem:[#allocation2 + $0x70] sm:$0xff] %vm19, 0.0
    %35 = vst.msk [vmem:[#allocation2 + $0x78] sm:$0xff] %vm19, 0.0
    %36 = vst.msk [vmem:[#allocation2 + $0x80] sm:$0xff] %vm19, 0.0
    %37 = vst.msk [vmem:[#allocation2 + $0x88] sm:$0xff] %vm19, 0.0
    %38 = vst.msk [vmem:[#allocation2 + $0x90] sm:$0xff] %vm19, 0.0
    %39 = vst.msk [vmem:[#allocation2 + $0x98] sm:$0xff] %vm19, 0.0
    %40 = vst.msk [vmem:[#allocation2 + $0xa0] sm:$0xff] %vm19, 0.0
    %41 = vst.msk [vmem:[#allocation2 + $0xa8] sm:$0xff] %vm19, 0.0
    %42 = vst.msk [vmem:[#allocation2 + $0xb0] sm:$0xff] %vm19, 0.0
    %43 = vst.msk [vmem:[#allocation2 + $0xb8] sm:$0xff] %vm19, 0.0
    %44 = vst.msk [vmem:[#allocation2 + $0xc0] sm:$0xff] %vm19, 0.0
    %45 = vst.msk [vmem:[#allocation2 + $0xc8] sm:$0xff] %vm19, 0.0
    %46 = vst.msk [vmem:[#allocation2 + $0xd0] sm:$0xff] %vm19, 0.0
    %47 = vst.msk [vmem:[#allocation2 + $0xd8] sm:$0xff] %vm19, 0.0
    %48 = vst.msk [vmem:[#allocation2 + $0xe0] sm:$0xff] %vm19, 0.0
    %49 = vst.msk [vmem:[#allocation2 + $0xe8] sm:$0xff] %vm19, 0.0
    %50 = vst.msk [vmem:[#allocation2 + $0xf0] sm:$0xff] %vm19, 0.0
    %51 = vst.msk [vmem:[#allocation2 + $0xf8] sm:$0xff] %vm19, 0.0
    %52 = vst.msk [vmem:[#allocation2 + $0x100] sm:$0xff] %vm19, 0.0
    %53 = vst.msk [vmem:[#allocation2 + $0x108] sm:$0xff] %vm19, 0.0
    %54 = vst.msk [vmem:[#allocation2 + $0x110] sm:$0xff] %vm19, 0.0
    %55 = vst.msk [vmem:[#allocation2 + $0x118] sm:$0xff] %vm19, 0.0
    %56 = vst.msk [vmem:[#allocation2 + $0x120] sm:$0xff] %vm19, 0.0
    %57 = vst.msk [vmem:[#allocation2 + $0x128] sm:$0xff] %vm19, 0.0
    %58 = vst.msk [vmem:[#allocation2 + $0x130] sm:$0xff] %vm19, 0.0
    %59 = vst.msk [vmem:[#allocation2 + $0x138] sm:$0xff] %vm19, 0.0
    %60 = vst.msk [vmem:[#allocation2 + $0x140] sm:$0xff] %vm19, 0.0
    %61 = vst.msk [vmem:[#allocation2 + $0x148] sm:$0xff] %vm19, 0.0
    %62 = vst.msk [vmem:[#allocation2 + $0x150] sm:$0xff] %vm19, 0.0
    %63 = vst.msk [vmem:[#allocation2 + $0x158] sm:$0xff] %vm19, 0.0
    %64 = vst.msk [vmem:[#allocation2 + $0x160] sm:$0xff] %vm19, 0.0
    %65 = vst.msk [vmem:[#allocation2 + $0x168] sm:$0xff] %vm19, 0.0
    %66 = vst.msk [vmem:[#allocation2 + $0x170] sm:$0xff] %vm19, 0.0
    %67 = vst.msk [vmem:[#allocation2 + $0x178] sm:$0xff] %vm19, 0.0
    %68 = vst.msk [vmem:[#allocation2 + $0x180] sm:$0xff] %vm19, 0.0
    %69 = vst.msk [vmem:[#allocation2 + $0x188] sm:$0xff] %vm19, 0.0
    %70 = vst.msk [vmem:[#allocation2 + $0x190] sm:$0xff] %vm19, 0.0
    %71 = vst.msk [vmem:[#allocation2 + $0x198] sm:$0xff] %vm19, 0.0
    %72 = vst.msk [vmem:[#allocation2 + $0x1a0] sm:$0xff] %vm19, 0.0
    %73 = vst.msk [vmem:[#allocation2 + $0x1a8] sm:$0xff] %vm19, 0.0
    %74 = vst.msk [vmem:[#allocation2 + $0x1b0] sm:$0xff] %vm19, 0.0
    %75 = vst.msk [vmem:[#allocation2 + $0x1b8] sm:$0xff] %vm19, 0.0
    %76 = vst.msk [vmem:[#allocation2 + $0x1c0] sm:$0xff] %vm19, 0.0
    %77 = vst.msk [vmem:[#allocation2 + $0x1c8] sm:$0xff] %vm19, 0.0
    %78 = vst.msk [vmem:[#allocation2 + $0x1d0] sm:$0xff] %vm19, 0.0
    %79 = vst.msk [vmem:[#allocation2 + $0x1d8] sm:$0xff] %vm19, 0.0
    %80 = vst.msk [vmem:[#allocation2 + $0x1e0] sm:$0xff] %vm19, 0.0
    %81 = vst.msk [vmem:[#allocation2 + $0x1e8] sm:$0xff] %vm19, 0.0
    %82 = vst.msk [vmem:[#allocation2 + $0x1f0] sm:$0xff] %vm19, 0.0
    %83 = vst.msk [vmem:[#allocation2 + $0x1f8] sm:$0xff] %vm19, 0.0
  $region17: #{_lambda_.14} parent=0 // pred_fallthru
    _
  %v84 = vld [vmem:[#allocation2] sm:$0xff]
  %v85 = vld [vmem:[#allocation2 + $0x8] sm:$0xff]
  %v86 = vld [vmem:[#allocation2 + $0x10] sm:$0xff]
  %v87 = vld [vmem:[#allocation2 + $0x18] sm:$0xff]
  %v88 = vld [vmem:[#allocation2 + $0x20] sm:$0xff]
  %v89 = vld [vmem:[#allocation2 + $0x28] sm:$0xff]
  %v90 = vld [vmem:[#allocation2 + $0x30] sm:$0xff]
  %v91 = vld [vmem:[#allocation2 + $0x38] sm:$0xff]
  %v92 = vld [vmem:[#allocation2 + $0x40] sm:$0xff]
  %v93 = vld [vmem:[#allocation2 + $0x48] sm:$0xff]
  %v94 = vld [vmem:[#allocation2 + $0x50] sm:$0xff]
  %v95 = vld [vmem:[#allocation2 + $0x58] sm:$0xff]
  %v96 = vld [vmem:[#allocation2 + $0x60] sm:$0xff]
  %v97 = vld [vmem:[#allocation2 + $0x68] sm:$0xff]
  %v98 = vld [vmem:[#allocation2 + $0x70] sm:$0xff]
  %v99 = vld [vmem:[#allocation2 + $0x78] sm:$0xff]
  %v100 = vld [vmem:[#allocation2 + $0x80] sm:$0xff]
  %v101 = vld [vmem:[#allocation2 + $0x88] sm:$0xff]
  %v102 = vld [vmem:[#allocation2 + $0x90] sm:$0xff]
  %v103 = vld [vmem:[#allocation2 + $0x98] sm:$0xff]
  %v104 = vld [vmem:[#allocation2 + $0xa0] sm:$0xff]
  %v105 = vld [vmem:[#allocation2 + $0xa8] sm:$0xff]
  %v106 = vld [vmem:[#allocation2 + $0xb0] sm:$0xff]
  %v107 = vld [vmem:[#allocation2 + $0xb8] sm:$0xff]
  %v108 = vld [vmem:[#allocation2 + $0xc0] sm:$0xff]
  %v109 = vld [vmem:[#allocation2 + $0xc8] sm:$0xff]
  %v110 = vld [vmem:[#allocation2 + $0xd0] sm:$0xff]
  %v111 = vld [vmem:[#allocation2 + $0xd8] sm:$0xff]
  %v112 = vld [vmem:[#allocation2 + $0xe0] sm:$0xff]
  %v113 = vld [vmem:[#allocation2 + $0xe8] sm:$0xff]
  %v114 = vld [vmem:[#allocation2 + $0xf0] sm:$0xff]
  %v115 = vld [vmem:[#allocation2 + $0xf8] sm:$0xff]
  %v116 = vld [vmem:[#allocation2 + $0x100] sm:$0xff]
  %v117 = vld [vmem:[#allocation2 + $0x108] sm:$0xff]
  %v118 = vld [vmem:[#allocation2 + $0x110] sm:$0xff]
  %v119 = vld [vmem:[#allocation2 + $0x118] sm:$0xff]
  %v120 = vld [vmem:[#allocation2 + $0x120] sm:$0xff]
  %v121 = vld [vmem:[#allocation2 + $0x128] sm:$0xff]
  %v122 = vld [vmem:[#allocation2 + $0x130] sm:$0xff]
  %v123 = vld [vmem:[#allocation2 + $0x138] sm:$0xff]
  %v124 = vld [vmem:[#allocation2 + $0x140] sm:$0xff]
  %v125 = vld [vmem:[#allocation2 + $0x148] sm:$0xff]
  %v126 = vld [vmem:[#allocation2 + $0x150] sm:$0xff]
  %v127 = vld [vmem:[#allocation2 + $0x158] sm:$0xff]
  %v128 = vld [vmem:[#allocation2 + $0x160] sm:$0xff]
  %v129 = vld [vmem:[#allocation2 + $0x168] sm:$0xff]
  %v130 = vld [vmem:[#allocation2 + $0x170] sm:$0xff]
  %v131 = vld [vmem:[#allocation2 + $0x178] sm:$0xff]
  %v132 = vld [vmem:[#allocation2 + $0x180] sm:$0xff]
  %v133 = vld [vmem:[#allocation2 + $0x188] sm:$0xff]
  %v134 = vld [vmem:[#allocation2 + $0x190] sm:$0xff]
  %v135 = vld [vmem:[#allocation2 + $0x198] sm:$0xff]
  %v136 = vld [vmem:[#allocation2 + $0x1a0] sm:$0xff]
  %v137 = vld [vmem:[#allocation2 + $0x1a8] sm:$0xff]
  %v138 = vld [vmem:[#allocation2 + $0x1b0] sm:$0xff]
  %v139 = vld [vmem:[#allocation2 + $0x1b8] sm:$0xff]
  %v140 = vld [vmem:[#allocation2 + $0x1c0] sm:$0xff]
  %v141 = vld [vmem:[#allocation2 + $0x1c8] sm:$0xff]
  %v142 = vld [vmem:[#allocation2 + $0x1d0] sm:$0xff]
  %v143 = vld [vmem:[#allocation2 + $0x1d8] sm:$0xff]
  %v144 = vld [vmem:[#allocation2 + $0x1e0] sm:$0xff]
  %v145 = vld [vmem:[#allocation2 + $0x1e8] sm:$0xff]
  %v146 = vld [vmem:[#allocation2 + $0x1f0] sm:$0xff]
  %v147 = vld [vmem:[#allocation2 + $0x1f8] sm:$0xff]
  %v148 = vld [vmem:[%s0] sm:$0xf]
  %v149 = vld [vmem:[%s0 + $0x4] sm:$0xf]
  %v150 = vld [vmem:[%s0 + $0x8] sm:$0xf]
  %v151 = vld [vmem:[%s0 + $0xc] sm:$0xf]
  %v152 = vld [vmem:[%s0 + $0x10] sm:$0xf]
  %v153 = vld [vmem:[%s0 + $0x14] sm:$0xf]
  %v154 = vld [vmem:[%s0 + $0x18] sm:$0xf]
  %v155 = vld [vmem:[%s0 + $0x1c] sm:$0xf]
  %v156 = vld [vmem:[%s0 + $0x20] sm:$0xf]
  %v157 = vld [vmem:[%s0 + $0x24] sm:$0xf]
  %v158 = vld [vmem:[%s0 + $0x28] sm:$0xf]
  %v159 = vld [vmem:[%s0 + $0x2c] sm:$0xf]
  %v160 = vld [vmem:[%s0 + $0x30] sm:$0xf]
  %v161 = vld [vmem:[%s0 + $0x34] sm:$0xf]
  %v162 = vld [vmem:[%s0 + $0x38] sm:$0xf]
  %v163 = vld [vmem:[%s0 + $0x3c] sm:$0xf]
  %v164 = vld [vmem:[%s0 + $0x40] sm:$0xf]
  %v165 = vld [vmem:[%s0 + $0x44] sm:$0xf]
  %v166 = vld [vmem:[%s0 + $0x48] sm:$0xf]
  %v167 = vld [vmem:[%s0 + $0x4c] sm:$0xf]
  %v168 = vld [vmem:[%s0 + $0x50] sm:$0xf]
  %v169 = vld [vmem:[%s0 + $0x54] sm:$0xf]
  %v170 = vld [vmem:[%s0 + $0x58] sm:$0xf]
  %v171 = vld [vmem:[%s0 + $0x5c] sm:$0xf]
  %v172 = vld [vmem:[%s0 + $0x60] sm:$0xf]
  %v173 = vld [vmem:[%s0 + $0x64] sm:$0xf]
  %v174 = vld [vmem:[%s0 + $0x68] sm:$0xf]
  %v175 = vld [vmem:[%s0 + $0x6c] sm:$0xf]
  %v176 = vld [vmem:[%s0 + $0x70] sm:$0xf]
  %v177 = vld [vmem:[%s0 + $0x74] sm:$0xf]
  %v178 = vld [vmem:[%s0 + $0x78] sm:$0xf]
  %v179 = vld [vmem:[%s0 + $0x7c] sm:$0xf]
  %v180 = vld [vmem:[%s0 + $0x80] sm:$0xf]
  %v181 = vld [vmem:[%s0 + $0x84] sm:$0xf]
  %v182 = vld [vmem:[%s0 + $0x88] sm:$0xf]
  %v183 = vld [vmem:[%s0 + $0x8c] sm:$0xf]
  %v184 = vld [vmem:[%s0 + $0x90] sm:$0xf]
  %v185 = vld [vmem:[%s0 + $0x94] sm:$0xf]
  %v186 = vld [vmem:[%s0 + $0x98] sm:$0xf]
  %v187 = vld [vmem:[%s0 + $0x9c] sm:$0xf]
  %v188 = vld [vmem:[%s0 + $0xa0] sm:$0xf]
  %v189 = vld [vmem:[%s0 + $0xa4] sm:$0xf]
  %v190 = vld [vmem:[%s0 + $0xa8] sm:$0xf]
  %v191 = vld [vmem:[%s0 + $0xac] sm:$0xf]
  %v192 = vld [vmem:[%s0 + $0xb0] sm:$0xf]
  %v193 = vld [vmem:[%s0 + $0xb4] sm:$0xf]
  %v194 = vld [vmem:[%s0 + $0xb8] sm:$0xf]
  %v195 = vld [vmem:[%s0 + $0xbc] sm:$0xf]
  %v196 = vld [vmem:[%s0 + $0xc0] sm:$0xf]
  %v197 = vld [vmem:[%s0 + $0xc4] sm:$0xf]
  %v198 = vld [vmem:[%s0 + $0xc8] sm:$0xf]
  %v199 = vld [vmem:[%s0 + $0xcc] sm:$0xf]
  %v200 = vld [vmem:[%s0 + $0xd0] sm:$0xf]
  %v201 = vld [vmem:[%s0 + $0xd4] sm:$0xf]
  %v202 = vld [vmem:[%s0 + $0xd8] sm:$0xf]
  %v203 = vld [vmem:[%s0 + $0xdc] sm:$0xf]
  %v204 = vld [vmem:[%s0 + $0xe0] sm:$0xf]
  %v205 = vld [vmem:[%s0 + $0xe4] sm:$0xf]
  %v206 = vld [vmem:[%s0 + $0xe8] sm:$0xf]
  %v207 = vld [vmem:[%s0 + $0xec] sm:$0xf]
  %v208 = vld [vmem:[%s0 + $0xf0] sm:$0xf]
  %v209 = vld [vmem:[%s0 + $0xf4] sm:$0xf]
  %v210 = vld [vmem:[%s0 + $0xf8] sm:$0xf]
  %v211 = vld [vmem:[%s0 + $0xfc] sm:$0xf]
  %v212 = vld [vmem:[%s1] sm:$0xf]
  %v213 = vld [vmem:[%s1 + $0x4] sm:$0xf]
  %v214 = vld [vmem:[%s1 + $0x8] sm:$0xf]
  %v215 = vld [vmem:[%s1 + $0xc] sm:$0x3]
  %v280 = vunpack.c.l.b16 %v148
  %v281 = vunpack.c.l.b16 %v149
  %v282 = vunpack.c.l.b16 %v150
  %v283 = vunpack.c.l.b16 %v151
  %v284 = vunpack.c.l.b16 %v152
  %v285 = vunpack.c.l.b16 %v153
  %v286 = vunpack.c.l.b16 %v154
  %v287 = vunpack.c.l.b16 %v155
  %v288 = vunpack.c.l.b16 %v156
  %v289 = vunpack.c.l.b16 %v157
  %v290 = vunpack.c.l.b16 %v158
  %v291 = vunpack.c.l.b16 %v159
  %v292 = vunpack.c.l.b16 %v160
  %v293 = vunpack.c.l.b16 %v161
  %v294 = vunpack.c.l.b16 %v162
  %v295 = vunpack.c.l.b16 %v163
  %v296 = vunpack.c.l.b16 %v164
  %v297 = vunpack.c.l.b16 %v165
  %v298 = vunpack.c.l.b16 %v166
  %v299 = vunpack.c.l.b16 %v167
  %v300 = vunpack.c.l.b16 %v168
  %v301 = vunpack.c.l.b16 %v169
  %v302 = vunpack.c.l.b16 %v170
  %v303 = vunpack.c.l.b16 %v171
  %v304 = vunpack.c.l.b16 %v172
  %v305 = vunpack.c.l.b16 %v173
  %v306 = vunpack.c.l.b16 %v174
  %v307 = vunpack.c.l.b16 %v175
  %v308 = vunpack.c.l.b16 %v176
  %v309 = vunpack.c.l.b16 %v177
  %v310 = vunpack.c.l.b16 %v178
  %v311 = vunpack.c.l.b16 %v179
  %v312 = vunpack.c.l.b16 %v180
  %v313 = vunpack.c.l.b16 %v181
  %v314 = vunpack.c.l.b16 %v182
  %v315 = vunpack.c.l.b16 %v183
  %v316 = vunpack.c.l.b16 %v184
  %v317 = vunpack.c.l.b16 %v185
  %v318 = vunpack.c.l.b16 %v186
  %v319 = vunpack.c.l.b16 %v187
  %v320 = vunpack.c.l.b16 %v188
  %v321 = vunpack.c.l.b16 %v189
  %v322 = vunpack.c.l.b16 %v190
  %v323 = vunpack.c.l.b16 %v191
  %v324 = vunpack.c.l.b16 %v192
  %v325 = vunpack.c.l.b16 %v193
  %v326 = vunpack.c.l.b16 %v194
  %v327 = vunpack.c.l.b16 %v195
  %v328 = vunpack.c.l.b16 %v196
  %v329 = vunpack.c.l.b16 %v197
  %v330 = vunpack.c.l.b16 %v198
  %v331 = vunpack.c.l.b16 %v199
  %v332 = vunpack.c.l.b16 %v200
  %v333 = vunpack.c.l.b16 %v201
  %v334 = vunpack.c.l.b16 %v202
  %v335 = vunpack.c.l.b16 %v203
  %v336 = vunpack.c.l.b16 %v204
  %v337 = vunpack.c.l.b16 %v205
  %v338 = vunpack.c.l.b16 %v206
  %v339 = vunpack.c.l.b16 %v207
  %v340 = vunpack.c.l.b16 %v208
  %v341 = vunpack.c.l.b16 %v209
  %v342 = vunpack.c.l.b16 %v210
  %v343 = vunpack.c.l.b16 %v211
  %v344 = vpack.c.b16 %v281, %v280
  %v345 = vpack.c.b16 %v283, %v282
  %v346 = vpack.c.b16 %v285, %v284
  %v347 = vpack.c.b16 %v287, %v286
  %v348 = vpack.c.b16 %v289, %v288
  %v349 = vpack.c.b16 %v291, %v290
  %v350 = vpack.c.b16 %v293, %v292
  %v351 = vpack.c.b16 %v295, %v294
  %v352 = vpack.c.b16 %v297, %v296
  %v353 = vpack.c.b16 %v299, %v298
  %v354 = vpack.c.b16 %v301, %v300
  %v355 = vpack.c.b16 %v303, %v302
  %v356 = vpack.c.b16 %v305, %v304
  %v357 = vpack.c.b16 %v307, %v306
  %v358 = vpack.c.b16 %v309, %v308
  %v359 = vpack.c.b16 %v311, %v310
  %v360 = vpack.c.b16 %v313, %v312
  %v361 = vpack.c.b16 %v315, %v314
  %v362 = vpack.c.b16 %v317, %v316
  %v363 = vpack.c.b16 %v319, %v318
  %v364 = vpack.c.b16 %v321, %v320
  %v365 = vpack.c.b16 %v323, %v322
  %v366 = vpack.c.b16 %v325, %v324
  %v367 = vpack.c.b16 %v327, %v326
  %v368 = vpack.c.b16 %v329, %v328
  %v369 = vpack.c.b16 %v331, %v330
  %v370 = vpack.c.b16 %v333, %v332
  %v371 = vpack.c.b16 %v335, %v334
  %v372 = vpack.c.b16 %v337, %v336
  %v373 = vpack.c.b16 %v339, %v338
  %v374 = vpack.c.b16 %v341, %v340
  %v375 = vpack.c.b16 %v343, %v342
  %v380 = vunpack.c.l.b16 %v212
  %v381 = vunpack.c.l.b16 %v213
  %v382 = vunpack.c.l.b16 %v214
  %v383 = vunpack.c.l.b16 %v215
  %v384 = vpack.c.b16 %v381, %v380
  %v385 = vpack.c.b16 %v383, %v382
  %vm387 = vcmask 220160
  %v389 = vsel %vm387, %v344, 0
  %v392 = vsel %vm387, %v345, 0
  %v395 = vsel %vm387, %v346, 0
  %v398 = vsel %vm387, %v347, 0
  %v401 = vsel %vm387, %v348, 0
  %v404 = vsel %vm387, %v349, 0
  %v407 = vsel %vm387, %v350, 0
  %v410 = vsel %vm387, %v351, 0
  %v413 = vsel %vm387, %v352, 0
  %v416 = vsel %vm387, %v353, 0
  %v419 = vsel %vm387, %v354, 0
  %v422 = vsel %vm387, %v355, 0
  %v425 = vsel %vm387, %v356, 0
  %v428 = vsel %vm387, %v357, 0
  %v431 = vsel %vm387, %v358, 0
  %v434 = vsel %vm387, %v359, 0
  %v437 = vsel %vm387, %v360, 0
  %v440 = vsel %vm387, %v361, 0
  %v443 = vsel %vm387, %v362, 0
  %v446 = vsel %vm387, %v363, 0
  %v449 = vsel %vm387, %v364, 0
  %v452 = vsel %vm387, %v365, 0
  %v455 = vsel %vm387, %v366, 0
  %v458 = vsel %vm387, %v367, 0
  %v461 = vsel %vm387, %v368, 0
  %v464 = vsel %vm387, %v369, 0
  %v467 = vsel %vm387, %v370, 0
  %v470 = vsel %vm387, %v371, 0
  %v473 = vsel %vm387, %v372, 0
  %v476 = vsel %vm387, %v373, 0
  %v479 = vsel %vm387, %v374, 0
  %v482 = vsel %vm387, %v375, 0
  %vm484 = vcmask 1044480
  %vm485 = vcmask 1045504
  %v486 = vsel %vm484, 4294967295, 65535
  %v487 = vsel %vm485, %v486, 0
  %v489 = vand.u32 %v385, %v487
  %491 = vmatpush.bf16.msra.mxu0 0
  %492 = vmatpush.bf16.msra.mxu0 0
  %493 = vmatpush.bf16.msra.mxu0 0
  %494 = vmatpush.bf16.msra.mxu0 0
  %495 = vmatpush.bf16.msra.mxu0 0
  %496 = vmatpush.bf16.msra.mxu0 0
  %497 = vmatpush.bf16.msra.mxu0 %v489
  %498 = vmatpush.bf16.msra.mxu0 %v384
  %499 = vmatmul.bf16.gmra.mxu0 %v389
  %v500 = vpop.f32.mrf.mxu0
  %v501 = vadd.f32 0.0, %v500
  %v502 = vpop.f32.mrf.mxu0
  %v503 = vadd.f32 0.0, %v502
  %504 = vmatmul.bf16.gmra.mxu0 %v392
  %v505 = vpop.f32.mrf.mxu0
  %v506 = vadd.f32 0.0, %v505
  %v507 = vpop.f32.mrf.mxu0
  %v508 = vadd.f32 0.0, %v507
  %509 = vmatmul.bf16.gmra.mxu0 %v395
  %v510 = vpop.f32.mrf.mxu0
  %v511 = vadd.f32 0.0, %v510
  %v512 = vpop.f32.mrf.mxu0
  %v513 = vadd.f32 0.0, %v512
  %514 = vmatmul.bf16.gmra.mxu0 %v398
  %v515 = vpop.f32.mrf.mxu0
  %v516 = vadd.f32 0.0, %v515
  %v517 = vpop.f32.mrf.mxu0
  %v518 = vadd.f32 0.0, %v517
  %519 = vmatmul.bf16.gmra.mxu0 %v401
  %v520 = vpop.f32.mrf.mxu0
  %v521 = vadd.f32 0.0, %v520
  %v522 = vpop.f32.mrf.mxu0
  %v523 = vadd.f32 0.0, %v522
  %524 = vmatmul.bf16.gmra.mxu0 %v404
  %v525 = vpop.f32.mrf.mxu0
  %v526 = vadd.f32 0.0, %v525
  %v527 = vpop.f32.mrf.mxu0
  %v528 = vadd.f32 0.0, %v527
  %529 = vmatmul.bf16.gmra.mxu0 %v407
  %v530 = vpop.f32.mrf.mxu0
  %v531 = vadd.f32 0.0, %v530
  %v532 = vpop.f32.mrf.mxu0
  %v533 = vadd.f32 0.0, %v532
  %534 = vmatmul.bf16.gmra.mxu0 %v410
  %v535 = vpop.f32.mrf.mxu0
  %v536 = vadd.f32 0.0, %v535
  %v537 = vpop.f32.mrf.mxu0
  %v538 = vadd.f32 0.0, %v537
  %539 = vmatmul.bf16.gmra.mxu0 %v413
  %v540 = vpop.f32.mrf.mxu0
  %v541 = vadd.f32 0.0, %v540
  %v542 = vpop.f32.mrf.mxu0
  %v543 = vadd.f32 0.0, %v542
  %544 = vmatmul.bf16.gmra.mxu0 %v416
  %v545 = vpop.f32.mrf.mxu0
  %v546 = vadd.f32 0.0, %v545
  %v547 = vpop.f32.mrf.mxu0
  %v548 = vadd.f32 0.0, %v547
  %549 = vmatmul.bf16.gmra.mxu0 %v419
  %v550 = vpop.f32.mrf.mxu0
  %v551 = vadd.f32 0.0, %v550
  %v552 = vpop.f32.mrf.mxu0
  %v553 = vadd.f32 0.0, %v552
  %554 = vmatmul.bf16.gmra.mxu0 %v422
  %v555 = vpop.f32.mrf.mxu0
  %v556 = vadd.f32 0.0, %v555
  %v557 = vpop.f32.mrf.mxu0
  %v558 = vadd.f32 0.0, %v557
  %559 = vmatmul.bf16.gmra.mxu0 %v425
  %v560 = vpop.f32.mrf.mxu0
  %v561 = vadd.f32 0.0, %v560
  %v562 = vpop.f32.mrf.mxu0
  %v563 = vadd.f32 0.0, %v562
  %564 = vmatmul.bf16.gmra.mxu0 %v428
  %v565 = vpop.f32.mrf.mxu0
  %v566 = vadd.f32 0.0, %v565
  %v567 = vpop.f32.mrf.mxu0
  %v568 = vadd.f32 0.0, %v567
  %569 = vmatmul.bf16.gmra.mxu0 %v431
  %v570 = vpop.f32.mrf.mxu0
  %v571 = vadd.f32 0.0, %v570
  %v572 = vpop.f32.mrf.mxu0
  %v573 = vadd.f32 0.0, %v572
  %574 = vmatmul.bf16.gmra.mxu0 %v434
  %v575 = vpop.f32.mrf.mxu0
  %v576 = vadd.f32 0.0, %v575
  %v577 = vpop.f32.mrf.mxu0
  %v578 = vadd.f32 0.0, %v577
  %579 = vmatmul.bf16.gmra.mxu0 %v437
  %v580 = vpop.f32.mrf.mxu0
  %v581 = vadd.f32 0.0, %v580
  %v582 = vpop.f32.mrf.mxu0
  %v583 = vadd.f32 0.0, %v582
  %584 = vmatmul.bf16.gmra.mxu0 %v440
  %v585 = vpop.f32.mrf.mxu0
  %v586 = vadd.f32 0.0, %v585
  %v587 = vpop.f32.mrf.mxu0
  %v588 = vadd.f32 0.0, %v587
  %589 = vmatmul.bf16.gmra.mxu0 %v443
  %v590 = vpop.f32.mrf.mxu0
  %v591 = vadd.f32 0.0, %v590
  %v592 = vpop.f32.mrf.mxu0
  %v593 = vadd.f32 0.0, %v592
  %594 = vmatmul.bf16.gmra.mxu0 %v446
  %v595 = vpop.f32.mrf.mxu0
  %v596 = vadd.f32 0.0, %v595
  %v597 = vpop.f32.mrf.mxu0
  %v598 = vadd.f32 0.0, %v597
  %599 = vmatmul.bf16.gmra.mxu0 %v449
  %v600 = vpop.f32.mrf.mxu0
  %v601 = vadd.f32 0.0, %v600
  %v602 = vpop.f32.mrf.mxu0
  %v603 = vadd.f32 0.0, %v602
  %604 = vmatmul.bf16.gmra.mxu0 %v452
  %v605 = vpop.f32.mrf.mxu0
  %v606 = vadd.f32 0.0, %v605
  %v607 = vpop.f32.mrf.mxu0
  %v608 = vadd.f32 0.0, %v607
  %609 = vmatmul.bf16.gmra.mxu0 %v455
  %v610 = vpop.f32.mrf.mxu0
  %v611 = vadd.f32 0.0, %v610
  %v612 = vpop.f32.mrf.mxu0
  %v613 = vadd.f32 0.0, %v612
  %614 = vmatmul.bf16.gmra.mxu0 %v458
  %v615 = vpop.f32.mrf.mxu0
  %v616 = vadd.f32 0.0, %v615
  %v617 = vpop.f32.mrf.mxu0
  %v618 = vadd.f32 0.0, %v617
  %619 = vmatmul.bf16.gmra.mxu0 %v461
  %v620 = vpop.f32.mrf.mxu0
  %v621 = vadd.f32 0.0, %v620
  %v622 = vpop.f32.mrf.mxu0
  %v623 = vadd.f32 0.0, %v622
  %624 = vmatmul.bf16.gmra.mxu0 %v464
  %v625 = vpop.f32.mrf.mxu0
  %v626 = vadd.f32 0.0, %v625
  %v627 = vpop.f32.mrf.mxu0
  %v628 = vadd.f32 0.0, %v627
  %629 = vmatmul.bf16.gmra.mxu0 %v467
  %v630 = vpop.f32.mrf.mxu0
  %v631 = vadd.f32 0.0, %v630
  %v632 = vpop.f32.mrf.mxu0
  %v633 = vadd.f32 0.0, %v632
  %634 = vmatmul.bf16.gmra.mxu0 %v470
  %v635 = vpop.f32.mrf.mxu0
  %v636 = vadd.f32 0.0, %v635
  %v637 = vpop.f32.mrf.mxu0
  %v638 = vadd.f32 0.0, %v637
  %639 = vmatmul.bf16.gmra.mxu0 %v473
  %v640 = vpop.f32.mrf.mxu0
  %v641 = vadd.f32 0.0, %v640
  %v642 = vpop.f32.mrf.mxu0
  %v643 = vadd.f32 0.0, %v642
  %644 = vmatmul.bf16.gmra.mxu0 %v476
  %v645 = vpop.f32.mrf.mxu0
  %v646 = vadd.f32 0.0, %v645
  %v647 = vpop.f32.mrf.mxu0
  %v648 = vadd.f32 0.0, %v647
  %649 = vmatmul.bf16.gmra.mxu0 %v479
  %v650 = vpop.f32.mrf.mxu0
  %v651 = vadd.f32 0.0, %v650
  %v652 = vpop.f32.mrf.mxu0
  %v653 = vadd.f32 0.0, %v652
  %654 = vmatmul.bf16.gmra.mxu0 %v482
  %v655 = vpop.f32.mrf.mxu0
  %v656 = vadd.f32 0.0, %v655
  %v657 = vpop.f32.mrf.mxu0
  %v658 = vadd.f32 0.0, %v657
  %659 = vdwg.mxu0
  %v660 = vadd.f32 %v84, %v501
  %v661 = vadd.f32 %v85, %v503
  %v662 = vadd.f32 %v86, %v506
  %v663 = vadd.f32 %v87, %v508
  %v664 = vadd.f32 %v88, %v511
  %v665 = vadd.f32 %v89, %v513
  %v666 = vadd.f32 %v90, %v516
  %v667 = vadd.f32 %v91, %v518
  %v668 = vadd.f32 %v92, %v521
  %v669 = vadd.f32 %v93, %v523
  %v670 = vadd.f32 %v94, %v526
  %v671 = vadd.f32 %v95, %v528
  %v672 = vadd.f32 %v96, %v531
  %v673 = vadd.f32 %v97, %v533
  %v674 = vadd.f32 %v98, %v536
  %v675 = vadd.f32 %v99, %v538
  %v676 = vadd.f32 %v100, %v541
  %v677 = vadd.f32 %v101, %v543
  %v678 = vadd.f32 %v102, %v546
  %v679 = vadd.f32 %v103, %v548
  %v680 = vadd.f32 %v104, %v551
  %v681 = vadd.f32 %v105, %v553
  %v682 = vadd.f32 %v106, %v556
  %v683 = vadd.f32 %v107, %v558
  %v684 = vadd.f32 %v108, %v561
  %v685 = vadd.f32 %v109, %v563
  %v686 = vadd.f32 %v110, %v566
  %v687 = vadd.f32 %v111, %v568
  %v688 = vadd.f32 %v112, %v571
  %v689 = vadd.f32 %v113, %v573
  %v690 = vadd.f32 %v114, %v576
  %v691 = vadd.f32 %v115, %v578
  %v692 = vadd.f32 %v116, %v581
  %v693 = vadd.f32 %v117, %v583
  %v694 = vadd.f32 %v118, %v586
  %v695 = vadd.f32 %v119, %v588
  %v696 = vadd.f32 %v120, %v591
  %v697 = vadd.f32 %v121, %v593
  %v698 = vadd.f32 %v122, %v596
  %v699 = vadd.f32 %v123, %v598
  %v700 = vadd.f32 %v124, %v601
  %v701 = vadd.f32 %v125, %v603
  %v702 = vadd.f32 %v126, %v606
  %v703 = vadd.f32 %v127, %v608
  %v704 = vadd.f32 %v128, %v611
  %v705 = vadd.f32 %v129, %v613
  %v706 = vadd.f32 %v130, %v616
  %v707 = vadd.f32 %v131, %v618
  %v708 = vadd.f32 %v132, %v621
  %v709 = vadd.f32 %v133, %v623
  %v710 = vadd.f32 %v134, %v626
  %v711 = vadd.f32 %v135, %v628
  %v712 = vadd.f32 %v136, %v631
  %v713 = vadd.f32 %v137, %v633
  %v714 = vadd.f32 %v138, %v636
  %v715 = vadd.f32 %v139, %v638
  %v716 = vadd.f32 %v140, %v641
  %v717 = vadd.f32 %v141, %v643
  %v718 = vadd.f32 %v142, %v646
  %v719 = vadd.f32 %v143, %v648
  %v720 = vadd.f32 %v144, %v651
  %v721 = vadd.f32 %v145, %v653
  %v722 = vadd.f32 %v146, %v656
  %v723 = vadd.f32 %v147, %v658
  %vm724 = vcmask 64512
  %725 = vst.msk [vmem:[#allocation2] sm:$0xff] %vm724, %v660
  %726 = vst.msk [vmem:[#allocation2 + $0x8] sm:$0xff] %vm724, %v661
  %727 = vst.msk [vmem:[#allocation2 + $0x10] sm:$0xff] %vm724, %v662
  %728 = vst.msk [vmem:[#allocation2 + $0x18] sm:$0xff] %vm724, %v663
  %729 = vst.msk [vmem:[#allocation2 + $0x20] sm:$0xff] %vm724, %v664
  %730 = vst.msk [vmem:[#allocation2 + $0x28] sm:$0xff] %vm724, %v665
  %731 = vst.msk [vmem:[#allocation2 + $0x30] sm:$0xff] %vm724, %v666
  %732 = vst.msk [vmem:[#allocation2 + $0x38] sm:$0xff] %vm724, %v667
  %733 = vst.msk [vmem:[#allocation2 + $0x40] sm:$0xff] %vm724, %v668
  %734 = vst.msk [vmem:[#allocation2 + $0x48] sm:$0xff] %vm724, %v669
  %735 = vst.msk [vmem:[#allocation2 + $0x50] sm:$0xff] %vm724, %v670
  %736 = vst.msk [vmem:[#allocation2 + $0x58] sm:$0xff] %vm724, %v671
  %737 = vst.msk [vmem:[#allocation2 + $0x60] sm:$0xff] %vm724, %v672
  %738 = vst.msk [vmem:[#allocation2 + $0x68] sm:$0xff] %vm724, %v673
  %739 = vst.msk [vmem:[#allocation2 + $0x70] sm:$0xff] %vm724, %v674
  %740 = vst.msk [vmem:[#allocation2 + $0x78] sm:$0xff] %vm724, %v675
  %741 = vst.msk [vmem:[#allocation2 + $0x80] sm:$0xff] %vm724, %v676
  %742 = vst.msk [vmem:[#allocation2 + $0x88] sm:$0xff] %vm724, %v677
  %743 = vst.msk [vmem:[#allocation2 + $0x90] sm:$0xff] %vm724, %v678
  %744 = vst.msk [vmem:[#allocation2 + $0x98] sm:$0xff] %vm724, %v679
  %745 = vst.msk [vmem:[#allocation2 + $0xa0] sm:$0xff] %vm724, %v680
  %746 = vst.msk [vmem:[#allocation2 + $0xa8] sm:$0xff] %vm724, %v681
  %747 = vst.msk [vmem:[#allocation2 + $0xb0] sm:$0xff] %vm724, %v682
  %748 = vst.msk [vmem:[#allocation2 + $0xb8] sm:$0xff] %vm724, %v683
  %749 = vst.msk [vmem:[#allocation2 + $0xc0] sm:$0xff] %vm724, %v684
  %750 = vst.msk [vmem:[#allocation2 + $0xc8] sm:$0xff] %vm724, %v685
  %751 = vst.msk [vmem:[#allocation2 + $0xd0] sm:$0xff] %vm724, %v686
  %752 = vst.msk [vmem:[#allocation2 + $0xd8] sm:$0xff] %vm724, %v687
  %753 = vst.msk [vmem:[#allocation2 + $0xe0] sm:$0xff] %vm724, %v688
  %754 = vst.msk [vmem:[#allocation2 + $0xe8] sm:$0xff] %vm724, %v689
  %755 = vst.msk [vmem:[#allocation2 + $0xf0] sm:$0xff] %vm724, %v690
  %756 = vst.msk [vmem:[#allocation2 + $0xf8] sm:$0xff] %vm724, %v691
  %757 = vst.msk [vmem:[#allocation2 + $0x100] sm:$0xff] %vm724, %v692
  %758 = vst.msk [vmem:[#allocation2 + $0x108] sm:$0xff] %vm724, %v693
  %759 = vst.msk [vmem:[#allocation2 + $0x110] sm:$0xff] %vm724, %v694
  %760 = vst.msk [vmem:[#allocation2 + $0x118] sm:$0xff] %vm724, %v695
  %761 = vst.msk [vmem:[#allocation2 + $0x120] sm:$0xff] %vm724, %v696
  %762 = vst.msk [vmem:[#allocation2 + $0x128] sm:$0xff] %vm724, %v697
  %763 = vst.msk [vmem:[#allocation2 + $0x130] sm:$0xff] %vm724, %v698
  %764 = vst.msk [vmem:[#allocation2 + $0x138] sm:$0xff] %vm724, %v699
  %765 = vst.msk [vmem:[#allocation2 + $0x140] sm:$0xff] %vm724, %v700
  %766 = vst.msk [vmem:[#allocation2 + $0x148] sm:$0xff] %vm724, %v701
  %767 = vst.msk [vmem:[#allocation2 + $0x150] sm:$0xff] %vm724, %v702
  %768 = vst.msk [vmem:[#allocation2 + $0x158] sm:$0xff] %vm724, %v703
  %769 = vst.msk [vmem:[#allocation2 + $0x160] sm:$0xff] %vm724, %v704
  %770 = vst.msk [vmem:[#allocation2 + $0x168] sm:$0xff] %vm724, %v705
  %771 = vst.msk [vmem:[#allocation2 + $0x170] sm:$0xff] %vm724, %v706
  %772 = vst.msk [vmem:[#allocation2 + $0x178] sm:$0xff] %vm724, %v707
  %773 = vst.msk [vmem:[#allocation2 + $0x180] sm:$0xff] %vm724, %v708
  %774 = vst.msk [vmem:[#allocation2 + $0x188] sm:$0xff] %vm724, %v709
  %775 = vst.msk [vmem:[#allocation2 + $0x190] sm:$0xff] %vm724, %v710
  %776 = vst.msk [vmem:[#allocation2 + $0x198] sm:$0xff] %vm724, %v711
  %777 = vst.msk [vmem:[#allocation2 + $0x1a0] sm:$0xff] %vm724, %v712
  %778 = vst.msk [vmem:[#allocation2 + $0x1a8] sm:$0xff] %vm724, %v713
  %779 = vst.msk [vmem:[#allocation2 + $0x1b0] sm:$0xff] %vm724, %v714
  %780 = vst.msk [vmem:[#allocation2 + $0x1b8] sm:$0xff] %vm724, %v715
  %781 = vst.msk [vmem:[#allocation2 + $0x1c0] sm:$0xff] %vm724, %v716
  %782 = vst.msk [vmem:[#allocation2 + $0x1c8] sm:$0xff] %vm724, %v717
  %783 = vst.msk [vmem:[#allocation2 + $0x1d0] sm:$0xff] %vm724, %v718
  %784 = vst.msk [vmem:[#allocation2 + $0x1d8] sm:$0xff] %vm724, %v719
  %785 = vst.msk [vmem:[#allocation2 + $0x1e0] sm:$0xff] %vm724, %v720
  %786 = vst.msk [vmem:[#allocation2 + $0x1e8] sm:$0xff] %vm724, %v721
  %787 = vst.msk [vmem:[#allocation2 + $0x1f0] sm:$0xff] %vm724, %v722
  %788 = vst.msk [vmem:[#allocation2 + $0x1f8] sm:$0xff] %vm724, %v723
  // Predicated region
  $region18: #{_lambda_.14} parent=0 // pred_check
    %p789 = pneg %p15
  $region19: #{_lambda_.14} parent=0 // pred_check_branch
    %791 = sbr.rel (%p789) target = $region21
  $region20: #{_lambda_.14} parent=0 // pred_region
    %v792 = vld [vmem:[#allocation2] sm:$0xff]
    %v793 = vld [vmem:[#allocation2 + $0x8] sm:$0xff]
    %v794 = vld [vmem:[#allocation2 + $0x10] sm:$0xff]
    %v795 = vld [vmem:[#allocation2 + $0x18] sm:$0xff]
    %v796 = vld [vmem:[#allocation2 + $0x20] sm:$0xff]
    %v797 = vld [vmem:[#allocation2 + $0x28] sm:$0xff]
    %v798 = vld [vmem:[#allocation2 + $0x30] sm:$0xff]
    %v799 = vld [vmem:[#allocation2 + $0x38] sm:$0xff]
    %v800 = vld [vmem:[#allocation2 + $0x40] sm:$0xff]
    %v801 = vld [vmem:[#allocation2 + $0x48] sm:$0xff]
    %v802 = vld [vmem:[#allocation2 + $0x50] sm:$0xff]
    %v803 = vld [vmem:[#allocation2 + $0x58] sm:$0xff]
    %v804 = vld [vmem:[#allocation2 + $0x60] sm:$0xff]
    %v805 = vld [vmem:[#allocation2 + $0x68] sm:$0xff]
    %v806 = vld [vmem:[#allocation2 + $0x70] sm:$0xff]
    %v807 = vld [vmem:[#allocation2 + $0x78] sm:$0xff]
    %v808 = vld [vmem:[#allocation2 + $0x80] sm:$0xff]
    %v809 = vld [vmem:[#allocation2 + $0x88] sm:$0xff]
    %v810 = vld [vmem:[#allocation2 + $0x90] sm:$0xff]
    %v811 = vld [vmem:[#allocation2 + $0x98] sm:$0xff]
    %v812 = vld [vmem:[#allocation2 + $0xa0] sm:$0xff]
    %v813 = vld [vmem:[#allocation2 + $0xa8] sm:$0xff]
    %v814 = vld [vmem:[#allocation2 + $0xb0] sm:$0xff]
    %v815 = vld [vmem:[#allocation2 + $0xb8] sm:$0xff]
    %v816 = vld [vmem:[#allocation2 + $0xc0] sm:$0xff]
    %v817 = vld [vmem:[#allocation2 + $0xc8] sm:$0xff]
    %v818 = vld [vmem:[#allocation2 + $0xd0] sm:$0xff]
    %v819 = vld [vmem:[#allocation2 + $0xd8] sm:$0xff]
    %v820 = vld [vmem:[#allocation2 + $0xe0] sm:$0xff]
    %v821 = vld [vmem:[#allocation2 + $0xe8] sm:$0xff]
    %v822 = vld [vmem:[#allocation2 + $0xf0] sm:$0xff]
    %v823 = vld [vmem:[#allocation2 + $0xf8] sm:$0xff]
    %v824 = vld [vmem:[#allocation2 + $0x100] sm:$0xff]
    %v825 = vld [vmem:[#allocation2 + $0x108] sm:$0xff]
    %v826 = vld [vmem:[#allocation2 + $0x110] sm:$0xff]
    %v827 = vld [vmem:[#allocation2 + $0x118] sm:$0xff]
    %v828 = vld [vmem:[#allocation2 + $0x120] sm:$0xff]
    %v829 = vld [vmem:[#allocation2 + $0x128] sm:$0xff]
    %v830 = vld [vmem:[#allocation2 + $0x130] sm:$0xff]
    %v831 = vld [vmem:[#allocation2 + $0x138] sm:$0xff]
    %v832 = vld [vmem:[#allocation2 + $0x140] sm:$0xff]
    %v833 = vld [vmem:[#allocation2 + $0x148] sm:$0xff]
    %v834 = vld [vmem:[#allocation2 + $0x150] sm:$0xff]
    %v835 = vld [vmem:[#allocation2 + $0x158] sm:$0xff]
    %v836 = vld [vmem:[#allocation2 + $0x160] sm:$0xff]
    %v837 = vld [vmem:[#allocation2 + $0x168] sm:$0xff]
    %v838 = vld [vmem:[#allocation2 + $0x170] sm:$0xff]
    %v839 = vld [vmem:[#allocation2 + $0x178] sm:$0xff]
    %v840 = vld [vmem:[#allocation2 + $0x180] sm:$0xff]
    %v841 = vld [vmem:[#allocation2 + $0x188] sm:$0xff]
    %v842 = vld [vmem:[#allocation2 + $0x190] sm:$0xff]
    %v843 = vld [vmem:[#allocation2 + $0x198] sm:$0xff]
    %v844 = vld [vmem:[#allocation2 + $0x1a0] sm:$0xff]
    %v845 = vld [vmem:[#allocation2 + $0x1a8] sm:$0xff]
    %v846 = vld [vmem:[#allocation2 + $0x1b0] sm:$0xff]
    %v847 = vld [vmem:[#allocation2 + $0x1b8] sm:$0xff]
    %v848 = vld [vmem:[#allocation2 + $0x1c0] sm:$0xff]
    %v849 = vld [vmem:[#allocation2 + $0x1c8] sm:$0xff]
    %v850 = vld [vmem:[#allocation2 + $0x1d0] sm:$0xff]
    %v851 = vld [vmem:[#allocation2 + $0x1d8] sm:$0xff]
    %v852 = vld [vmem:[#allocation2 + $0x1e0] sm:$0xff]
    %v853 = vld [vmem:[#allocation2 + $0x1e8] sm:$0xff]
    %v854 = vld [vmem:[#allocation2 + $0x1f0] sm:$0xff]
    %v855 = vld [vmem:[#allocation2 + $0x1f8] sm:$0xff]
    %v856 = vld [vmem:[%s2] sm:$0x1]
    %v858 = vperm.slane %v856, 0
    %v860 = vadd.f32 %v792, %v858
    %v861 = vadd.f32 %v793, %v858
    %v862 = vadd.f32 %v794, %v858
    %v863 = vadd.f32 %v795, %v858
    %v864 = vadd.f32 %v796, %v858
    %v865 = vadd.f32 %v797, %v858
    %v866 = vadd.f32 %v798, %v858
    %v867 = vadd.f32 %v799, %v858
    %v868 = vadd.f32 %v800, %v858
    %v869 = vadd.f32 %v801, %v858
    %v870 = vadd.f32 %v802, %v858
    %v871 = vadd.f32 %v803, %v858
    %v872 = vadd.f32 %v804, %v858
    %v873 = vadd.f32 %v805, %v858
    %v874 = vadd.f32 %v806, %v858
    %v875 = vadd.f32 %v807, %v858
    %v876 = vadd.f32 %v808, %v858
    %v877 = vadd.f32 %v809, %v858
    %v878 = vadd.f32 %v810, %v858
    %v879 = vadd.f32 %v811, %v858
    %v880 = vadd.f32 %v812, %v858
    %v881 = vadd.f32 %v813, %v858
    %v882 = vadd.f32 %v814, %v858
    %v883 = vadd.f32 %v815, %v858
    %v884 = vadd.f32 %v816, %v858
    %v885 = vadd.f32 %v817, %v858
    %v886 = vadd.f32 %v818, %v858
    %v887 = vadd.f32 %v819, %v858
    %v888 = vadd.f32 %v820, %v858
    %v889 = vadd.f32 %v821, %v858
    %v890 = vadd.f32 %v822, %v858
    %v891 = vadd.f32 %v823, %v858
    %v892 = vadd.f32 %v824, %v858
    %v893 = vadd.f32 %v825, %v858
    %v894 = vadd.f32 %v826, %v858
    %v895 = vadd.f32 %v827, %v858
    %v896 = vadd.f32 %v828, %v858
    %v897 = vadd.f32 %v829, %v858
    %v898 = vadd.f32 %v830, %v858
    %v899 = vadd.f32 %v831, %v858
    %v900 = vadd.f32 %v832, %v858
    %v901 = vadd.f32 %v833, %v858
    %v902 = vadd.f32 %v834, %v858
    %v903 = vadd.f32 %v835, %v858
    %v904 = vadd.f32 %v836, %v858
    %v905 = vadd.f32 %v837, %v858
    %v906 = vadd.f32 %v838, %v858
    %v907 = vadd.f32 %v839, %v858
    %v908 = vadd.f32 %v840, %v858
    %v909 = vadd.f32 %v841, %v858
    %v910 = vadd.f32 %v842, %v858
    %v911 = vadd.f32 %v843, %v858
    %v912 = vadd.f32 %v844, %v858
    %v913 = vadd.f32 %v845, %v858
    %v914 = vadd.f32 %v846, %v858
    %v915 = vadd.f32 %v847, %v858
    %v916 = vadd.f32 %v848, %v858
    %v917 = vadd.f32 %v849, %v858
    %v918 = vadd.f32 %v850, %v858
    %v919 = vadd.f32 %v851, %v858
    %v920 = vadd.f32 %v852, %v858
    %v921 = vadd.f32 %v853, %v858
    %v922 = vadd.f32 %v854, %v858
    %v923 = vadd.f32 %v855, %v858
    %v924 = vmax.f32 %v860, 0.0
    %v925 = vmax.f32 %v861, 0.0
    %v926 = vmax.f32 %v862, 0.0
    %v927 = vmax.f32 %v863, 0.0
    %v928 = vmax.f32 %v864, 0.0
    %v929 = vmax.f32 %v865, 0.0
    %v930 = vmax.f32 %v866, 0.0
    %v931 = vmax.f32 %v867, 0.0
    %v932 = vmax.f32 %v868, 0.0
    %v933 = vmax.f32 %v869, 0.0
    %v934 = vmax.f32 %v870, 0.0
    %v935 = vmax.f32 %v871, 0.0
    %v936 = vmax.f32 %v872, 0.0
    %v937 = vmax.f32 %v873, 0.0
    %v938 = vmax.f32 %v874, 0.0
    %v939 = vmax.f32 %v875, 0.0
    %v940 = vmax.f32 %v876, 0.0
    %v941 = vmax.f32 %v877, 0.0
    %v942 = vmax.f32 %v878, 0.0
    %v943 = vmax.f32 %v879, 0.0
    %v944 = vmax.f32 %v880, 0.0
    %v945 = vmax.f32 %v881, 0.0
    %v946 = vmax.f32 %v882, 0.0
    %v947 = vmax.f32 %v883, 0.0
    %v948 = vmax.f32 %v884, 0.0
    %v949 = vmax.f32 %v885, 0.0
    %v950 = vmax.f32 %v886, 0.0
    %v951 = vmax.f32 %v887, 0.0
    %v952 = vmax.f32 %v888, 0.0
    %v953 = vmax.f32 %v889, 0.0
    %v954 = vmax.f32 %v890, 0.0
    %v955 = vmax.f32 %v891, 0.0
    %v956 = vmax.f32 %v892, 0.0
    %v957 = vmax.f32 %v893, 0.0
    %v958 = vmax.f32 %v894, 0.0
    %v959 = vmax.f32 %v895, 0.0
    %v960 = vmax.f32 %v896, 0.0
    %v961 = vmax.f32 %v897, 0.0
    %v962 = vmax.f32 %v898, 0.0
    %v963 = vmax.f32 %v899, 0.0
    %v964 = vmax.f32 %v900, 0.0
    %v965 = vmax.f32 %v901, 0.0
    %v966 = vmax.f32 %v902, 0.0
    %v967 = vmax.f32 %v903, 0.0
    %v968 = vmax.f32 %v904, 0.0
    %v969 = vmax.f32 %v905, 0.0
    %v970 = vmax.f32 %v906, 0.0
    %v971 = vmax.f32 %v907, 0.0
    %v972 = vmax.f32 %v908, 0.0
    %v973 = vmax.f32 %v909, 0.0
    %v974 = vmax.f32 %v910, 0.0
    %v975 = vmax.f32 %v911, 0.0
    %v976 = vmax.f32 %v912, 0.0
    %v977 = vmax.f32 %v913, 0.0
    %v978 = vmax.f32 %v914, 0.0
    %v979 = vmax.f32 %v915, 0.0
    %v980 = vmax.f32 %v916, 0.0
    %v981 = vmax.f32 %v917, 0.0
    %v982 = vmax.f32 %v918, 0.0
    %v983 = vmax.f32 %v919, 0.0
    %v984 = vmax.f32 %v920, 0.0
    %v985 = vmax.f32 %v921, 0.0
    %v986 = vmax.f32 %v922, 0.0
    %v987 = vmax.f32 %v923, 0.0
    %v988 = vpack.c.bf16 %v924, %v924
    %v989 = vpack.c.bf16 %v925, %v925
    %v990 = vpack.c.bf16 %v926, %v926
    %v991 = vpack.c.bf16 %v927, %v927
    %v992 = vpack.c.bf16 %v928, %v928
    %v993 = vpack.c.bf16 %v929, %v929
    %v994 = vpack.c.bf16 %v930, %v930
    %v995 = vpack.c.bf16 %v931, %v931
    %v996 = vpack.c.bf16 %v932, %v932
    %v997 = vpack.c.bf16 %v933, %v933
    %v998 = vpack.c.bf16 %v934, %v934
    %v999 = vpack.c.bf16 %v935, %v935
    %v1000 = vpack.c.bf16 %v936, %v936
    %v1001 = vpack.c.bf16 %v937, %v937
    %v1002 = vpack.c.bf16 %v938, %v938
    %v1003 = vpack.c.bf16 %v939, %v939
    %v1004 = vpack.c.bf16 %v940, %v940
    %v1005 = vpack.c.bf16 %v941, %v941
    %v1006 = vpack.c.bf16 %v942, %v942
    %v1007 = vpack.c.bf16 %v943, %v943
    %v1008 = vpack.c.bf16 %v944, %v944
    %v1009 = vpack.c.bf16 %v945, %v945
    %v1010 = vpack.c.bf16 %v946, %v946
    %v1011 = vpack.c.bf16 %v947, %v947
    %v1012 = vpack.c.bf16 %v948, %v948
    %v1013 = vpack.c.bf16 %v949, %v949
    %v1014 = vpack.c.bf16 %v950, %v950
    %v1015 = vpack.c.bf16 %v951, %v951
    %v1016 = vpack.c.bf16 %v952, %v952
    %v1017 = vpack.c.bf16 %v953, %v953
    %v1018 = vpack.c.bf16 %v954, %v954
    %v1019 = vpack.c.bf16 %v955, %v955
    %v1020 = vpack.c.bf16 %v956, %v956
    %v1021 = vpack.c.bf16 %v957, %v957
    %v1022 = vpack.c.bf16 %v958, %v958
    %v1023 = vpack.c.bf16 %v959, %v959
    %v1024 = vpack.c.bf16 %v960, %v960
    %v1025 = vpack.c.bf16 %v961, %v961
    %v1026 = vpack.c.bf16 %v962, %v962
    %v1027 = vpack.c.bf16 %v963, %v963
    %v1028 = vpack.c.bf16 %v964, %v964
    %v1029 = vpack.c.bf16 %v965, %v965
    %v1030 = vpack.c.bf16 %v966, %v966
    %v1031 = vpack.c.bf16 %v967, %v967
    %v1032 = vpack.c.bf16 %v968, %v968
    %v1033 = vpack.c.bf16 %v969, %v969
    %v1034 = vpack.c.bf16 %v970, %v970
    %v1035 = vpack.c.bf16 %v971, %v971
    %v1036 = vpack.c.bf16 %v972, %v972
    %v1037 = vpack.c.bf16 %v973, %v973
    %v1038 = vpack.c.bf16 %v974, %v974
    %v1039 = vpack.c.bf16 %v975, %v975
    %v1040 = vpack.c.bf16 %v976, %v976
    %v1041 = vpack.c.bf16 %v977, %v977
    %v1042 = vpack.c.bf16 %v978, %v978
    %v1043 = vpack.c.bf16 %v979, %v979
    %v1044 = vpack.c.bf16 %v980, %v980
    %v1045 = vpack.c.bf16 %v981, %v981
    %v1046 = vpack.c.bf16 %v982, %v982
    %v1047 = vpack.c.bf16 %v983, %v983
    %v1048 = vpack.c.bf16 %v984, %v984
    %v1049 = vpack.c.bf16 %v985, %v985
    %v1050 = vpack.c.bf16 %v986, %v986
    %v1051 = vpack.c.bf16 %v987, %v987
    %vm1052 = vcmask 60416
    %1053 = vst.msk [vmem:[%s3] sm:$0xf] %vm1052, %v988
    %1054 = vst.msk [vmem:[%s3 + $0x4] sm:$0xf] %vm1052, %v989
    %1055 = vst.msk [vmem:[%s3 + $0x8] sm:$0xf] %vm1052, %v990
    %1056 = vst.msk [vmem:[%s3 + $0xc] sm:$0xf] %vm1052, %v991
    %1057 = vst.msk [vmem:[%s3 + $0x10] sm:$0xf] %vm1052, %v992
    %1058 = vst.msk [vmem:[%s3 + $0x14] sm:$0xf] %vm1052, %v993
    %1059 = vst.msk [vmem:[%s3 + $0x18] sm:$0xf] %vm1052, %v994
    %1060 = vst.msk [vmem:[%s3 + $0x1c] sm:$0xf] %vm1052, %v995
    %1061 = vst.msk [vmem:[%s3 + $0x20] sm:$0xf] %vm1052, %v996
    %1062 = vst.msk [vmem:[%s3 + $0x24] sm:$0xf] %vm1052, %v997
    %1063 = vst.msk [vmem:[%s3 + $0x28] sm:$0xf] %vm1052, %v998
    %1064 = vst.msk [vmem:[%s3 + $0x2c] sm:$0xf] %vm1052, %v999
    %1065 = vst.msk [vmem:[%s3 + $0x30] sm:$0xf] %vm1052, %v1000
    %1066 = vst.msk [vmem:[%s3 + $0x34] sm:$0xf] %vm1052, %v1001
    %1067 = vst.msk [vmem:[%s3 + $0x38] sm:$0xf] %vm1052, %v1002
    %1068 = vst.msk [vmem:[%s3 + $0x3c] sm:$0xf] %vm1052, %v1003
    %1069 = vst.msk [vmem:[%s3 + $0x40] sm:$0xf] %vm1052, %v1004
    %1070 = vst.msk [vmem:[%s3 + $0x44] sm:$0xf] %vm1052, %v1005
    %1071 = vst.msk [vmem:[%s3 + $0x48] sm:$0xf] %vm1052, %v1006
    %1072 = vst.msk [vmem:[%s3 + $0x4c] sm:$0xf] %vm1052, %v1007
    %1073 = vst.msk [vmem:[%s3 + $0x50] sm:$0xf] %vm1052, %v1008
    %1074 = vst.msk [vmem:[%s3 + $0x54] sm:$0xf] %vm1052, %v1009
    %1075 = vst.msk [vmem:[%s3 + $0x58] sm:$0xf] %vm1052, %v1010
    %1076 = vst.msk [vmem:[%s3 + $0x5c] sm:$0xf] %vm1052, %v1011
    %1077 = vst.msk [vmem:[%s3 + $0x60] sm:$0xf] %vm1052, %v1012
    %1078 = vst.msk [vmem:[%s3 + $0x64] sm:$0xf] %vm1052, %v1013
    %1079 = vst.msk [vmem:[%s3 + $0x68] sm:$0xf] %vm1052, %v1014
    %1080 = vst.msk [vmem:[%s3 + $0x6c] sm:$0xf] %vm1052, %v1015
    %1081 = vst.msk [vmem:[%s3 + $0x70] sm:$0xf] %vm1052, %v1016
    %1082 = vst.msk [vmem:[%s3 + $0x74] sm:$0xf] %vm1052, %v1017
    %1083 = vst.msk [vmem:[%s3 + $0x78] sm:$0xf] %vm1052, %v1018
    %1084 = vst.msk [vmem:[%s3 + $0x7c] sm:$0xf] %vm1052, %v1019
    %1085 = vst.msk [vmem:[%s3 + $0x80] sm:$0xf] %vm1052, %v1020
    %1086 = vst.msk [vmem:[%s3 + $0x84] sm:$0xf] %vm1052, %v1021
    %1087 = vst.msk [vmem:[%s3 + $0x88] sm:$0xf] %vm1052, %v1022
    %1088 = vst.msk [vmem:[%s3 + $0x8c] sm:$0xf] %vm1052, %v1023
    %1089 = vst.msk [vmem:[%s3 + $0x90] sm:$0xf] %vm1052, %v1024
    %1090 = vst.msk [vmem:[%s3 + $0x94] sm:$0xf] %vm1052, %v1025
    %1091 = vst.msk [vmem:[%s3 + $0x98] sm:$0xf] %vm1052, %v1026
    %1092 = vst.msk [vmem:[%s3 + $0x9c] sm:$0xf] %vm1052, %v1027
    %1093 = vst.msk [vmem:[%s3 + $0xa0] sm:$0xf] %vm1052, %v1028
    %1094 = vst.msk [vmem:[%s3 + $0xa4] sm:$0xf] %vm1052, %v1029
    %1095 = vst.msk [vmem:[%s3 + $0xa8] sm:$0xf] %vm1052, %v1030
    %1096 = vst.msk [vmem:[%s3 + $0xac] sm:$0xf] %vm1052, %v1031
    %1097 = vst.msk [vmem:[%s3 + $0xb0] sm:$0xf] %vm1052, %v1032
    %1098 = vst.msk [vmem:[%s3 + $0xb4] sm:$0xf] %vm1052, %v1033
    %1099 = vst.msk [vmem:[%s3 + $0xb8] sm:$0xf] %vm1052, %v1034
    %1100 = vst.msk [vmem:[%s3 + $0xbc] sm:$0xf] %vm1052, %v1035
    %1101 = vst.msk [vmem:[%s3 + $0xc0] sm:$0xf] %vm1052, %v1036
    %1102 = vst.msk [vmem:[%s3 + $0xc4] sm:$0xf] %vm1052, %v1037
    %1103 = vst.msk [vmem:[%s3 + $0xc8] sm:$0xf] %vm1052, %v1038
    %1104 = vst.msk [vmem:[%s3 + $0xcc] sm:$0xf] %vm1052, %v1039
    %1105 = vst.msk [vmem:[%s3 + $0xd0] sm:$0xf] %vm1052, %v1040
    %1106 = vst.msk [vmem:[%s3 + $0xd4] sm:$0xf] %vm1052, %v1041
    %1107 = vst.msk [vmem:[%s3 + $0xd8] sm:$0xf] %vm1052, %v1042
    %1108 = vst.msk [vmem:[%s3 + $0xdc] sm:$0xf] %vm1052, %v1043
    %1109 = vst.msk [vmem:[%s3 + $0xe0] sm:$0xf] %vm1052, %v1044
    %1110 = vst.msk [vmem:[%s3 + $0xe4] sm:$0xf] %vm1052, %v1045
    %1111 = vst.msk [vmem:[%s3 + $0xe8] sm:$0xf] %vm1052, %v1046
    %1112 = vst.msk [vmem:[%s3 + $0xec] sm:$0xf] %vm1052, %v1047
    %1113 = vst.msk [vmem:[%s3 + $0xf0] sm:$0xf] %vm1052, %v1048
    %1114 = vst.msk [vmem:[%s3 + $0xf4] sm:$0xf] %vm1052, %v1049
    %1115 = vst.msk [vmem:[%s3 + $0xf8] sm:$0xf] %vm1052, %v1050
    %1116 = vst.msk [vmem:[%s3 + $0xfc] sm:$0xf] %vm1052, %v1051
  $region21: #{_lambda_.14} parent=0 // pred_fallthru
    _
  // Predicated region
  $region22: #{_lambda_.14} parent=0 // pred_check
    _
  $region23: #{_lambda_.14} parent=0 // pred_check_branch
    %1118 = sbr.rel (0) target = $region25
  $region24: #{_lambda_.14} parent=0 // pred_region
    _
  $region25: #{_lambda_.14} parent=0 // pred_fallthru
    _
  // Predicated region
  $region26: #{_lambda_.14} parent=0 // pred_check
    _
  $region27: #{_lambda_.14} parent=0 // pred_check_branch
    %1120 = sbr.rel (0) target = $region29
  $region28: #{_lambda_.14} parent=0 // pred_region
    _
  $region29: #{_lambda_.14} parent=0 // pred_fallthru
    _

// kernel: _lambda_.16
$region0: #{_lambda_.16}
  #allocation0 [shape = 'u32[]', space=smem, size = 0x4, offset = 0x4, fixed_abs, tag = 'smem constant byte address 0x4 - core index']
  #allocation1 [shape = 'u32[72,128]{1,0:T(1,128)}', space=vmem, size = 0x9000, scoped, tag = 'internal scratch']
  #allocation2 [shape = 'f32[32,16]{1,0:T(8,128)}', space=vmem, size = 0x4000, scoped, tag = 'scratch operand']
  %s0 = inlined_call_operand.vmem [shape: bf16[32,72], index: 0, kind: input, shape index: {}]
  %s1 = inlined_call_operand.vmem [shape: bf16[72,16], index: 1, kind: input, shape index: {}]
  %s2 = inlined_call_operand.vmem [shape: f32[1,16], index: 2, kind: input, shape index: {}]
  %s3 = inlined_call_operand.vmem [shape: bf16[32,16], index: 3, kind: output, shape index: {}]
  %s4 = sld [smem:[#allocation0]]
  $region30: #{_lambda_.16} parent=0
    _
  %s6 = ssub.s32 1, %s4
  %s7 = scalar_select 0, %s6, %s4
  // Predicated region
  $region2: #{_lambda_.16} parent=0 // pred_check
    _
  $region3: #{_lambda_.16} parent=0 // pred_check_branch
    %9 = sbr.rel (0) target = $region5
  $region4: #{_lambda_.16} parent=0 // pred_region
    _
  $region5: #{_lambda_.16} parent=0 // pred_fallthru
    _
  // Predicated region
  $region6: #{_lambda_.16} parent=0 // pred_check
    _
  $region7: #{_lambda_.16} parent=0 // pred_check_branch
    %11 = sbr.rel (0) target = $region9
  $region8: #{_lambda_.16} parent=0 // pred_region
    _
  $region9: #{_lambda_.16} parent=0 // pred_fallthru
    _
  // Predicated region
  $region10: #{_lambda_.16} parent=0 // pred_check
    _
  $region11: #{_lambda_.16} parent=0 // pred_check_branch
    %13 = sbr.rel (0) target = $region13
  $region12: #{_lambda_.16} parent=0 // pred_region
    _
  $region13: #{_lambda_.16} parent=0 // pred_fallthru
    _
  %p15 = scmp.eq.s32.totalorder 0, 0
  // Predicated region
  $region14: #{_lambda_.16} parent=0 // pred_check
    %p16 = pneg %p15
  $region15: #{_lambda_.16} parent=0 // pred_check_branch
    %18 = sbr.rel (%p16) target = $region17
  $region16: #{_lambda_.16} parent=0 // pred_region
    %vm19 = vcmask 130048
    %20 = vst.msk [vmem:[#allocation2] sm:$0xff] %vm19, 0.0
    %21 = vst.msk [vmem:[#allocation2 + $0x8] sm:$0xff] %vm19, 0.0
    %22 = vst.msk [vmem:[#allocation2 + $0x10] sm:$0xff] %vm19, 0.0
    %23 = vst.msk [vmem:[#allocation2 + $0x18] sm:$0xff] %vm19, 0.0
  $region17: #{_lambda_.16} parent=0 // pred_fallthru
    _
  %v24 = vld [vmem:[#allocation2] sm:$0xff]
  %v25 = vld [vmem:[#allocation2 + $0x8] sm:$0xff]
  %v26 = vld [vmem:[#allocation2 + $0x10] sm:$0xff]
  %v27 = vld [vmem:[#allocation2 + $0x18] sm:$0xff]
  %v28 = vld [vmem:[%s0] sm:$0xf]
  %v29 = vld [vmem:[%s0 + $0x4] sm:$0xf]
  %v30 = vld [vmem:[%s0 + $0x8] sm:$0xf]
  %v31 = vld [vmem:[%s0 + $0xc] sm:$0xf]
  %v32 = vld [vmem:[%s1] sm:$0xf]
  %v33 = vld [vmem:[%s1 + $0x4] sm:$0xf]
  %v34 = vld [vmem:[%s1 + $0x8] sm:$0xf]
  %v35 = vld [vmem:[%s1 + $0xc] sm:$0xf]
  %v36 = vld [vmem:[%s1 + $0x10] sm:$0xf]
  %v37 = vld [vmem:[%s1 + $0x14] sm:$0xf]
  %v38 = vld [vmem:[%s1 + $0x18] sm:$0xf]
  %v39 = vld [vmem:[%s1 + $0x1c] sm:$0xf]
  %v40 = vld [vmem:[%s1 + $0x20] sm:$0xf]
  %v45 = vunpack.c.l.b16 %v28
  %v46 = vunpack.c.l.b16 %v29
  %v47 = vunpack.c.l.b16 %v30
  %v48 = vunpack.c.l.b16 %v31
  %v49 = vpack.c.b16 %v46, %v45
  %v50 = vpack.c.b16 %v48, %v47
  %v60 = vunpack.c.l.b16 %v32
  %v61 = vunpack.c.l.b16 %v33
  %v62 = vunpack.c.l.b16 %v34
  %v63 = vunpack.c.l.b16 %v35
  %v64 = vunpack.c.l.b16 %v36
  %v65 = vunpack.c.l.b16 %v37
  %v66 = vunpack.c.l.b16 %v38
  %v67 = vunpack.c.l.b16 %v39
  %v68 = vunpack.c.l.b16 %v40
  %v69 = vpack.c.b16 %v61, %v60
  %v70 = vpack.c.b16 %v63, %v62
  %v71 = vpack.c.b16 %v65, %v64
  %v72 = vpack.c.b16 %v67, %v66
  %v73 = vpack.c.b16 %v68, %v68
  %vm78 = vcmask 588800
  %v80 = vsel %vm78, %v49, 0
  %v83 = vsel %vm78, %v50, 0
  %vm85 = vcmask 1043456
  %v87 = vsel %vm85, %v73, 0
  %89 = vmatpush.bf16.msra.mxu0 0
  %90 = vmatpush.bf16.msra.mxu0 0
  %91 = vmatpush.bf16.msra.mxu0 0
  %92 = vmatpush.bf16.msra.mxu0 %v87
  %93 = vmatpush.bf16.msra.mxu0 %v72
  %94 = vmatpush.bf16.msra.mxu0 %v71
  %95 = vmatpush.bf16.msra.mxu0 %v70
  %96 = vmatpush.bf16.msra.mxu0 %v69
  %97 = vmatmul.bf16.gmra.mxu0 %v80
  %v98 = vpop.f32.mrf.mxu0
  %v99 = vadd.f32 0.0, %v98
  %v100 = vpop.f32.mrf.mxu0
  %v101 = vadd.f32 0.0, %v100
  %102 = vmatmul.bf16.gmra.mxu0 %v83
  %v103 = vpop.f32.mrf.mxu0
  %v104 = vadd.f32 0.0, %v103
  %v105 = vpop.f32.mrf.mxu0
  %v106 = vadd.f32 0.0, %v105
  %107 = vdwg.mxu0
  %v108 = vadd.f32 %v24, %v99
  %v109 = vadd.f32 %v25, %v101
  %v110 = vadd.f32 %v26, %v104
  %v111 = vadd.f32 %v27, %v106
  %vm112 = vcmask 130048
  %113 = vst.msk [vmem:[#allocation2] sm:$0xff] %vm112, %v108
  %114 = vst.msk [vmem:[#allocation2 + $0x8] sm:$0xff] %vm112, %v109
  %115 = vst.msk [vmem:[#allocation2 + $0x10] sm:$0xff] %vm112, %v110
  %116 = vst.msk [vmem:[#allocation2 + $0x18] sm:$0xff] %vm112, %v111
  // Predicated region
  $region18: #{_lambda_.16} parent=0 // pred_check
    %p117 = pneg %p15
  $region19: #{_lambda_.16} parent=0 // pred_check_branch
    %119 = sbr.rel (%p117) target = $region21
  $region20: #{_lambda_.16} parent=0 // pred_region
    %v120 = vld [vmem:[#allocation2] sm:$0xff]
    %v121 = vld [vmem:[#allocation2 + $0x8] sm:$0xff]
    %v122 = vld [vmem:[#allocation2 + $0x10] sm:$0xff]
    %v123 = vld [vmem:[#allocation2 + $0x18] sm:$0xff]
    %v124 = vld [vmem:[%s2] sm:$0x1]
    %v126 = vperm.slane %v124, 0
    %v128 = vadd.f32 %v120, %v126
    %v129 = vadd.f32 %v121, %v126
    %v130 = vadd.f32 %v122, %v126
    %v131 = vadd.f32 %v123, %v126
    %v132 = vmax.f32 %v128, 0.0
    %v133 = vmax.f32 %v129, 0.0
    %v134 = vmax.f32 %v130, 0.0
    %v135 = vmax.f32 %v131, 0.0
    %v136 = vpack.c.bf16 %v132, %v132
    %v137 = vpack.c.bf16 %v133, %v133
    %v138 = vpack.c.bf16 %v134, %v134
    %v139 = vpack.c.bf16 %v135, %v135
    %vm140 = vcmask 125952
    %141 = vst.msk [vmem:[%s3] sm:$0xf] %vm140, %v136
    %142 = vst.msk [vmem:[%s3 + $0x4] sm:$0xf] %vm140, %v137
    %143 = vst.msk [vmem:[%s3 + $0x8] sm:$0xf] %vm140, %v138
    %144 = vst.msk [vmem:[%s3 + $0xc] sm:$0xf] %vm140, %v139
  $region21: #{_lambda_.16} parent=0 // pred_fallthru
    _
  // Predicated region
  $region22: #{_lambda_.16} parent=0 // pred_check
    _
  $region23: #{_lambda_.16} parent=0 // pred_check_branch
    %146 = sbr.rel (0) target = $region25
  $region24: #{_lambda_.16} parent=0 // pred_region
    _
  $region25: #{_lambda_.16} parent=0 // pred_fallthru
    _
  // Predicated region
  $region26: #{_lambda_.16} parent=0 // pred_check
    _
  $region27: #{_lambda_.16} parent=0 // pred_check_branch
    %148 = sbr.rel (0) target = $region29
  $region28: #{_lambda_.16} parent=0 // pred_region
    _
  $region29: #{_lambda_.16} parent=0 // pred_fallthru
    _

// kernel: _lambda_.17
$region0: #{_lambda_.17}
  #allocation0 [shape = 'u32[]', space=smem, size = 0x4, offset = 0x4, fixed_abs, tag = 'smem constant byte address 0x4 - core index']
  #allocation1 [shape = 'u32[72,128]{1,0:T(1,128)}', space=vmem, size = 0x9000, scoped, tag = 'internal scratch']
  #allocation2 [shape = 'f32[32,32]{1,0:T(8,128)}', space=vmem, size = 0x4000, scoped, tag = 'scratch operand']
  %s0 = inlined_call_operand.vmem [shape: bf16[32,144], index: 0, kind: input, shape index: {}]
  %s1 = inlined_call_operand.vmem [shape: bf16[144,32], index: 1, kind: input, shape index: {}]
  %s2 = inlined_call_operand.vmem [shape: f32[1,32], index: 2, kind: input, shape index: {}]
  %s3 = inlined_call_operand.vmem [shape: bf16[32,32], index: 3, kind: output, shape index: {}]
  %s4 = sld [smem:[#allocation0]]
  $region30: #{_lambda_.17} parent=0
    _
  %s6 = ssub.s32 1, %s4
  %s7 = scalar_select 0, %s6, %s4
  // Predicated region
  $region2: #{_lambda_.17} parent=0 // pred_check
    _
  $region3: #{_lambda_.17} parent=0 // pred_check_branch
    %9 = sbr.rel (0) target = $region5
  $region4: #{_lambda_.17} parent=0 // pred_region
    _
  $region5: #{_lambda_.17} parent=0 // pred_fallthru
    _
  // Predicated region
  $region6: #{_lambda_.17} parent=0 // pred_check
    _
  $region7: #{_lambda_.17} parent=0 // pred_check_branch
    %11 = sbr.rel (0) target = $region9
  $region8: #{_lambda_.17} parent=0 // pred_region
    _
  $region9: #{_lambda_.17} parent=0 // pred_fallthru
    _
  // Predicated region
  $region10: #{_lambda_.17} parent=0 // pred_check
    _
  $region11: #{_lambda_.17} parent=0 // pred_check_branch
    %13 = sbr.rel (0) target = $region13
  $region12: #{_lambda_.17} parent=0 // pred_region
    _
  $region13: #{_lambda_.17} parent=0 // pred_fallthru
    _
  %p15 = scmp.eq.s32.totalorder 0, 0
  // Predicated region
  $region14: #{_lambda_.17} parent=0 // pred_check
    %p16 = pneg %p15
  $region15: #{_lambda_.17} parent=0 // pred_check_branch
    %18 = sbr.rel (%p16) target = $region17
  $region16: #{_lambda_.17} parent=0 // pred_region
    %vm19 = vcmask 261120
    %20 = vst.msk [vmem:[#allocation2] sm:$0xff] %vm19, 0.0
    %21 = vst.msk [vmem:[#allocation2 + $0x8] sm:$0xff] %vm19, 0.0
    %22 = vst.msk [vmem:[#allocation2 + $0x10] sm:$0xff] %vm19, 0.0
    %23 = vst.msk [vmem:[#allocation2 + $0x18] sm:$0xff] %vm19, 0.0
  $region17: #{_lambda_.17} parent=0 // pred_fallthru
    _
  %v24 = vld [vmem:[#allocation2] sm:$0xff]
  %v25 = vld [vmem:[#allocation2 + $0x8] sm:$0xff]
  %v26 = vld [vmem:[#allocation2 + $0x10] sm:$0xff]
  %v27 = vld [vmem:[#allocation2 + $0x18] sm:$0xff]
  %v28 = vld [vmem:[%s0] sm:$0xff]
  %v29 = vld [vmem:[%s0 + $0x8] sm:$0xff]
  %v30 = vld [vmem:[%s0 + $0x10] sm:$0xff]
  %v31 = vld [vmem:[%s0 + $0x18] sm:$0xff]
  %v32 = vld [vmem:[%s1] sm:$0xf]
  %v33 = vld [vmem:[%s1 + $0x4] sm:$0xf]
  %v34 = vld [vmem:[%s1 + $0x8] sm:$0xf]
  %v35 = vld [vmem:[%s1 + $0xc] sm:$0xf]
  %v36 = vld [vmem:[%s1 + $0x10] sm:$0xf]
  %v37 = vld [vmem:[%s1 + $0x14] sm:$0xf]
  %v38 = vld [vmem:[%s1 + $0x18] sm:$0xf]
  %v39 = vld [vmem:[%s1 + $0x1c] sm:$0xf]
  %v40 = vld [vmem:[%s1 + $0x20] sm:$0xf]
  %v41 = vld [vmem:[%s1 + $0x24] sm:$0xf]
  %v42 = vld [vmem:[%s1 + $0x28] sm:$0xf]
  %v43 = vld [vmem:[%s1 + $0x2c] sm:$0xf]
  %v44 = vld [vmem:[%s1 + $0x30] sm:$0xf]
  %v45 = vld [vmem:[%s1 + $0x34] sm:$0xf]
  %v46 = vld [vmem:[%s1 + $0x38] sm:$0xf]
  %v47 = vld [vmem:[%s1 + $0x3c] sm:$0xf]
  %v48 = vld [vmem:[%s1 + $0x40] sm:$0xf]
  %v49 = vld [vmem:[%s1 + $0x44] sm:$0xf]
  %v54 = vunpack.c.l.b16 %v28
  %v55 = vunpack.c.h.b16 %v28
  %v56 = vunpack.c.l.b16 %v29
  %v57 = vunpack.c.h.b16 %v29
  %v58 = vunpack.c.l.b16 %v30
  %v59 = vunpack.c.h.b16 %v30
  %v60 = vunpack.c.l.b16 %v31
  %v61 = vunpack.c.h.b16 %v31
  %v62 = vpack.c.b16 %v56, %v54
  %v63 = vpack.c.b16 %v57, %v55
  %v64 = vpack.c.b16 %v60, %v58
  %v65 = vpack.c.b16 %v61, %v59
  %v86 = vunpack.c.l.b16 %v32
  %v87 = vunpack.c.l.b16 %v33
  %v88 = vunpack.c.l.b16 %v34
  %v89 = vunpack.c.l.b16 %v35
  %v90 = vunpack.c.l.b16 %v36
  %v91 = vunpack.c.l.b16 %v37
  %v92 = vunpack.c.l.b16 %v38
  %v93 = vunpack.c.l.b16 %v39
  %v94 = vunpack.c.l.b16 %v40
  %v95 = vunpack.c.l.b16 %v41
  %v96 = vunpack.c.l.b16 %v42
  %v97 = vunpack.c.l.b16 %v43
  %v98 = vunpack.c.l.b16 %v44
  %v99 = vunpack.c.l.b16 %v45
  %v100 = vunpack.c.l.b16 %v46
  %v101 = vunpack.c.l.b16 %v47
  %v102 = vunpack.c.l.b16 %v48
  %v103 = vunpack.c.l.b16 %v49
  %v104 = vpack.c.b16 %v87, %v86
  %v105 = vpack.c.b16 %v89, %v88
  %v106 = vpack.c.b16 %v91, %v90
  %v107 = vpack.c.b16 %v93, %v92
  %v108 = vpack.c.b16 %v95, %v94
  %v109 = vpack.c.b16 %v97, %v96
  %v110 = vpack.c.b16 %v99, %v98
  %v111 = vpack.c.b16 %v101, %v100
  %v112 = vpack.c.b16 %v103, %v102
  %vm122 = vcmask 130048
  %v124 = vsel %vm122, %v63, 0
  %v127 = vsel %vm122, %v65, 0
  %129 = vmatpush.bf16.msra.mxu0 %v111
  %130 = vmatpush.bf16.msra.mxu0 %v110
  %131 = vmatpush.bf16.msra.mxu0 %v109
  %132 = vmatpush.bf16.msra.mxu0 %v108
  %133 = vmatpush.bf16.msra.mxu0 %v107
  %134 = vmatpush.bf16.msra.mxu0 %v106
  %135 = vmatpush.bf16.msra.mxu0 %v105
  %136 = vmatpush.bf16.msra.mxu0 %v104
  %137 = vmatmul.bf16.gmra.mxu0 %v62
  %v138 = vpop.f32.mrf.mxu0
  %v139 = vadd.f32 0.0, %v138
  %v140 = vpop.f32.mrf.mxu0
  %v141 = vadd.f32 0.0, %v140
  %142 = vmatmul.bf16.gmra.mxu0 %v64
  %v143 = vpop.f32.mrf.mxu0
  %v144 = vadd.f32 0.0, %v143
  %v145 = vpop.f32.mrf.mxu0
  %v146 = vadd.f32 0.0, %v145
  %147 = vdwg.mxu0
  %148 = vmatpush.bf16.msra.mxu0 0
  %149 = vmatpush.bf16.msra.mxu0 0
  %150 = vmatpush.bf16.msra.mxu0 0
  %151 = vmatpush.bf16.msra.mxu0 0
  %152 = vmatpush.bf16.msra.mxu0 0
  %153 = vmatpush.bf16.msra.mxu0 0
  %154 = vmatpush.bf16.msra.mxu0 0
  %155 = vmatpush.bf16.msra.mxu0 %v112
  %156 = vmatmul.bf16.gmra.mxu0 %v124
  %v157 = vpop.f32.mrf.mxu0
  %v158 = vadd.f32 %v139, %v157
  %v159 = vpop.f32.mrf.mxu0
  %v160 = vadd.f32 %v141, %v159
  %161 = vmatmul.bf16.gmra.mxu0 %v127
  %v162 = vpop.f32.mrf.mxu0
  %v163 = vadd.f32 %v144, %v162
  %v164 = vpop.f32.mrf.mxu0
  %v165 = vadd.f32 %v146, %v164
  %166 = vdwg.mxu0
  %v167 = vadd.f32 %v24, %v158
  %v168 = vadd.f32 %v25, %v160
  %v169 = vadd.f32 %v26, %v163
  %v170 = vadd.f32 %v27, %v165
  %vm171 = vcmask 261120
  %172 = vst.msk [vmem:[#allocation2] sm:$0xff] %vm171, %v167
  %173 = vst.msk [vmem:[#allocation2 + $0x8] sm:$0xff] %vm171, %v168
  %174 = vst.msk [vmem:[#allocation2 + $0x10] sm:$0xff] %vm171, %v169
  %175 = vst.msk [vmem:[#allocation2 + $0x18] sm:$0xff] %vm171, %v170
  // Predicated region
  $region18: #{_lambda_.17} parent=0 // pred_check
    %p176 = pneg %p15
  $region19: #{_lambda_.17} parent=0 // pred_check_branch
    %178 = sbr.rel (%p176) target = $region21
  $region20: #{_lambda_.17} parent=0 // pred_region
    %v179 = vld [vmem:[#allocation2] sm:$0xff]
    %v180 = vld [vmem:[#allocation2 + $0x8] sm:$0xff]
    %v181 = vld [vmem:[#allocation2 + $0x10] sm:$0xff]
    %v182 = vld [vmem:[#allocation2 + $0x18] sm:$0xff]
    %v183 = vld [vmem:[%s2] sm:$0x1]
    %v185 = vperm.slane %v183, 0
    %v187 = vadd.f32 %v179, %v185
    %v188 = vadd.f32 %v180, %v185
    %v189 = vadd.f32 %v181, %v185
    %v190 = vadd.f32 %v182, %v185
    %v191 = vmax.f32 %v187, 0.0
    %v192 = vmax.f32 %v188, 0.0
    %v193 = vmax.f32 %v189, 0.0
    %v194 = vmax.f32 %v190, 0.0
    %v195 = vpack.c.bf16 %v191, %v191
    %v196 = vpack.c.bf16 %v192, %v192
    %v197 = vpack.c.bf16 %v193, %v193
    %v198 = vpack.c.bf16 %v194, %v194
    %vm199 = vcmask 257024
    %200 = vst.msk [vmem:[%s3] sm:$0xf] %vm199, %v195
    %201 = vst.msk [vmem:[%s3 + $0x4] sm:$0xf] %vm199, %v196
    %202 = vst.msk [vmem:[%s3 + $0x8] sm:$0xf] %vm199, %v197
    %203 = vst.msk [vmem:[%s3 + $0xc] sm:$0xf] %vm199, %v198
  $region21: #{_lambda_.17} parent=0 // pred_fallthru
    _
  // Predicated region
  $region22: #{_lambda_.17} parent=0 // pred_check
    _
  $region23: #{_lambda_.17} parent=0 // pred_check_branch
    %205 = sbr.rel (0) target = $region25
  $region24: #{_lambda_.17} parent=0 // pred_region
    _
  $region25: #{_lambda_.17} parent=0 // pred_fallthru
    _
  // Predicated region
  $region26: #{_lambda_.17} parent=0 // pred_check
    _
  $region27: #{_lambda_.17} parent=0 // pred_check_branch
    %207 = sbr.rel (0) target = $region29
  $region28: #{_lambda_.17} parent=0 // pred_region
    _
  $region29: #{_lambda_.17} parent=0 // pred_fallthru
    _

// kernel: _lambda_.20
$region0: #{_lambda_.20}
  #allocation0 [shape = 'u32[]', space=smem, size = 0x4, offset = 0x4, fixed_abs, tag = 'smem constant byte address 0x4 - core index']
  #allocation1 [shape = 'u32[72,128]{1,0:T(1,128)}', space=vmem, size = 0x9000, scoped, tag = 'internal scratch']
  #allocation2 [shape = 'f32[32,16]{1,0:T(8,128)}', space=vmem, size = 0x4000, scoped, tag = 'scratch operand']
  %s0 = inlined_call_operand.vmem [shape: bf16[32,288], index: 0, kind: input, shape index: {}]
  %s1 = inlined_call_operand.vmem [shape: bf16[288,16], index: 1, kind: input, shape index: {}]
  %s2 = inlined_call_operand.vmem [shape: f32[1,16], index: 2, kind: input, shape index: {}]
  %s3 = inlined_call_operand.vmem [shape: bf16[16,4], index: 3, kind: input, shape index: {}]
  %s4 = inlined_call_operand.vmem [shape: f32[1,4], index: 4, kind: input, shape index: {}]
  %s5 = inlined_call_operand.vmem [shape: f32[32,4], index: 5, kind: output, shape index: {}]
  %s6 = sld [smem:[#allocation0]]
  $region38: #{_lambda_.20} parent=0
    _
  %s8 = ssub.s32 1, %s6
  %s9 = scalar_select 0, %s8, %s6
  // Predicated region
  $region2: #{_lambda_.20} parent=0 // pred_check
    _
  $region3: #{_lambda_.20} parent=0 // pred_check_branch
    %11 = sbr.rel (0) target = $region5
  $region4: #{_lambda_.20} parent=0 // pred_region
    _
  $region5: #{_lambda_.20} parent=0 // pred_fallthru
    _
  // Predicated region
  $region6: #{_lambda_.20} parent=0 // pred_check
    _
  $region7: #{_lambda_.20} parent=0 // pred_check_branch
    %13 = sbr.rel (0) target = $region9
  $region8: #{_lambda_.20} parent=0 // pred_region
    _
  $region9: #{_lambda_.20} parent=0 // pred_fallthru
    _
  // Predicated region
  $region10: #{_lambda_.20} parent=0 // pred_check
    _
  $region11: #{_lambda_.20} parent=0 // pred_check_branch
    %15 = sbr.rel (0) target = $region13
  $region12: #{_lambda_.20} parent=0 // pred_region
    _
  $region13: #{_lambda_.20} parent=0 // pred_fallthru
    _
  // Predicated region
  $region14: #{_lambda_.20} parent=0 // pred_check
    _
  $region15: #{_lambda_.20} parent=0 // pred_check_branch
    %17 = sbr.rel (0) target = $region17
  $region16: #{_lambda_.20} parent=0 // pred_region
    _
  $region17: #{_lambda_.20} parent=0 // pred_fallthru
    _
  // Predicated region
  $region18: #{_lambda_.20} parent=0 // pred_check
    _
  $region19: #{_lambda_.20} parent=0 // pred_check_branch
    %19 = sbr.rel (0) target = $region21
  $region20: #{_lambda_.20} parent=0 // pred_region
    _
  $region21: #{_lambda_.20} parent=0 // pred_fallthru
    _
  %p21 = scmp.eq.s32.totalorder 0, 0
  // Predicated region
  $region22: #{_lambda_.20} parent=0 // pred_check
    %p22 = pneg %p21
  $region23: #{_lambda_.20} parent=0 // pred_check_branch
    %24 = sbr.rel (%p22) target = $region25
  $region24: #{_lambda_.20} parent=0 // pred_region
    %vm25 = vcmask 130048
    %26 = vst.msk [vmem:[#allocation2] sm:$0xff] %vm25, 0.0
    %27 = vst.msk [vmem:[#allocation2 + $0x8] sm:$0xff] %vm25, 0.0
    %28 = vst.msk [vmem:[#allocation2 + $0x10] sm:$0xff] %vm25, 0.0
    %29 = vst.msk [vmem:[#allocation2 + $0x18] sm:$0xff] %vm25, 0.0
  $region25: #{_lambda_.20} parent=0 // pred_fallthru
    _
  %v30 = vld [vmem:[#allocation2] sm:$0xff]
  %v31 = vld [vmem:[#allocation2 + $0x8] sm:$0xff]
  %v32 = vld [vmem:[#allocation2 + $0x10] sm:$0xff]
  %v33 = vld [vmem:[#allocation2 + $0x18] sm:$0xff]
  %v34 = vld [vmem:[%s0] sm:$0xff]
  %v35 = vld [vmem:[%s0 + $0x8] sm:$0xf]
  %v36 = vld [vmem:[%s0 + $0xc] sm:$0xff]
  %v37 = vld [vmem:[%s0 + $0x14] sm:$0xf]
  %v38 = vld [vmem:[%s0 + $0x18] sm:$0xff]
  %v39 = vld [vmem:[%s0 + $0x20] sm:$0xf]
  %v40 = vld [vmem:[%s0 + $0x24] sm:$0xff]
  %v41 = vld [vmem:[%s0 + $0x2c] sm:$0xf]
  %v42 = vld [vmem:[%s1] sm:$0xf]
  %v43 = vld [vmem:[%s1 + $0x4] sm:$0xf]
  %v44 = vld [vmem:[%s1 + $0x8] sm:$0xf]
  %v45 = vld [vmem:[%s1 + $0xc] sm:$0xf]
  %v46 = vld [vmem:[%s1 + $0x10] sm:$0xf]
  %v47 = vld [vmem:[%s1 + $0x14] sm:$0xf]
  %v48 = vld [vmem:[%s1 + $0x18] sm:$0xf]
  %v49 = vld [vmem:[%s1 + $0x1c] sm:$0xf]
  %v50 = vld [vmem:[%s1 + $0x20] sm:$0xf]
  %v51 = vld [vmem:[%s1 + $0x24] sm:$0xf]
  %v52 = vld [vmem:[%s1 + $0x28] sm:$0xf]
  %v53 = vld [vmem:[%s1 + $0x2c] sm:$0xf]
  %v54 = vld [vmem:[%s1 + $0x30] sm:$0xf]
  %v55 = vld [vmem:[%s1 + $0x34] sm:$0xf]
  %v56 = vld [vmem:[%s1 + $0x38] sm:$0xf]
  %v57 = vld [vmem:[%s1 + $0x3c] sm:$0xf]
  %v58 = vld [vmem:[%s1 + $0x40] sm:$0xf]
  %v59 = vld [vmem:[%s1 + $0x44] sm:$0xf]
  %v60 = vld [vmem:[%s1 + $0x48] sm:$0xf]
  %v61 = vld [vmem:[%s1 + $0x4c] sm:$0xf]
  %v62 = vld [vmem:[%s1 + $0x50] sm:$0xf]
  %v63 = vld [vmem:[%s1 + $0x54] sm:$0xf]
  %v64 = vld [vmem:[%s1 + $0x58] sm:$0xf]
  %v65 = vld [vmem:[%s1 + $0x5c] sm:$0xf]
  %v66 = vld [vmem:[%s1 + $0x60] sm:$0xf]
  %v67 = vld [vmem:[%s1 + $0x64] sm:$0xf]
  %v68 = vld [vmem:[%s1 + $0x68] sm:$0xf]
  %v69 = vld [vmem:[%s1 + $0x6c] sm:$0xf]
  %v70 = vld [vmem:[%s1 + $0x70] sm:$0xf]
  %v71 = vld [vmem:[%s1 + $0x74] sm:$0xf]
  %v72 = vld [vmem:[%s1 + $0x78] sm:$0xf]
  %v73 = vld [vmem:[%s1 + $0x7c] sm:$0xf]
  %v74 = vld [vmem:[%s1 + $0x80] sm:$0xf]
  %v75 = vld [vmem:[%s1 + $0x84] sm:$0xf]
  %v76 = vld [vmem:[%s1 + $0x88] sm:$0xf]
  %v77 = vld [vmem:[%s1 + $0x8c] sm:$0xf]
  %v86 = vunpack.c.l.b16 %v34
  %v87 = vunpack.c.h.b16 %v34
  %v88 = vunpack.c.l.b16 %v35
  %v89 = vunpack.c.l.b16 %v36
  %v90 = vunpack.c.h.b16 %v36
  %v91 = vunpack.c.l.b16 %v37
  %v92 = vunpack.c.l.b16 %v38
  %v93 = vunpack.c.h.b16 %v38
  %v94 = vunpack.c.l.b16 %v39
  %v95 = vunpack.c.l.b16 %v40
  %v96 = vunpack.c.h.b16 %v40
  %v97 = vunpack.c.l.b16 %v41
  %v98 = vpack.c.b16 %v89, %v86
  %v99 = vpack.c.b16 %v90, %v87
  %v100 = vpack.c.b16 %v91, %v88
  %v101 = vpack.c.b16 %v95, %v92
  %v102 = vpack.c.b16 %v96, %v93
  %v103 = vpack.c.b16 %v97, %v94
  %v144 = vunpack.c.l.b16 %v42
  %v145 = vunpack.c.l.b16 %v43
  %v146 = vunpack.c.l.b16 %v44
  %v147 = vunpack.c.l.b16 %v45
  %v148 = vunpack.c.l.b16 %v46
  %v149 = vunpack.c.l.b16 %v47
  %v150 = vunpack.c.l.b16 %v48
  %v151 = vunpack.c.l.b16 %v49
  %v152 = vunpack.c.l.b16 %v50
  %v153 = vunpack.c.l.b16 %v51
  %v154 = vunpack.c.l.b16 %v52
  %v155 = vunpack.c.l.b16 %v53
  %v156 = vunpack.c.l.b16 %v54
  %v157 = vunpack.c.l.b16 %v55
  %v158 = vunpack.c.l.b16 %v56
  %v159 = vunpack.c.l.b16 %v57
  %v160 = vunpack.c.l.b16 %v58
  %v161 = vunpack.c.l.b16 %v59
  %v162 = vunpack.c.l.b16 %v60
  %v163 = vunpack.c.l.b16 %v61
  %v164 = vunpack.c.l.b16 %v62
  %v165 = vunpack.c.l.b16 %v63
  %v166 = vunpack.c.l.b16 %v64
  %v167 = vunpack.c.l.b16 %v65
  %v168 = vunpack.c.l.b16 %v66
  %v169 = vunpack.c.l.b16 %v67
  %v170 = vunpack.c.l.b16 %v68
  %v171 = vunpack.c.l.b16 %v69
  %v172 = vunpack.c.l.b16 %v70
  %v173 = vunpack.c.l.b16 %v71
  %v174 = vunpack.c.l.b16 %v72
  %v175 = vunpack.c.l.b16 %v73
  %v176 = vunpack.c.l.b16 %v74
  %v177 = vunpack.c.l.b16 %v75
  %v178 = vunpack.c.l.b16 %v76
  %v179 = vunpack.c.l.b16 %v77
  %v180 = vpack.c.b16 %v145, %v144
  %v181 = vpack.c.b16 %v147, %v146
  %v182 = vpack.c.b16 %v149, %v148
  %v183 = vpack.c.b16 %v151, %v150
  %v184 = vpack.c.b16 %v153, %v152
  %v185 = vpack.c.b16 %v155, %v154
  %v186 = vpack.c.b16 %v157, %v156
  %v187 = vpack.c.b16 %v159, %v158
  %v188 = vpack.c.b16 %v161, %v160
  %v189 = vpack.c.b16 %v163, %v162
  %v190 = vpack.c.b16 %v165, %v164
  %v191 = vpack.c.b16 %v167, %v166
  %v192 = vpack.c.b16 %v169, %v168
  %v193 = vpack.c.b16 %v171, %v170
  %v194 = vpack.c.b16 %v173, %v172
  %v195 = vpack.c.b16 %v175, %v174
  %v196 = vpack.c.b16 %v177, %v176
  %v197 = vpack.c.b16 %v179, %v178
  %vm216 = vcmask 261120
  %v218 = vsel %vm216, %v100, 0
  %v221 = vsel %vm216, %v103, 0
  %223 = vmatpush.bf16.msra.mxu0 %v187
  %224 = vmatpush.bf16.msra.mxu0 %v186
  %225 = vmatpush.bf16.msra.mxu0 %v185
  %226 = vmatpush.bf16.msra.mxu0 %v184
  %227 = vmatpush.bf16.msra.mxu0 %v183
  %228 = vmatpush.bf16.msra.mxu0 %v182
  %229 = vmatpush.bf16.msra.mxu0 %v181
  %230 = vmatpush.bf16.msra.mxu0 %v180
  %231 = vmatmul.bf16.gmra.mxu0 %v98
  %v232 = vpop.f32.mrf.mxu0
  %v233 = vadd.f32 0.0, %v232
  %v234 = vpop.f32.mrf.mxu0
  %v235 = vadd.f32 0.0, %v234
  %236 = vmatmul.bf16.gmra.mxu0 %v101
  %v237 = vpop.f32.mrf.mxu0
  %v238 = vadd.f32 0.0, %v237
  %v239 = vpop.f32.mrf.mxu0
  %v240 = vadd.f32 0.0, %v239
  %241 = vdwg.mxu0
  %242 = vmatpush.bf16.msra.mxu0 %v195
  %243 = vmatpush.bf16.msra.mxu0 %v194
  %244 = vmatpush.bf16.msra.mxu0 %v193
  %245 = vmatpush.bf16.msra.mxu0 %v192
  %246 = vmatpush.bf16.msra.mxu0 %v191
  %247 = vmatpush.bf16.msra.mxu0 %v190
  %248 = vmatpush.bf16.msra.mxu0 %v189
  %249 = vmatpush.bf16.msra.mxu0 %v188
  %250 = vmatmul.bf16.gmra.mxu0 %v99
  %v251 = vpop.f32.mrf.mxu0
  %v252 = vadd.f32 %v233, %v251
  %v253 = vpop.f32.mrf.mxu0
  %v254 = vadd.f32 %v235, %v253
  %255 = vmatmul.bf16.gmra.mxu0 %v102
  %v256 = vpop.f32.mrf.mxu0
  %v257 = vadd.f32 %v238, %v256
  %v258 = vpop.f32.mrf.mxu0
  %v259 = vadd.f32 %v240, %v258
  %260 = vdwg.mxu0
  %261 = vmatpush.bf16.msra.mxu0 0
  %262 = vmatpush.bf16.msra.mxu0 0
  %263 = vmatpush.bf16.msra.mxu0 0
  %264 = vmatpush.bf16.msra.mxu0 0
  %265 = vmatpush.bf16.msra.mxu0 0
  %266 = vmatpush.bf16.msra.mxu0 0
  %267 = vmatpush.bf16.msra.mxu0 %v197
  %268 = vmatpush.bf16.msra.mxu0 %v196
  %269 = vmatmul.bf16.gmra.mxu0 %v218
  %v270 = vpop.f32.mrf.mxu0
  %v271 = vadd.f32 %v252, %v270
  %v272 = vpop.f32.mrf.mxu0
  %v273 = vadd.f32 %v254, %v272
  %274 = vmatmul.bf16.gmra.mxu0 %v221
  %v275 = vpop.f32.mrf.mxu0
  %v276 = vadd.f32 %v257, %v275
  %v277 = vpop.f32.mrf.mxu0
  %v278 = vadd.f32 %v259, %v277
  %279 = vdwg.mxu0
  %v280 = vadd.f32 %v30, %v271
  %v281 = vadd.f32 %v31, %v273
  %v282 = vadd.f32 %v32, %v276
  %v283 = vadd.f32 %v33, %v278
  %vm284 = vcmask 130048
  %285 = vst.msk [vmem:[#allocation2] sm:$0xff] %vm284, %v280
  %286 = vst.msk [vmem:[#allocation2 + $0x8] sm:$0xff] %vm284, %v281
  %287 = vst.msk [vmem:[#allocation2 + $0x10] sm:$0xff] %vm284, %v282
  %288 = vst.msk [vmem:[#allocation2 + $0x18] sm:$0xff] %vm284, %v283
  // Predicated region
  $region26: #{_lambda_.20} parent=0 // pred_check
    %p289 = pneg %p21
  $region27: #{_lambda_.20} parent=0 // pred_check_branch
    %291 = sbr.rel (%p289) target = $region29
  $region28: #{_lambda_.20} parent=0 // pred_region
    %v292 = vld [vmem:[#allocation2] sm:$0xff]
    %v293 = vld [vmem:[#allocation2 + $0x8] sm:$0xff]
    %v294 = vld [vmem:[#allocation2 + $0x10] sm:$0xff]
    %v295 = vld [vmem:[#allocation2 + $0x18] sm:$0xff]
    %v296 = vld [vmem:[%s2] sm:$0x1]
    %v298 = vperm.slane %v296, 0
    %v300 = vadd.f32 %v292, %v298
    %v301 = vadd.f32 %v293, %v298
    %v302 = vadd.f32 %v294, %v298
    %v303 = vadd.f32 %v295, %v298
    %v304 = vmax.f32 %v300, 0.0
    %v305 = vmax.f32 %v301, 0.0
    %v306 = vmax.f32 %v302, 0.0
    %v307 = vmax.f32 %v303, 0.0
    %v308 = vpack.c.bf16 %v305, %v304
    %v309 = vpack.c.bf16 %v307, %v306
    %v310 = vld [vmem:[%s3] sm:$0xf]
    %v311 = vld [vmem:[%s3 + $0x4] sm:$0xf]
    %v312 = vld [vmem:[%s4] sm:$0x1]
    %v314 = vperm.slane %v312, 0
    %v318 = vunpack.c.l.b16 %v310
    %v319 = vunpack.c.l.b16 %v311
    %v320 = vpack.c.b16 %v319, %v318
    %v323 = vsel %vm284, %v308, 0
    %v326 = vsel %vm284, %v309, 0
    %328 = vmatpush.bf16.msra.mxu0 0
    %329 = vmatpush.bf16.msra.mxu0 0
    %330 = vmatpush.bf16.msra.mxu0 0
    %331 = vmatpush.bf16.msra.mxu0 0
    %332 = vmatpush.bf16.msra.mxu0 0
    %333 = vmatpush.bf16.msra.mxu0 0
    %334 = vmatpush.bf16.msra.mxu0 0
    %335 = vmatpush.bf16.msra.mxu0 %v320
    %336 = vmatmul.bf16.gmra.mxu0 %v323
    %v337 = vpop.f32.mrf.mxu0
    %v338 = vadd.f32 %v314, %v337
    %v339 = vpop.f32.mrf.mxu0
    %v340 = vadd.f32 %v314, %v339
    %341 = vmatmul.bf16.gmra.mxu0 %v326
    %v342 = vpop.f32.mrf.mxu0
    %v343 = vadd.f32 %v314, %v342
    %v344 = vpop.f32.mrf.mxu0
    %v345 = vadd.f32 %v314, %v344
    %346 = vdwg.mxu0
    %vm347 = vcmask 31744
    %348 = vst.msk [vmem:[%s5] sm:$0xff] %vm347, %v338
    %349 = vst.msk [vmem:[%s5 + $0x8] sm:$0xff] %vm347, %v340
    %350 = vst.msk [vmem:[%s5 + $0x10] sm:$0xff] %vm347, %v343
    %351 = vst.msk [vmem:[%s5 + $0x18] sm:$0xff] %vm347, %v345
  $region29: #{_lambda_.20} parent=0 // pred_fallthru
    _
  // Predicated region
  $region30: #{_lambda_.20} parent=0 // pred_check
    _
  $region31: #{_lambda_.20} parent=0 // pred_check_branch
    %353 = sbr.rel (0) target = $region33
  $region32: #{_lambda_.20} parent=0 // pred_region
    _
  $region33: #{_lambda_.20} parent=0 // pred_fallthru
    _
  // Predicated region
  $region34: #{_lambda_.20} parent=0 // pred_check
    _
  $region35: #{_lambda_.20} parent=0 // pred_check_branch
    %355 = sbr.rel (0) target = $region37
  $region36: #{_lambda_.20} parent=0 // pred_region
    _
  $region37: #{_lambda_.20} parent=0 // pred_fallthru
    _

// kernel: _lambda_.18
$region0: #{_lambda_.18}
  #allocation0 [shape = 'u32[]', space=smem, size = 0x4, offset = 0x4, fixed_abs, tag = 'smem constant byte address 0x4 - core index']
  #allocation1 [shape = 'u32[72,128]{1,0:T(1,128)}', space=vmem, size = 0x9000, scoped, tag = 'internal scratch']
  #allocation2 [shape = 'f32[32,64]{1,0:T(8,128)}', space=vmem, size = 0x4000, scoped, tag = 'scratch operand']
  %s0 = inlined_call_operand.vmem [shape: bf16[32,288], index: 0, kind: input, shape index: {}]
  %s1 = inlined_call_operand.vmem [shape: bf16[288,64], index: 1, kind: input, shape index: {}]
  %s2 = inlined_call_operand.vmem [shape: f32[1,64], index: 2, kind: input, shape index: {}]
  %s3 = inlined_call_operand.vmem [shape: bf16[32,64], index: 3, kind: output, shape index: {}]
  %s4 = sld [smem:[#allocation0]]
  $region30: #{_lambda_.18} parent=0
    _
  %s6 = ssub.s32 1, %s4
  %s7 = scalar_select 0, %s6, %s4
  // Predicated region
  $region2: #{_lambda_.18} parent=0 // pred_check
    _
  $region3: #{_lambda_.18} parent=0 // pred_check_branch
    %9 = sbr.rel (0) target = $region5
  $region4: #{_lambda_.18} parent=0 // pred_region
    _
  $region5: #{_lambda_.18} parent=0 // pred_fallthru
    _
  // Predicated region
  $region6: #{_lambda_.18} parent=0 // pred_check
    _
  $region7: #{_lambda_.18} parent=0 // pred_check_branch
    %11 = sbr.rel (0) target = $region9
  $region8: #{_lambda_.18} parent=0 // pred_region
    _
  $region9: #{_lambda_.18} parent=0 // pred_fallthru
    _
  // Predicated region
  $region10: #{_lambda_.18} parent=0 // pred_check
    _
  $region11: #{_lambda_.18} parent=0 // pred_check_branch
    %13 = sbr.rel (0) target = $region13
  $region12: #{_lambda_.18} parent=0 // pred_region
    _
  $region13: #{_lambda_.18} parent=0 // pred_fallthru
    _
  %p15 = scmp.eq.s32.totalorder 0, 0
  // Predicated region
  $region14: #{_lambda_.18} parent=0 // pred_check
    %p16 = pneg %p15
  $region15: #{_lambda_.18} parent=0 // pred_check_branch
    %18 = sbr.rel (%p16) target = $region17
  $region16: #{_lambda_.18} parent=0 // pred_region
    %vm19 = vcmask 523264
    %20 = vst.msk [vmem:[#allocation2] sm:$0xff] %vm19, 0.0
    %21 = vst.msk [vmem:[#allocation2 + $0x8] sm:$0xff] %vm19, 0.0
    %22 = vst.msk [vmem:[#allocation2 + $0x10] sm:$0xff] %vm19, 0.0
    %23 = vst.msk [vmem:[#allocation2 + $0x18] sm:$0xff] %vm19, 0.0
  $region17: #{_lambda_.18} parent=0 // pred_fallthru
    _
  %v24 = vld [vmem:[#allocation2] sm:$0xff]
  %v25 = vld [vmem:[#allocation2 + $0x8] sm:$0xff]
  %v26 = vld [vmem:[#allocation2 + $0x10] sm:$0xff]
  %v27 = vld [vmem:[#allocation2 + $0x18] sm:$0xff]
  %v28 = vld [vmem:[%s0] sm:$0xff]
  %v29 = vld [vmem:[%s0 + $0x8] sm:$0xf]
  %v30 = vld [vmem:[%s0 + $0xc] sm:$0xff]
  %v31 = vld [vmem:[%s0 + $0x14] sm:$0xf]
  %v32 = vld [vmem:[%s0 + $0x18] sm:$0xff]
  %v33 = vld [vmem:[%s0 + $0x20] sm:$0xf]
  %v34 = vld [vmem:[%s0 + $0x24] sm:$0xff]
  %v35 = vld [vmem:[%s0 + $0x2c] sm:$0xf]
  %v36 = vld [vmem:[%s1] sm:$0xf]
  %v37 = vld [vmem:[%s1 + $0x4] sm:$0xf]
  %v38 = vld [vmem:[%s1 + $0x8] sm:$0xf]
  %v39 = vld [vmem:[%s1 + $0xc] sm:$0xf]
  %v40 = vld [vmem:[%s1 + $0x10] sm:$0xf]
  %v41 = vld [vmem:[%s1 + $0x14] sm:$0xf]
  %v42 = vld [vmem:[%s1 + $0x18] sm:$0xf]
  %v43 = vld [vmem:[%s1 + $0x1c] sm:$0xf]
  %v44 = vld [vmem:[%s1 + $0x20] sm:$0xf]
  %v45 = vld [vmem:[%s1 + $0x24] sm:$0xf]
  %v46 = vld [vmem:[%s1 + $0x28] sm:$0xf]
  %v47 = vld [vmem:[%s1 + $0x2c] sm:$0xf]
  %v48 = vld [vmem:[%s1 + $0x30] sm:$0xf]
  %v49 = vld [vmem:[%s1 + $0x34] sm:$0xf]
  %v50 = vld [vmem:[%s1 + $0x38] sm:$0xf]
  %v51 = vld [vmem:[%s1 + $0x3c] sm:$0xf]
  %v52 = vld [vmem:[%s1 + $0x40] sm:$0xf]
  %v53 = vld [vmem:[%s1 + $0x44] sm:$0xf]
  %v54 = vld [vmem:[%s1 + $0x48] sm:$0xf]
  %v55 = vld [vmem:[%s1 + $0x4c] sm:$0xf]
  %v56 = vld [vmem:[%s1 + $0x50] sm:$0xf]
  %v57 = vld [vmem:[%s1 + $0x54] sm:$0xf]
  %v58 = vld [vmem:[%s1 + $0x58] sm:$0xf]
  %v59 = vld [vmem:[%s1 + $0x5c] sm:$0xf]
  %v60 = vld [vmem:[%s1 + $0x60] sm:$0xf]
  %v61 = vld [vmem:[%s1 + $0x64] sm:$0xf]
  %v62 = vld [vmem:[%s1 + $0x68] sm:$0xf]
  %v63 = vld [vmem:[%s1 + $0x6c] sm:$0xf]
  %v64 = vld [vmem:[%s1 + $0x70] sm:$0xf]
  %v65 = vld [vmem:[%s1 + $0x74] sm:$0xf]
  %v66 = vld [vmem:[%s1 + $0x78] sm:$0xf]
  %v67 = vld [vmem:[%s1 + $0x7c] sm:$0xf]
  %v68 = vld [vmem:[%s1 + $0x80] sm:$0xf]
  %v69 = vld [vmem:[%s1 + $0x84] sm:$0xf]
  %v70 = vld [vmem:[%s1 + $0x88] sm:$0xf]
  %v71 = vld [vmem:[%s1 + $0x8c] sm:$0xf]
  %v80 = vunpack.c.l.b16 %v28
  %v81 = vunpack.c.h.b16 %v28
  %v82 = vunpack.c.l.b16 %v29
  %v83 = vunpack.c.l.b16 %v30
  %v84 = vunpack.c.h.b16 %v30
  %v85 = vunpack.c.l.b16 %v31
  %v86 = vunpack.c.l.b16 %v32
  %v87 = vunpack.c.h.b16 %v32
  %v88 = vunpack.c.l.b16 %v33
  %v89 = vunpack.c.l.b16 %v34
  %v90 = vunpack.c.h.b16 %v34
  %v91 = vunpack.c.l.b16 %v35
  %v92 = vpack.c.b16 %v83, %v80
  %v93 = vpack.c.b16 %v84, %v81
  %v94 = vpack.c.b16 %v85, %v82
  %v95 = vpack.c.b16 %v89, %v86
  %v96 = vpack.c.b16 %v90, %v87
  %v97 = vpack.c.b16 %v91, %v88
  %v138 = vunpack.c.l.b16 %v36
  %v139 = vunpack.c.l.b16 %v37
  %v140 = vunpack.c.l.b16 %v38
  %v141 = vunpack.c.l.b16 %v39
  %v142 = vunpack.c.l.b16 %v40
  %v143 = vunpack.c.l.b16 %v41
  %v144 = vunpack.c.l.b16 %v42
  %v145 = vunpack.c.l.b16 %v43
  %v146 = vunpack.c.l.b16 %v44
  %v147 = vunpack.c.l.b16 %v45
  %v148 = vunpack.c.l.b16 %v46
  %v149 = vunpack.c.l.b16 %v47
  %v150 = vunpack.c.l.b16 %v48
  %v151 = vunpack.c.l.b16 %v49
  %v152 = vunpack.c.l.b16 %v50
  %v153 = vunpack.c.l.b16 %v51
  %v154 = vunpack.c.l.b16 %v52
  %v155 = vunpack.c.l.b16 %v53
  %v156 = vunpack.c.l.b16 %v54
  %v157 = vunpack.c.l.b16 %v55
  %v158 = vunpack.c.l.b16 %v56
  %v159 = vunpack.c.l.b16 %v57
  %v160 = vunpack.c.l.b16 %v58
  %v161 = vunpack.c.l.b16 %v59
  %v162 = vunpack.c.l.b16 %v60
  %v163 = vunpack.c.l.b16 %v61
  %v164 = vunpack.c.l.b16 %v62
  %v165 = vunpack.c.l.b16 %v63
  %v166 = vunpack.c.l.b16 %v64
  %v167 = vunpack.c.l.b16 %v65
  %v168 = vunpack.c.l.b16 %v66
  %v169 = vunpack.c.l.b16 %v67
  %v170 = vunpack.c.l.b16 %v68
  %v171 = vunpack.c.l.b16 %v69
  %v172 = vunpack.c.l.b16 %v70
  %v173 = vunpack.c.l.b16 %v71
  %v174 = vpack.c.b16 %v139, %v138
  %v175 = vpack.c.b16 %v141, %v140
  %v176 = vpack.c.b16 %v143, %v142
  %v177 = vpack.c.b16 %v145, %v144
  %v178 = vpack.c.b16 %v147, %v146
  %v179 = vpack.c.b16 %v149, %v148
  %v180 = vpack.c.b16 %v151, %v150
  %v181 = vpack.c.b16 %v153, %v152
  %v182 = vpack.c.b16 %v155, %v154
  %v183 = vpack.c.b16 %v157, %v156
  %v184 = vpack.c.b16 %v159, %v158
  %v185 = vpack.c.b16 %v161, %v160
  %v186 = vpack.c.b16 %v163, %v162
  %v187 = vpack.c.b16 %v165, %v164
  %v188 = vpack.c.b16 %v167, %v166
  %v189 = vpack.c.b16 %v169, %v168
  %v190 = vpack.c.b16 %v171, %v170
  %v191 = vpack.c.b16 %v173, %v172
  %vm210 = vcmask 261120
  %v212 = vsel %vm210, %v94, 0
  %v215 = vsel %vm210, %v97, 0
  %217 = vmatpush.bf16.msra.mxu0 %v181
  %218 = vmatpush.bf16.msra.mxu0 %v180
  %219 = vmatpush.bf16.msra.mxu0 %v179
  %220 = vmatpush.bf16.msra.mxu0 %v178
  %221 = vmatpush.bf16.msra.mxu0 %v177
  %222 = vmatpush.bf16.msra.mxu0 %v176
  %223 = vmatpush.bf16.msra.mxu0 %v175
  %224 = vmatpush.bf16.msra.mxu0 %v174
  %225 = vmatmul.bf16.gmra.mxu0 %v92
  %v226 = vpop.f32.mrf.mxu0
  %v227 = vadd.f32 0.0, %v226
  %v228 = vpop.f32.mrf.mxu0
  %v229 = vadd.f32 0.0, %v228
  %230 = vmatmul.bf16.gmra.mxu0 %v95
  %v231 = vpop.f32.mrf.mxu0
  %v232 = vadd.f32 0.0, %v231
  %v233 = vpop.f32.mrf.mxu0
  %v234 = vadd.f32 0.0, %v233
  %235 = vdwg.mxu0
  %236 = vmatpush.bf16.msra.mxu0 %v189
  %237 = vmatpush.bf16.msra.mxu0 %v188
  %238 = vmatpush.bf16.msra.mxu0 %v187
  %239 = vmatpush.bf16.msra.mxu0 %v186
  %240 = vmatpush.bf16.msra.mxu0 %v185
  %241 = vmatpush.bf16.msra.mxu0 %v184
  %242 = vmatpush.bf16.msra.mxu0 %v183
  %243 = vmatpush.bf16.msra.mxu0 %v182
  %244 = vmatmul.bf16.gmra.mxu0 %v93
  %v245 = vpop.f32.mrf.mxu0
  %v246 = vadd.f32 %v227, %v245
  %v247 = vpop.f32.mrf.mxu0
  %v248 = vadd.f32 %v229, %v247
  %249 = vmatmul.bf16.gmra.mxu0 %v96
  %v250 = vpop.f32.mrf.mxu0
  %v251 = vadd.f32 %v232, %v250
  %v252 = vpop.f32.mrf.mxu0
  %v253 = vadd.f32 %v234, %v252
  %254 = vdwg.mxu0
  %255 = vmatpush.bf16.msra.mxu0 0
  %256 = vmatpush.bf16.msra.mxu0 0
  %257 = vmatpush.bf16.msra.mxu0 0
  %258 = vmatpush.bf16.msra.mxu0 0
  %259 = vmatpush.bf16.msra.mxu0 0
  %260 = vmatpush.bf16.msra.mxu0 0
  %261 = vmatpush.bf16.msra.mxu0 %v191
  %262 = vmatpush.bf16.msra.mxu0 %v190
  %263 = vmatmul.bf16.gmra.mxu0 %v212
  %v264 = vpop.f32.mrf.mxu0
  %v265 = vadd.f32 %v246, %v264
  %v266 = vpop.f32.mrf.mxu0
  %v267 = vadd.f32 %v248, %v266
  %268 = vmatmul.bf16.gmra.mxu0 %v215
  %v269 = vpop.f32.mrf.mxu0
  %v270 = vadd.f32 %v251, %v269
  %v271 = vpop.f32.mrf.mxu0
  %v272 = vadd.f32 %v253, %v271
  %273 = vdwg.mxu0
  %v274 = vadd.f32 %v24, %v265
  %v275 = vadd.f32 %v25, %v267
  %v276 = vadd.f32 %v26, %v270
  %v277 = vadd.f32 %v27, %v272
  %vm278 = vcmask 523264
  %279 = vst.msk [vmem:[#allocation2] sm:$0xff] %vm278, %v274
  %280 = vst.msk [vmem:[#allocation2 + $0x8] sm:$0xff] %vm278, %v275
  %281 = vst.msk [vmem:[#allocation2 + $0x10] sm:$0xff] %vm278, %v276
  %282 = vst.msk [vmem:[#allocation2 + $0x18] sm:$0xff] %vm278, %v277
  // Predicated region
  $region18: #{_lambda_.18} parent=0 // pred_check
    %p283 = pneg %p15
  $region19: #{_lambda_.18} parent=0 // pred_check_branch
    %285 = sbr.rel (%p283) target = $region21
  $region20: #{_lambda_.18} parent=0 // pred_region
    %v286 = vld [vmem:[#allocation2] sm:$0xff]
    %v287 = vld [vmem:[#allocation2 + $0x8] sm:$0xff]
    %v288 = vld [vmem:[#allocation2 + $0x10] sm:$0xff]
    %v289 = vld [vmem:[#allocation2 + $0x18] sm:$0xff]
    %v290 = vld [vmem:[%s2] sm:$0x1]
    %v292 = vperm.slane %v290, 0
    %v294 = vadd.f32 %v286, %v292
    %v295 = vadd.f32 %v287, %v292
    %v296 = vadd.f32 %v288, %v292
    %v297 = vadd.f32 %v289, %v292
    %v298 = vmax.f32 %v294, 0.0
    %v299 = vmax.f32 %v295, 0.0
    %v300 = vmax.f32 %v296, 0.0
    %v301 = vmax.f32 %v297, 0.0
    %v302 = vpack.c.bf16 %v298, %v298
    %v303 = vpack.c.bf16 %v299, %v299
    %v304 = vpack.c.bf16 %v300, %v300
    %v305 = vpack.c.bf16 %v301, %v301
    %vm306 = vcmask 519168
    %307 = vst.msk [vmem:[%s3] sm:$0xf] %vm306, %v302
    %308 = vst.msk [vmem:[%s3 + $0x4] sm:$0xf] %vm306, %v303
    %309 = vst.msk [vmem:[%s3 + $0x8] sm:$0xf] %vm306, %v304
    %310 = vst.msk [vmem:[%s3 + $0xc] sm:$0xf] %vm306, %v305
  $region21: #{_lambda_.18} parent=0 // pred_fallthru
    _
  // Predicated region
  $region22: #{_lambda_.18} parent=0 // pred_check
    _
  $region23: #{_lambda_.18} parent=0 // pred_check_branch
    %312 = sbr.rel (0) target = $region25
  $region24: #{_lambda_.18} parent=0 // pred_region
    _
  $region25: #{_lambda_.18} parent=0 // pred_fallthru
    _
  // Predicated region
  $region26: #{_lambda_.18} parent=0 // pred_check
    _
  $region27: #{_lambda_.18} parent=0 // pred_check_branch
    %314 = sbr.rel (0) target = $region29
  $region28: #{_lambda_.18} parent=0 // pred_region
    _
  $region29: #{_lambda_.18} parent=0 // pred_fallthru
    _

// kernel: _lambda_.24
$region0: #{_lambda_.24}
  #allocation0 [shape = 'u32[]', space=smem, size = 0x4, offset = 0x4, fixed_abs, tag = 'smem constant byte address 0x4 - core index']
  #allocation1 [shape = 'u32[72,128]{1,0:T(1,128)}', space=vmem, size = 0x9000, scoped, tag = 'internal scratch']
  #allocation2 [shape = 'f32[32,16]{1,0:T(8,128)}', space=vmem, size = 0x4000, scoped, tag = 'scratch operand']
  %s0 = inlined_call_operand.vmem [shape: bf16[32,576], index: 0, kind: input, shape index: {}]
  %s1 = inlined_call_operand.vmem [shape: bf16[576,16], index: 1, kind: input, shape index: {}]
  %s2 = inlined_call_operand.vmem [shape: f32[1,16], index: 2, kind: input, shape index: {}]
  %s3 = inlined_call_operand.vmem [shape: bf16[32,16], index: 3, kind: output, shape index: {}]
  %s4 = sld [smem:[#allocation0]]
  $region30: #{_lambda_.24} parent=0
    _
  %s6 = ssub.s32 1, %s4
  %s7 = scalar_select 0, %s6, %s4
  // Predicated region
  $region2: #{_lambda_.24} parent=0 // pred_check
    _
  $region3: #{_lambda_.24} parent=0 // pred_check_branch
    %9 = sbr.rel (0) target = $region5
  $region4: #{_lambda_.24} parent=0 // pred_region
    _
  $region5: #{_lambda_.24} parent=0 // pred_fallthru
    _
  // Predicated region
  $region6: #{_lambda_.24} parent=0 // pred_check
    _
  $region7: #{_lambda_.24} parent=0 // pred_check_branch
    %11 = sbr.rel (0) target = $region9
  $region8: #{_lambda_.24} parent=0 // pred_region
    _
  $region9: #{_lambda_.24} parent=0 // pred_fallthru
    _
  // Predicated region
  $region10: #{_lambda_.24} parent=0 // pred_check
    _
  $region11: #{_lambda_.24} parent=0 // pred_check_branch
    %13 = sbr.rel (0) target = $region13
  $region12: #{_lambda_.24} parent=0 // pred_region
    _
  $region13: #{_lambda_.24} parent=0 // pred_fallthru
    _
  %p15 = scmp.eq.s32.totalorder 0, 0
  // Predicated region
  $region14: #{_lambda_.24} parent=0 // pred_check
    %p16 = pneg %p15
  $region15: #{_lambda_.24} parent=0 // pred_check_branch
    %18 = sbr.rel (%p16) target = $region17
  $region16: #{_lambda_.24} parent=0 // pred_region
    %vm19 = vcmask 130048
    %20 = vst.msk [vmem:[#allocation2] sm:$0xff] %vm19, 0.0
    %21 = vst.msk [vmem:[#allocation2 + $0x8] sm:$0xff] %vm19, 0.0
    %22 = vst.msk [vmem:[#allocation2 + $0x10] sm:$0xff] %vm19, 0.0
    %23 = vst.msk [vmem:[#allocation2 + $0x18] sm:$0xff] %vm19, 0.0
  $region17: #{_lambda_.24} parent=0 // pred_fallthru
    _
  %v24 = vld [vmem:[#allocation2] sm:$0xff]
  %v25 = vld [vmem:[#allocation2 + $0x8] sm:$0xff]
  %v26 = vld [vmem:[#allocation2 + $0x10] sm:$0xff]
  %v27 = vld [vmem:[#allocation2 + $0x18] sm:$0xff]
  %v28 = vld [vmem:[%s0] sm:$0xff]
  %v29 = vld [vmem:[%s0 + $0x8] sm:$0xff]
  %v30 = vld [vmem:[%s0 + $0x10] sm:$0xf]
  %v31 = vld [vmem:[%s0 + $0x14] sm:$0xff]
  %v32 = vld [vmem:[%s0 + $0x1c] sm:$0xff]
  %v33 = vld [vmem:[%s0 + $0x24] sm:$0xf]
  %v34 = vld [vmem:[%s0 + $0x28] sm:$0xff]
  %v35 = vld [vmem:[%s0 + $0x30] sm:$0xff]
  %v36 = vld [vmem:[%s0 + $0x38] sm:$0xf]
  %v37 = vld [vmem:[%s0 + $0x3c] sm:$0xff]
  %v38 = vld [vmem:[%s0 + $0x44] sm:$0xff]
  %v39 = vld [vmem:[%s0 + $0x4c] sm:$0xf]
  %v40 = vld [vmem:[%s1] sm:$0xf]
  %v41 = vld [vmem:[%s1 + $0x4] sm:$0xf]
  %v42 = vld [vmem:[%s1 + $0x8] sm:$0xf]
  %v43 = vld [vmem:[%s1 + $0xc] sm:$0xf]
  %v44 = vld [vmem:[%s1 + $0x10] sm:$0xf]
  %v45 = vld [vmem:[%s1 + $0x14] sm:$0xf]
  %v46 = vld [vmem:[%s1 + $0x18] sm:$0xf]
  %v47 = vld [vmem:[%s1 + $0x1c] sm:$0xf]
  %v48 = vld [vmem:[%s1 + $0x20] sm:$0xf]
  %v49 = vld [vmem:[%s1 + $0x24] sm:$0xf]
  %v50 = vld [vmem:[%s1 + $0x28] sm:$0xf]
  %v51 = vld [vmem:[%s1 + $0x2c] sm:$0xf]
  %v52 = vld [vmem:[%s1 + $0x30] sm:$0xf]
  %v53 = vld [vmem:[%s1 + $0x34] sm:$0xf]
  %v54 = vld [vmem:[%s1 + $0x38] sm:$0xf]
  %v55 = vld [vmem:[%s1 + $0x3c] sm:$0xf]
  %v56 = vld [vmem:[%s1 + $0x40] sm:$0xf]
  %v57 = vld [vmem:[%s1 + $0x44] sm:$0xf]
  %v58 = vld [vmem:[%s1 + $0x48] sm:$0xf]
  %v59 = vld [vmem:[%s1 + $0x4c] sm:$0xf]
  %v60 = vld [vmem:[%s1 + $0x50] sm:$0xf]
  %v61 = vld [vmem:[%s1 + $0x54] sm:$0xf]
  %v62 = vld [vmem:[%s1 + $0x58] sm:$0xf]
  %v63 = vld [vmem:[%s1 + $0x5c] sm:$0xf]
  %v64 = vld [vmem:[%s1 + $0x60] sm:$0xf]
  %v65 = vld [vmem:[%s1 + $0x64] sm:$0xf]
  %v66 = vld [vmem:[%s1 + $0x68] sm:$0xf]
  %v67 = vld [vmem:[%s1 + $0x6c] sm:$0xf]
  %v68 = vld [vmem:[%s1 + $0x70] sm:$0xf]
  %v69 = vld [vmem:[%s1 + $0x74] sm:$0xf]
  %v70 = vld [vmem:[%s1 + $0x78] sm:$0xf]
  %v71 = vld [vmem:[%s1 + $0x7c] sm:$0xf]
  %v72 = vld [vmem:[%s1 + $0x80] sm:$0xf]
  %v73 = vld [vmem:[%s1 + $0x84] sm:$0xf]
  %v74 = vld [vmem:[%s1 + $0x88] sm:$0xf]
  %v75 = vld [vmem:[%s1 + $0x8c] sm:$0xf]
  %v76 = vld [vmem:[%s1 + $0x90] sm:$0xf]
  %v77 = vld [vmem:[%s1 + $0x94] sm:$0xf]
  %v78 = vld [vmem:[%s1 + $0x98] sm:$0xf]
  %v79 = vld [vmem:[%s1 + $0x9c] sm:$0xf]
  %v80 = vld [vmem:[%s1 + $0xa0] sm:$0xf]
  %v81 = vld [vmem:[%s1 + $0xa4] sm:$0xf]
  %v82 = vld [vmem:[%s1 + $0xa8] sm:$0xf]
  %v83 = vld [vmem:[%s1 + $0xac] sm:$0xf]
  %v84 = vld [vmem:[%s1 + $0xb0] sm:$0xf]
  %v85 = vld [vmem:[%s1 + $0xb4] sm:$0xf]
  %v86 = vld [vmem:[%s1 + $0xb8] sm:$0xf]
  %v87 = vld [vmem:[%s1 + $0xbc] sm:$0xf]
  %v88 = vld [vmem:[%s1 + $0xc0] sm:$0xf]
  %v89 = vld [vmem:[%s1 + $0xc4] sm:$0xf]
  %v90 = vld [vmem:[%s1 + $0xc8] sm:$0xf]
  %v91 = vld [vmem:[%s1 + $0xcc] sm:$0xf]
  %v92 = vld [vmem:[%s1 + $0xd0] sm:$0xf]
  %v93 = vld [vmem:[%s1 + $0xd4] sm:$0xf]
  %v94 = vld [vmem:[%s1 + $0xd8] sm:$0xf]
  %v95 = vld [vmem:[%s1 + $0xdc] sm:$0xf]
  %v96 = vld [vmem:[%s1 + $0xe0] sm:$0xf]
  %v97 = vld [vmem:[%s1 + $0xe4] sm:$0xf]
  %v98 = vld [vmem:[%s1 + $0xe8] sm:$0xf]
  %v99 = vld [vmem:[%s1 + $0xec] sm:$0xf]
  %v100 = vld [vmem:[%s1 + $0xf0] sm:$0xf]
  %v101 = vld [vmem:[%s1 + $0xf4] sm:$0xf]
  %v102 = vld [vmem:[%s1 + $0xf8] sm:$0xf]
  %v103 = vld [vmem:[%s1 + $0xfc] sm:$0xf]
  %v104 = vld [vmem:[%s1 + $0x100] sm:$0xf]
  %v105 = vld [vmem:[%s1 + $0x104] sm:$0xf]
  %v106 = vld [vmem:[%s1 + $0x108] sm:$0xf]
  %v107 = vld [vmem:[%s1 + $0x10c] sm:$0xf]
  %v108 = vld [vmem:[%s1 + $0x110] sm:$0xf]
  %v109 = vld [vmem:[%s1 + $0x114] sm:$0xf]
  %v110 = vld [vmem:[%s1 + $0x118] sm:$0xf]
  %v111 = vld [vmem:[%s1 + $0x11c] sm:$0xf]
  %v124 = vunpack.c.l.b16 %v28
  %v125 = vunpack.c.h.b16 %v28
  %v126 = vunpack.c.l.b16 %v29
  %v127 = vunpack.c.h.b16 %v29
  %v128 = vunpack.c.l.b16 %v30
  %v129 = vunpack.c.l.b16 %v31
  %v130 = vunpack.c.h.b16 %v31
  %v131 = vunpack.c.l.b16 %v32
  %v132 = vunpack.c.h.b16 %v32
  %v133 = vunpack.c.l.b16 %v33
  %v134 = vunpack.c.l.b16 %v34
  %v135 = vunpack.c.h.b16 %v34
  %v136 = vunpack.c.l.b16 %v35
  %v137 = vunpack.c.h.b16 %v35
  %v138 = vunpack.c.l.b16 %v36
  %v139 = vunpack.c.l.b16 %v37
  %v140 = vunpack.c.h.b16 %v37
  %v141 = vunpack.c.l.b16 %v38
  %v142 = vunpack.c.h.b16 %v38
  %v143 = vunpack.c.l.b16 %v39
  %v144 = vpack.c.b16 %v129, %v124
  %v145 = vpack.c.b16 %v130, %v125
  %v146 = vpack.c.b16 %v131, %v126
  %v147 = vpack.c.b16 %v132, %v127
  %v148 = vpack.c.b16 %v133, %v128
  %v149 = vpack.c.b16 %v139, %v134
  %v150 = vpack.c.b16 %v140, %v135
  %v151 = vpack.c.b16 %v141, %v136
  %v152 = vpack.c.b16 %v142, %v137
  %v153 = vpack.c.b16 %v143, %v138
  %v234 = vunpack.c.l.b16 %v40
  %v235 = vunpack.c.l.b16 %v41
  %v236 = vunpack.c.l.b16 %v42
  %v237 = vunpack.c.l.b16 %v43
  %v238 = vunpack.c.l.b16 %v44
  %v239 = vunpack.c.l.b16 %v45
  %v240 = vunpack.c.l.b16 %v46
  %v241 = vunpack.c.l.b16 %v47
  %v242 = vunpack.c.l.b16 %v48
  %v243 = vunpack.c.l.b16 %v49
  %v244 = vunpack.c.l.b16 %v50
  %v245 = vunpack.c.l.b16 %v51
  %v246 = vunpack.c.l.b16 %v52
  %v247 = vunpack.c.l.b16 %v53
  %v248 = vunpack.c.l.b16 %v54
  %v249 = vunpack.c.l.b16 %v55
  %v250 = vunpack.c.l.b16 %v56
  %v251 = vunpack.c.l.b16 %v57
  %v252 = vunpack.c.l.b16 %v58
  %v253 = vunpack.c.l.b16 %v59
  %v254 = vunpack.c.l.b16 %v60
  %v255 = vunpack.c.l.b16 %v61
  %v256 = vunpack.c.l.b16 %v62
  %v257 = vunpack.c.l.b16 %v63
  %v258 = vunpack.c.l.b16 %v64
  %v259 = vunpack.c.l.b16 %v65
  %v260 = vunpack.c.l.b16 %v66
  %v261 = vunpack.c.l.b16 %v67
  %v262 = vunpack.c.l.b16 %v68
  %v263 = vunpack.c.l.b16 %v69
  %v264 = vunpack.c.l.b16 %v70
  %v265 = vunpack.c.l.b16 %v71
  %v266 = vunpack.c.l.b16 %v72
  %v267 = vunpack.c.l.b16 %v73
  %v268 = vunpack.c.l.b16 %v74
  %v269 = vunpack.c.l.b16 %v75
  %v270 = vunpack.c.l.b16 %v76
  %v271 = vunpack.c.l.b16 %v77
  %v272 = vunpack.c.l.b16 %v78
  %v273 = vunpack.c.l.b16 %v79
  %v274 = vunpack.c.l.b16 %v80
  %v275 = vunpack.c.l.b16 %v81
  %v276 = vunpack.c.l.b16 %v82
  %v277 = vunpack.c.l.b16 %v83
  %v278 = vunpack.c.l.b16 %v84
  %v279 = vunpack.c.l.b16 %v85
  %v280 = vunpack.c.l.b16 %v86
  %v281 = vunpack.c.l.b16 %v87
  %v282 = vunpack.c.l.b16 %v88
  %v283 = vunpack.c.l.b16 %v89
  %v284 = vunpack.c.l.b16 %v90
  %v285 = vunpack.c.l.b16 %v91
  %v286 = vunpack.c.l.b16 %v92
  %v287 = vunpack.c.l.b16 %v93
  %v288 = vunpack.c.l.b16 %v94
  %v289 = vunpack.c.l.b16 %v95
  %v290 = vunpack.c.l.b16 %v96
  %v291 = vunpack.c.l.b16 %v97
  %v292 = vunpack.c.l.b16 %v98
  %v293 = vunpack.c.l.b16 %v99
  %v294 = vunpack.c.l.b16 %v100
  %v295 = vunpack.c.l.b16 %v101
  %v296 = vunpack.c.l.b16 %v102
  %v297 = vunpack.c.l.b16 %v103
  %v298 = vunpack.c.l.b16 %v104
  %v299 = vunpack.c.l.b16 %v105
  %v300 = vunpack.c.l.b16 %v106
  %v301 = vunpack.c.l.b16 %v107
  %v302 = vunpack.c.l.b16 %v108
  %v303 = vunpack.c.l.b16 %v109
  %v304 = vunpack.c.l.b16 %v110
  %v305 = vunpack.c.l.b16 %v111
  %v306 = vpack.c.b16 %v235, %v234
  %v307 = vpack.c.b16 %v237, %v236
  %v308 = vpack.c.b16 %v239, %v238
  %v309 = vpack.c.b16 %v241, %v240
  %v310 = vpack.c.b16 %v243, %v242
  %v311 = vpack.c.b16 %v245, %v244
  %v312 = vpack.c.b16 %v247, %v246
  %v313 = vpack.c.b16 %v249, %v248
  %v314 = vpack.c.b16 %v251, %v250
  %v315 = vpack.c.b16 %v253, %v252
  %v316 = vpack.c.b16 %v255, %v254
  %v317 = vpack.c.b16 %v257, %v256
  %v318 = vpack.c.b16 %v259, %v258
  %v319 = vpack.c.b16 %v261, %v260
  %v320 = vpack.c.b16 %v263, %v262
  %v321 = vpack.c.b16 %v265, %v264
  %v322 = vpack.c.b16 %v267, %v266
  %v323 = vpack.c.b16 %v269, %v268
  %v324 = vpack.c.b16 %v271, %v270
  %v325 = vpack.c.b16 %v273, %v272
  %v326 = vpack.c.b16 %v275, %v274
  %v327 = vpack.c.b16 %v277, %v276
  %v328 = vpack.c.b16 %v279, %v278
  %v329 = vpack.c.b16 %v281, %v280
  %v330 = vpack.c.b16 %v283, %v282
  %v331 = vpack.c.b16 %v285, %v284
  %v332 = vpack.c.b16 %v287, %v286
  %v333 = vpack.c.b16 %v289, %v288
  %v334 = vpack.c.b16 %v291, %v290
  %v335 = vpack.c.b16 %v293, %v292
  %v336 = vpack.c.b16 %v295, %v294
  %v337 = vpack.c.b16 %v297, %v296
  %v338 = vpack.c.b16 %v299, %v298
  %v339 = vpack.c.b16 %v301, %v300
  %v340 = vpack.c.b16 %v303, %v302
  %v341 = vpack.c.b16 %v305, %v304
  %vm378 = vcmask 523264
  %v380 = vsel %vm378, %v148, 0
  %v383 = vsel %vm378, %v153, 0
  %385 = vmatpush.bf16.msra.mxu0 %v313
  %386 = vmatpush.bf16.msra.mxu0 %v312
  %387 = vmatpush.bf16.msra.mxu0 %v311
  %388 = vmatpush.bf16.msra.mxu0 %v310
  %389 = vmatpush.bf16.msra.mxu0 %v309
  %390 = vmatpush.bf16.msra.mxu0 %v308
  %391 = vmatpush.bf16.msra.mxu0 %v307
  %392 = vmatpush.bf16.msra.mxu0 %v306
  %393 = vmatmul.bf16.gmra.mxu0 %v144
  %v394 = vpop.f32.mrf.mxu0
  %v395 = vadd.f32 0.0, %v394
  %v396 = vpop.f32.mrf.mxu0
  %v397 = vadd.f32 0.0, %v396
  %398 = vmatmul.bf16.gmra.mxu0 %v149
  %v399 = vpop.f32.mrf.mxu0
  %v400 = vadd.f32 0.0, %v399
  %v401 = vpop.f32.mrf.mxu0
  %v402 = vadd.f32 0.0, %v401
  %403 = vdwg.mxu0
  %404 = vmatpush.bf16.msra.mxu0 %v321
  %405 = vmatpush.bf16.msra.mxu0 %v320
  %406 = vmatpush.bf16.msra.mxu0 %v319
  %407 = vmatpush.bf16.msra.mxu0 %v318
  %408 = vmatpush.bf16.msra.mxu0 %v317
  %409 = vmatpush.bf16.msra.mxu0 %v316
  %410 = vmatpush.bf16.msra.mxu0 %v315
  %411 = vmatpush.bf16.msra.mxu0 %v314
  %412 = vmatmul.bf16.gmra.mxu0 %v145
  %v413 = vpop.f32.mrf.mxu0
  %v414 = vadd.f32 %v395, %v413
  %v415 = vpop.f32.mrf.mxu0
  %v416 = vadd.f32 %v397, %v415
  %417 = vmatmul.bf16.gmra.mxu0 %v150
  %v418 = vpop.f32.mrf.mxu0
  %v419 = vadd.f32 %v400, %v418
  %v420 = vpop.f32.mrf.mxu0
  %v421 = vadd.f32 %v402, %v420
  %422 = vdwg.mxu0
  %423 = vmatpush.bf16.msra.mxu0 %v329
  %424 = vmatpush.bf16.msra.mxu0 %v328
  %425 = vmatpush.bf16.msra.mxu0 %v327
  %426 = vmatpush.bf16.msra.mxu0 %v326
  %427 = vmatpush.bf16.msra.mxu0 %v325
  %428 = vmatpush.bf16.msra.mxu0 %v324
  %429 = vmatpush.bf16.msra.mxu0 %v323
  %430 = vmatpush.bf16.msra.mxu0 %v322
  %431 = vmatmul.bf16.gmra.mxu0 %v146
  %v432 = vpop.f32.mrf.mxu0
  %v433 = vadd.f32 %v414, %v432
  %v434 = vpop.f32.mrf.mxu0
  %v435 = vadd.f32 %v416, %v434
  %436 = vmatmul.bf16.gmra.mxu0 %v151
  %v437 = vpop.f32.mrf.mxu0
  %v438 = vadd.f32 %v419, %v437
  %v439 = vpop.f32.mrf.mxu0
  %v440 = vadd.f32 %v421, %v439
  %441 = vdwg.mxu0
  %442 = vmatpush.bf16.msra.mxu0 %v337
  %443 = vmatpush.bf16.msra.mxu0 %v336
  %444 = vmatpush.bf16.msra.mxu0 %v335
  %445 = vmatpush.bf16.msra.mxu0 %v334
  %446 = vmatpush.bf16.msra.mxu0 %v333
  %447 = vmatpush.bf16.msra.mxu0 %v332
  %448 = vmatpush.bf16.msra.mxu0 %v331
  %449 = vmatpush.bf16.msra.mxu0 %v330
  %450 = vmatmul.bf16.gmra.mxu0 %v147
  %v451 = vpop.f32.mrf.mxu0
  %v452 = vadd.f32 %v433, %v451
  %v453 = vpop.f32.mrf.mxu0
  %v454 = vadd.f32 %v435, %v453
  %455 = vmatmul.bf16.gmra.mxu0 %v152
  %v456 = vpop.f32.mrf.mxu0
  %v457 = vadd.f32 %v438, %v456
  %v458 = vpop.f32.mrf.mxu0
  %v459 = vadd.f32 %v440, %v458
  %460 = vdwg.mxu0
  %461 = vmatpush.bf16.msra.mxu0 0
  %462 = vmatpush.bf16.msra.mxu0 0
  %463 = vmatpush.bf16.msra.mxu0 0
  %464 = vmatpush.bf16.msra.mxu0 0
  %465 = vmatpush.bf16.msra.mxu0 %v341
  %466 = vmatpush.bf16.msra.mxu0 %v340
  %467 = vmatpush.bf16.msra.mxu0 %v339
  %468 = vmatpush.bf16.msra.mxu0 %v338
  %469 = vmatmul.bf16.gmra.mxu0 %v380
  %v470 = vpop.f32.mrf.mxu0
  %v471 = vadd.f32 %v452, %v470
  %v472 = vpop.f32.mrf.mxu0
  %v473 = vadd.f32 %v454, %v472
  %474 = vmatmul.bf16.gmra.mxu0 %v383
  %v475 = vpop.f32.mrf.mxu0
  %v476 = vadd.f32 %v457, %v475
  %v477 = vpop.f32.mrf.mxu0
  %v478 = vadd.f32 %v459, %v477
  %479 = vdwg.mxu0
  %v480 = vadd.f32 %v24, %v471
  %v481 = vadd.f32 %v25, %v473
  %v482 = vadd.f32 %v26, %v476
  %v483 = vadd.f32 %v27, %v478
  %vm484 = vcmask 130048
  %485 = vst.msk [vmem:[#allocation2] sm:$0xff] %vm484, %v480
  %486 = vst.msk [vmem:[#allocation2 + $0x8] sm:$0xff] %vm484, %v481
  %487 = vst.msk [vmem:[#allocation2 + $0x10] sm:$0xff] %vm484, %v482
  %488 = vst.msk [vmem:[#allocation2 + $0x18] sm:$0xff] %vm484, %v483
  // Predicated region
  $region18: #{_lambda_.24} parent=0 // pred_check
    %p489 = pneg %p15
  $region19: #{_lambda_.24} parent=0 // pred_check_branch
    %491 = sbr.rel (%p489) target = $region21
  $region20: #{_lambda_.24} parent=0 // pred_region
    %v492 = vld [vmem:[#allocation2] sm:$0xff]
    %v493 = vld [vmem:[#allocation2 + $0x8] sm:$0xff]
    %v494 = vld [vmem:[#allocation2 + $0x10] sm:$0xff]
    %v495 = vld [vmem:[#allocation2 + $0x18] sm:$0xff]
    %v496 = vld [vmem:[%s2] sm:$0x1]
    %v498 = vperm.slane %v496, 0
    %v500 = vadd.f32 %v492, %v498
    %v501 = vadd.f32 %v493, %v498
    %v502 = vadd.f32 %v494, %v498
    %v503 = vadd.f32 %v495, %v498
    %v504 = vmax.f32 %v500, 0.0
    %v505 = vmax.f32 %v501, 0.0
    %v506 = vmax.f32 %v502, 0.0
    %v507 = vmax.f32 %v503, 0.0
    %v508 = vpack.c.bf16 %v504, %v504
    %v509 = vpack.c.bf16 %v505, %v505
    %v510 = vpack.c.bf16 %v506, %v506
    %v511 = vpack.c.bf16 %v507, %v507
    %vm512 = vcmask 125952
    %513 = vst.msk [vmem:[%s3] sm:$0xf] %vm512, %v508
    %514 = vst.msk [vmem:[%s3 + $0x4] sm:$0xf] %vm512, %v509
    %515 = vst.msk [vmem:[%s3 + $0x8] sm:$0xf] %vm512, %v510
    %516 = vst.msk [vmem:[%s3 + $0xc] sm:$0xf] %vm512, %v511
  $region21: #{_lambda_.24} parent=0 // pred_fallthru
    _
  // Predicated region
  $region22: #{_lambda_.24} parent=0 // pred_check
    _
  $region23: #{_lambda_.24} parent=0 // pred_check_branch
    %518 = sbr.rel (0) target = $region25
  $region24: #{_lambda_.24} parent=0 // pred_region
    _
  $region25: #{_lambda_.24} parent=0 // pred_fallthru
    _
  // Predicated region
  $region26: #{_lambda_.24} parent=0 // pred_check
    _
  $region27: #{_lambda_.24} parent=0 // pred_check_branch
    %520 = sbr.rel (0) target = $region29
  $region28: #{_lambda_.24} parent=0 // pred_region
    _
  $region29: #{_lambda_.24} parent=0 // pred_fallthru
    _

// kernel: _lambda_.22
$region0: #{_lambda_.22}
  #allocation0 [shape = 'u32[]', space=smem, size = 0x4, offset = 0x4, fixed_abs, tag = 'smem constant byte address 0x4 - core index']
  #allocation1 [shape = 'u32[72,128]{1,0:T(1,128)}', space=vmem, size = 0x9000, scoped, tag = 'internal scratch']
  #allocation2 [shape = 'f32[32,16]{1,0:T(8,128)}', space=vmem, size = 0x4000, scoped, tag = 'scratch operand']
  %s0 = inlined_call_operand.vmem [shape: bf16[32,64], index: 0, kind: input, shape index: {}]
  %s1 = inlined_call_operand.vmem [shape: bf16[64,16], index: 1, kind: input, shape index: {}]
  %s2 = inlined_call_operand.vmem [shape: f32[1,16], index: 2, kind: input, shape index: {}]
  %s3 = inlined_call_operand.vmem [shape: bf16[32,16], index: 3, kind: output, shape index: {}]
  %s4 = sld [smem:[#allocation0]]
  $region30: #{_lambda_.22} parent=0
    _
  %s6 = ssub.s32 1, %s4
  %s7 = scalar_select 0, %s6, %s4
  // Predicated region
  $region2: #{_lambda_.22} parent=0 // pred_check
    _
  $region3: #{_lambda_.22} parent=0 // pred_check_branch
    %9 = sbr.rel (0) target = $region5
  $region4: #{_lambda_.22} parent=0 // pred_region
    _
  $region5: #{_lambda_.22} parent=0 // pred_fallthru
    _
  // Predicated region
  $region6: #{_lambda_.22} parent=0 // pred_check
    _
  $region7: #{_lambda_.22} parent=0 // pred_check_branch
    %11 = sbr.rel (0) target = $region9
  $region8: #{_lambda_.22} parent=0 // pred_region
    _
  $region9: #{_lambda_.22} parent=0 // pred_fallthru
    _
  // Predicated region
  $region10: #{_lambda_.22} parent=0 // pred_check
    _
  $region11: #{_lambda_.22} parent=0 // pred_check_branch
    %13 = sbr.rel (0) target = $region13
  $region12: #{_lambda_.22} parent=0 // pred_region
    _
  $region13: #{_lambda_.22} parent=0 // pred_fallthru
    _
  %p15 = scmp.eq.s32.totalorder 0, 0
  // Predicated region
  $region14: #{_lambda_.22} parent=0 // pred_check
    %p16 = pneg %p15
  $region15: #{_lambda_.22} parent=0 // pred_check_branch
    %18 = sbr.rel (%p16) target = $region17
  $region16: #{_lambda_.22} parent=0 // pred_region
    %vm19 = vcmask 130048
    %20 = vst.msk [vmem:[#allocation2] sm:$0xff] %vm19, 0.0
    %21 = vst.msk [vmem:[#allocation2 + $0x8] sm:$0xff] %vm19, 0.0
    %22 = vst.msk [vmem:[#allocation2 + $0x10] sm:$0xff] %vm19, 0.0
    %23 = vst.msk [vmem:[#allocation2 + $0x18] sm:$0xff] %vm19, 0.0
  $region17: #{_lambda_.22} parent=0 // pred_fallthru
    _
  %v24 = vld [vmem:[#allocation2] sm:$0xff]
  %v25 = vld [vmem:[#allocation2 + $0x8] sm:$0xff]
  %v26 = vld [vmem:[#allocation2 + $0x10] sm:$0xff]
  %v27 = vld [vmem:[#allocation2 + $0x18] sm:$0xff]
  %v28 = vld [vmem:[%s0] sm:$0xf]
  %v29 = vld [vmem:[%s0 + $0x4] sm:$0xf]
  %v30 = vld [vmem:[%s0 + $0x8] sm:$0xf]
  %v31 = vld [vmem:[%s0 + $0xc] sm:$0xf]
  %v32 = vld [vmem:[%s1] sm:$0xf]
  %v33 = vld [vmem:[%s1 + $0x4] sm:$0xf]
  %v34 = vld [vmem:[%s1 + $0x8] sm:$0xf]
  %v35 = vld [vmem:[%s1 + $0xc] sm:$0xf]
  %v36 = vld [vmem:[%s1 + $0x10] sm:$0xf]
  %v37 = vld [vmem:[%s1 + $0x14] sm:$0xf]
  %v38 = vld [vmem:[%s1 + $0x18] sm:$0xf]
  %v39 = vld [vmem:[%s1 + $0x1c] sm:$0xf]
  %v44 = vunpack.c.l.b16 %v28
  %v45 = vunpack.c.l.b16 %v29
  %v46 = vunpack.c.l.b16 %v30
  %v47 = vunpack.c.l.b16 %v31
  %v48 = vpack.c.b16 %v45, %v44
  %v49 = vpack.c.b16 %v47, %v46
  %v58 = vunpack.c.l.b16 %v32
  %v59 = vunpack.c.l.b16 %v33
  %v60 = vunpack.c.l.b16 %v34
  %v61 = vunpack.c.l.b16 %v35
  %v62 = vunpack.c.l.b16 %v36
  %v63 = vunpack.c.l.b16 %v37
  %v64 = vunpack.c.l.b16 %v38
  %v65 = vunpack.c.l.b16 %v39
  %v66 = vpack.c.b16 %v59, %v58
  %v67 = vpack.c.b16 %v61, %v60
  %v68 = vpack.c.b16 %v63, %v62
  %v69 = vpack.c.b16 %v65, %v64
  %vm74 = vcmask 523264
  %v76 = vsel %vm74, %v48, 0
  %v79 = vsel %vm74, %v49, 0
  %81 = vmatpush.bf16.msra.mxu0 0
  %82 = vmatpush.bf16.msra.mxu0 0
  %83 = vmatpush.bf16.msra.mxu0 0
  %84 = vmatpush.bf16.msra.mxu0 0
  %85 = vmatpush.bf16.msra.mxu0 %v69
  %86 = vmatpush.bf16.msra.mxu0 %v68
  %87 = vmatpush.bf16.msra.mxu0 %v67
  %88 = vmatpush.bf16.msra.mxu0 %v66
  %89 = vmatmul.bf16.gmra.mxu0 %v76
  %v90 = vpop.f32.mrf.mxu0
  %v91 = vadd.f32 0.0, %v90
  %v92 = vpop.f32.mrf.mxu0
  %v93 = vadd.f32 0.0, %v92
  %94 = vmatmul.bf16.gmra.mxu0 %v79
  %v95 = vpop.f32.mrf.mxu0
  %v96 = vadd.f32 0.0, %v95
  %v97 = vpop.f32.mrf.mxu0
  %v98 = vadd.f32 0.0, %v97
  %99 = vdwg.mxu0
  %v100 = vadd.f32 %v24, %v91
  %v101 = vadd.f32 %v25, %v93
  %v102 = vadd.f32 %v26, %v96
  %v103 = vadd.f32 %v27, %v98
  %vm104 = vcmask 130048
  %105 = vst.msk [vmem:[#allocation2] sm:$0xff] %vm104, %v100
  %106 = vst.msk [vmem:[#allocation2 + $0x8] sm:$0xff] %vm104, %v101
  %107 = vst.msk [vmem:[#allocation2 + $0x10] sm:$0xff] %vm104, %v102
  %108 = vst.msk [vmem:[#allocation2 + $0x18] sm:$0xff] %vm104, %v103
  // Predicated region
  $region18: #{_lambda_.22} parent=0 // pred_check
    %p109 = pneg %p15
  $region19: #{_lambda_.22} parent=0 // pred_check_branch
    %111 = sbr.rel (%p109) target = $region21
  $region20: #{_lambda_.22} parent=0 // pred_region
    %v112 = vld [vmem:[#allocation2] sm:$0xff]
    %v113 = vld [vmem:[#allocation2 + $0x8] sm:$0xff]
    %v114 = vld [vmem:[#allocation2 + $0x10] sm:$0xff]
    %v115 = vld [vmem:[#allocation2 + $0x18] sm:$0xff]
    %v116 = vld [vmem:[%s2] sm:$0x1]
    %v118 = vperm.slane %v116, 0
    %v120 = vadd.f32 %v112, %v118
    %v121 = vadd.f32 %v113, %v118
    %v122 = vadd.f32 %v114, %v118
    %v123 = vadd.f32 %v115, %v118
    %v124 = vmax.f32 %v120, 0.0
    %v125 = vmax.f32 %v121, 0.0
    %v126 = vmax.f32 %v122, 0.0
    %v127 = vmax.f32 %v123, 0.0
    %v128 = vpack.c.bf16 %v124, %v124
    %v129 = vpack.c.bf16 %v125, %v125
    %v130 = vpack.c.bf16 %v126, %v126
    %v131 = vpack.c.bf16 %v127, %v127
    %vm132 = vcmask 125952
    %133 = vst.msk [vmem:[%s3] sm:$0xf] %vm132, %v128
    %134 = vst.msk [vmem:[%s3 + $0x4] sm:$0xf] %vm132, %v129
    %135 = vst.msk [vmem:[%s3 + $0x8] sm:$0xf] %vm132, %v130
    %136 = vst.msk [vmem:[%s3 + $0xc] sm:$0xf] %vm132, %v131
  $region21: #{_lambda_.22} parent=0 // pred_fallthru
    _
  // Predicated region
  $region22: #{_lambda_.22} parent=0 // pred_check
    _
  $region23: #{_lambda_.22} parent=0 // pred_check_branch
    %138 = sbr.rel (0) target = $region25
  $region24: #{_lambda_.22} parent=0 // pred_region
    _
  $region25: #{_lambda_.22} parent=0 // pred_fallthru
    _
  // Predicated region
  $region26: #{_lambda_.22} parent=0 // pred_check
    _
  $region27: #{_lambda_.22} parent=0 // pred_check_branch
    %140 = sbr.rel (0) target = $region29
  $region28: #{_lambda_.22} parent=0 // pred_region
    _
  $region29: #{_lambda_.22} parent=0 // pred_fallthru
    _

// kernel: _lambda_.21
$region0: #{_lambda_.21}
  #allocation0 [shape = 'u32[]', space=smem, size = 0x4, offset = 0x4, fixed_abs, tag = 'smem constant byte address 0x4 - core index']
  #allocation1 [shape = 'u32[72,128]{1,0:T(1,128)}', space=vmem, size = 0x9000, scoped, tag = 'internal scratch']
  #allocation2 [shape = 'f32[2,16]{1,0:T(2,128)}', space=vmem, size = 0x400, scoped, tag = 'scratch operand']
  %s0 = inlined_call_operand.vmem [shape: bf16[2,64], index: 0, kind: input, shape index: {}]
  %s1 = inlined_call_operand.vmem [shape: bf16[64,16], index: 1, kind: input, shape index: {}]
  %s2 = inlined_call_operand.vmem [shape: f32[1,16], index: 2, kind: input, shape index: {}]
  %s3 = inlined_call_operand.vmem [shape: bf16[2,16], index: 3, kind: output, shape index: {}]
  %s4 = sld [smem:[#allocation0]]
  $region30: #{_lambda_.21} parent=0
    _
  %s6 = ssub.s32 1, %s4
  %s7 = scalar_select 0, %s6, %s4
  // Predicated region
  $region2: #{_lambda_.21} parent=0 // pred_check
    _
  $region3: #{_lambda_.21} parent=0 // pred_check_branch
    %9 = sbr.rel (0) target = $region5
  $region4: #{_lambda_.21} parent=0 // pred_region
    _
  $region5: #{_lambda_.21} parent=0 // pred_fallthru
    _
  // Predicated region
  $region6: #{_lambda_.21} parent=0 // pred_check
    _
  $region7: #{_lambda_.21} parent=0 // pred_check_branch
    %11 = sbr.rel (0) target = $region9
  $region8: #{_lambda_.21} parent=0 // pred_region
    _
  $region9: #{_lambda_.21} parent=0 // pred_fallthru
    _
  // Predicated region
  $region10: #{_lambda_.21} parent=0 // pred_check
    _
  $region11: #{_lambda_.21} parent=0 // pred_check_branch
    %13 = sbr.rel (0) target = $region13
  $region12: #{_lambda_.21} parent=0 // pred_region
    _
  $region13: #{_lambda_.21} parent=0 // pred_fallthru
    _
  %p15 = scmp.eq.s32.totalorder 0, 0
  // Predicated region
  $region14: #{_lambda_.21} parent=0 // pred_check
    %p16 = pneg %p15
  $region15: #{_lambda_.21} parent=0 // pred_check_branch
    %18 = sbr.rel (%p16) target = $region17
  $region16: #{_lambda_.21} parent=0 // pred_region
    %vm19 = vcmask 123904
    %20 = vst.msk [vmem:[#allocation2] sm:$0x3] %vm19, 0.0
  $region17: #{_lambda_.21} parent=0 // pred_fallthru
    _
  %v21 = vld [vmem:[#allocation2] sm:$0x3]
  %v22 = vld [vmem:[%s0] sm:$0x1]
  %v23 = vld [vmem:[%s1] sm:$0xf]
  %v24 = vld [vmem:[%s1 + $0x4] sm:$0xf]
  %v25 = vld [vmem:[%s1 + $0x8] sm:$0xf]
  %v26 = vld [vmem:[%s1 + $0xc] sm:$0xf]
  %v27 = vld [vmem:[%s1 + $0x10] sm:$0xf]
  %v28 = vld [vmem:[%s1 + $0x14] sm:$0xf]
  %v29 = vld [vmem:[%s1 + $0x18] sm:$0xf]
  %v30 = vld [vmem:[%s1 + $0x1c] sm:$0xf]
  %v39 = vunpack.c.l.b16 %v23
  %v40 = vunpack.c.l.b16 %v24
  %v41 = vunpack.c.l.b16 %v25
  %v42 = vunpack.c.l.b16 %v26
  %v43 = vunpack.c.l.b16 %v27
  %v44 = vunpack.c.l.b16 %v28
  %v45 = vunpack.c.l.b16 %v29
  %v46 = vunpack.c.l.b16 %v30
  %v47 = vpack.c.b16 %v40, %v39
  %v48 = vpack.c.b16 %v42, %v41
  %v49 = vpack.c.b16 %v44, %v43
  %v50 = vpack.c.b16 %v46, %v45
  %vm55 = vcmask 523264
  %v57 = vsel %vm55, %v22, 0
  %59 = vmatpush.bf16.msra.mxu0 0
  %60 = vmatpush.bf16.msra.mxu0 0
  %61 = vmatpush.bf16.msra.mxu0 0
  %62 = vmatpush.bf16.msra.mxu0 0
  %63 = vmatpush.bf16.msra.mxu0 %v50
  %64 = vmatpush.bf16.msra.mxu0 %v49
  %65 = vmatpush.bf16.msra.mxu0 %v48
  %66 = vmatpush.bf16.msra.mxu0 %v47
  %67 = vmatmul.bf16.gmra.mxu0 %v57
  %v68 = vpop.f32.mrf.mxu0
  %v69 = vadd.f32 0.0, %v68
  %v70 = vpop.f32.mrf.mxu0
  %71 = vdwg.mxu0
  %v72 = vadd.f32 %v21, %v69
  %vm73 = vcmask 123904
  %74 = vst.msk [vmem:[#allocation2] sm:$0x3] %vm73, %v72
  // Predicated region
  $region18: #{_lambda_.21} parent=0 // pred_check
    %p75 = pneg %p15
  $region19: #{_lambda_.21} parent=0 // pred_check_branch
    %77 = sbr.rel (%p75) target = $region21
  $region20: #{_lambda_.21} parent=0 // pred_region
    %v78 = vld [vmem:[#allocation2] sm:$0x3]
    %v79 = vld [vmem:[%s2] sm:$0x1]
    %v81 = vperm.slane %v79, 0
    %v83 = vadd.f32 %v78, %v81
    %v84 = vmax.f32 %v83, 0.0
    %v85 = vpack.c.bf16 %v84, %v84
    %vm86 = vcmask 122880
    %87 = vst.msk [vmem:[%s3] sm:$0x1] %vm86, %v85
  $region21: #{_lambda_.21} parent=0 // pred_fallthru
    _
  // Predicated region
  $region22: #{_lambda_.21} parent=0 // pred_check
    _
  $region23: #{_lambda_.21} parent=0 // pred_check_branch
    %89 = sbr.rel (0) target = $region25
  $region24: #{_lambda_.21} parent=0 // pred_region
    _
  $region25: #{_lambda_.21} parent=0 // pred_fallthru
    _
  // Predicated region
  $region26: #{_lambda_.21} parent=0 // pred_check
    _
  $region27: #{_lambda_.21} parent=0 // pred_check_branch
    %91 = sbr.rel (0) target = $region29
  $region28: #{_lambda_.21} parent=0 // pred_region
    _
  $region29: #{_lambda_.21} parent=0 // pred_fallthru
    _

// kernel: _lambda_.26
$region0: #{_lambda_.26}
  #allocation0 [shape = 'u32[]', space=smem, size = 0x4, offset = 0x4, fixed_abs, tag = 'smem constant byte address 0x4 - core index']
  #allocation1 [shape = 'u32[72,128]{1,0:T(1,128)}', space=vmem, size = 0x9000, scoped, tag = 'internal scratch']
  %s0 = inlined_call_operand.vmem [shape: bf16[32,16], index: 0, kind: input, shape index: {}]
  %s1 = inlined_call_operand.vmem [shape: bf16[32,16], index: 1, kind: input, shape index: {}]
  %s2 = inlined_call_operand.vmem [shape: bf16[32,16], index: 2, kind: input, shape index: {}]
  %s3 = inlined_call_operand.vmem [shape: bf16[32,16], index: 3, kind: input, shape index: {}]
  %s4 = inlined_call_operand.vmem [shape: bf16[32,16], index: 4, kind: input, shape index: {}]
  %s5 = inlined_call_operand.vmem [shape: bf16[16,8], index: 5, kind: input, shape index: {}]
  %s6 = inlined_call_operand.vmem [shape: bf16[16,8], index: 6, kind: input, shape index: {}]
  %s7 = inlined_call_operand.vmem [shape: bf16[16,8], index: 7, kind: input, shape index: {}]
  %s8 = inlined_call_operand.vmem [shape: bf16[16,8], index: 8, kind: input, shape index: {}]
  %s9 = inlined_call_operand.vmem [shape: bf16[16,8], index: 9, kind: input, shape index: {}]
  %s10 = inlined_call_operand.vmem [shape: f32[1,8], index: 10, kind: input, shape index: {}]
  %s11 = inlined_call_operand.vmem [shape: bf16[32,8], index: 11, kind: output, shape index: {}]
  %s12 = sld [smem:[#allocation0]]
  $region54: #{_lambda_.26} parent=0
    _
  %s14 = ssub.s32 1, %s12
  %s15 = scalar_select 0, %s14, %s12
  // Predicated region
  $region2: #{_lambda_.26} parent=0 // pred_check
    _
  $region3: #{_lambda_.26} parent=0 // pred_check_branch
    %17 = sbr.rel (0) target = $region5
  $region4: #{_lambda_.26} parent=0 // pred_region
    _
  $region5: #{_lambda_.26} parent=0 // pred_fallthru
    _
  // Predicated region
  $region6: #{_lambda_.26} parent=0 // pred_check
    _
  $region7: #{_lambda_.26} parent=0 // pred_check_branch
    %19 = sbr.rel (0) target = $region9
  $region8: #{_lambda_.26} parent=0 // pred_region
    _
  $region9: #{_lambda_.26} parent=0 // pred_fallthru
    _
  // Predicated region
  $region10: #{_lambda_.26} parent=0 // pred_check
    _
  $region11: #{_lambda_.26} parent=0 // pred_check_branch
    %21 = sbr.rel (0) target = $region13
  $region12: #{_lambda_.26} parent=0 // pred_region
    _
  $region13: #{_lambda_.26} parent=0 // pred_fallthru
    _
  // Predicated region
  $region14: #{_lambda_.26} parent=0 // pred_check
    _
  $region15: #{_lambda_.26} parent=0 // pred_check_branch
    %23 = sbr.rel (0) target = $region17
  $region16: #{_lambda_.26} parent=0 // pred_region
    _
  $region17: #{_lambda_.26} parent=0 // pred_fallthru
    _
  // Predicated region
  $region18: #{_lambda_.26} parent=0 // pred_check
    _
  $region19: #{_lambda_.26} parent=0 // pred_check_branch
    %25 = sbr.rel (0) target = $region21
  $region20: #{_lambda_.26} parent=0 // pred_region
    _
  $region21: #{_lambda_.26} parent=0 // pred_fallthru
    _
  // Predicated region
  $region22: #{_lambda_.26} parent=0 // pred_check
    _
  $region23: #{_lambda_.26} parent=0 // pred_check_branch
    %27 = sbr.rel (0) target = $region25
  $region24: #{_lambda_.26} parent=0 // pred_region
    _
  $region25: #{_lambda_.26} parent=0 // pred_fallthru
    _
  // Predicated region
  $region26: #{_lambda_.26} parent=0 // pred_check
    _
  $region27: #{_lambda_.26} parent=0 // pred_check_branch
    %29 = sbr.rel (0) target = $region29
  $region28: #{_lambda_.26} parent=0 // pred_region
    _
  $region29: #{_lambda_.26} parent=0 // pred_fallthru
    _
  // Predicated region
  $region30: #{_lambda_.26} parent=0 // pred_check
    _
  $region31: #{_lambda_.26} parent=0 // pred_check_branch
    %31 = sbr.rel (0) target = $region33
  $region32: #{_lambda_.26} parent=0 // pred_region
    _
  $region33: #{_lambda_.26} parent=0 // pred_fallthru
    _
  // Predicated region
  $region34: #{_lambda_.26} parent=0 // pred_check
    _
  $region35: #{_lambda_.26} parent=0 // pred_check_branch
    %33 = sbr.rel (0) target = $region37
  $region36: #{_lambda_.26} parent=0 // pred_region
    _
  $region37: #{_lambda_.26} parent=0 // pred_fallthru
    _
  // Predicated region
  $region38: #{_lambda_.26} parent=0 // pred_check
    _
  $region39: #{_lambda_.26} parent=0 // pred_check_branch
    %35 = sbr.rel (0) target = $region41
  $region40: #{_lambda_.26} parent=0 // pred_region
    _
  $region41: #{_lambda_.26} parent=0 // pred_fallthru
    _
  // Predicated region
  $region42: #{_lambda_.26} parent=0 // pred_check
    _
  $region43: #{_lambda_.26} parent=0 // pred_check_branch
    %37 = sbr.rel (0) target = $region45
  $region44: #{_lambda_.26} parent=0 // pred_region
    _
  $region45: #{_lambda_.26} parent=0 // pred_fallthru
    _
  %v39 = vld [vmem:[%s0] sm:$0xf]
  %v40 = vld [vmem:[%s0 + $0x4] sm:$0xf]
  %v41 = vld [vmem:[%s0 + $0x8] sm:$0xf]
  %v42 = vld [vmem:[%s0 + $0xc] sm:$0xf]
  %v43 = vld [vmem:[%s5] sm:$0xf]
  %v44 = vld [vmem:[%s5 + $0x4] sm:$0xf]
  %v45 = vld [vmem:[%s1] sm:$0xf]
  %v46 = vld [vmem:[%s1 + $0x4] sm:$0xf]
  %v47 = vld [vmem:[%s1 + $0x8] sm:$0xf]
  %v48 = vld [vmem:[%s1 + $0xc] sm:$0xf]
  %v49 = vld [vmem:[%s6] sm:$0xf]
  %v50 = vld [vmem:[%s6 + $0x4] sm:$0xf]
  %v55 = vunpack.c.l.b16 %v45
  %v56 = vunpack.c.l.b16 %v46
  %v57 = vunpack.c.l.b16 %v47
  %v58 = vunpack.c.l.b16 %v48
  %v59 = vpack.c.b16 %v56, %v55
  %v60 = vpack.c.b16 %v58, %v57
  %v63 = vunpack.c.l.b16 %v49
  %v64 = vunpack.c.l.b16 %v50
  %v65 = vpack.c.b16 %v64, %v63
  %vm67 = vcmask 130048
  %v69 = vsel %vm67, %v59, 0
  %v72 = vsel %vm67, %v60, 0
  %74 = vmatpush.bf16.msra.mxu0 0
  %75 = vmatpush.bf16.msra.mxu0 0
  %76 = vmatpush.bf16.msra.mxu0 0
  %77 = vmatpush.bf16.msra.mxu0 0
  %78 = vmatpush.bf16.msra.mxu0 0
  %79 = vmatpush.bf16.msra.mxu0 0
  %80 = vmatpush.bf16.msra.mxu0 0
  %81 = vmatpush.bf16.msra.mxu0 %v65
  %82 = vmatmul.bf16.gmra.mxu0 %v69
  %v83 = vpop.f32.mrf.mxu0
  %v84 = vadd.f32 0.0, %v83
  %v85 = vpop.f32.mrf.mxu0
  %v86 = vadd.f32 0.0, %v85
  %87 = vmatmul.bf16.gmra.mxu0 %v72
  %v88 = vpop.f32.mrf.mxu0
  %v89 = vadd.f32 0.0, %v88
  %v90 = vpop.f32.mrf.mxu0
  %v91 = vadd.f32 0.0, %v90
  %92 = vdwg.mxu0
  %v97 = vunpack.c.l.b16 %v39
  %v98 = vunpack.c.l.b16 %v40
  %v99 = vunpack.c.l.b16 %v41
  %v100 = vunpack.c.l.b16 %v42
  %v101 = vpack.c.b16 %v98, %v97
  %v102 = vpack.c.b16 %v100, %v99
  %v105 = vunpack.c.l.b16 %v43
  %v106 = vunpack.c.l.b16 %v44
  %v107 = vpack.c.b16 %v106, %v105
  %v110 = vsel %vm67, %v101, 0
  %v113 = vsel %vm67, %v102, 0
  %115 = vmatpush.bf16.msra.mxu0 0
  %116 = vmatpush.bf16.msra.mxu0 0
  %117 = vmatpush.bf16.msra.mxu0 0
  %118 = vmatpush.bf16.msra.mxu0 0
  %119 = vmatpush.bf16.msra.mxu0 0
  %120 = vmatpush.bf16.msra.mxu0 0
  %121 = vmatpush.bf16.msra.mxu0 0
  %122 = vmatpush.bf16.msra.mxu0 %v107
  %123 = vmatmul.bf16.gmra.mxu0 %v110
  %v124 = vpop.f32.mrf.mxu0
  %v125 = vadd.f32 %v84, %v124
  %v126 = vpop.f32.mrf.mxu0
  %v127 = vadd.f32 %v86, %v126
  %128 = vmatmul.bf16.gmra.mxu0 %v113
  %v129 = vpop.f32.mrf.mxu0
  %v130 = vadd.f32 %v89, %v129
  %v131 = vpop.f32.mrf.mxu0
  %v132 = vadd.f32 %v91, %v131
  %133 = vdwg.mxu0
  %v134 = vld [vmem:[%s2] sm:$0xf]
  %v135 = vld [vmem:[%s2 + $0x4] sm:$0xf]
  %v136 = vld [vmem:[%s2 + $0x8] sm:$0xf]
  %v137 = vld [vmem:[%s2 + $0xc] sm:$0xf]
  %v138 = vld [vmem:[%s7] sm:$0xf]
  %v139 = vld [vmem:[%s7 + $0x4] sm:$0xf]
  %v144 = vunpack.c.l.b16 %v134
  %v145 = vunpack.c.l.b16 %v135
  %v146 = vunpack.c.l.b16 %v136
  %v147 = vunpack.c.l.b16 %v137
  %v148 = vpack.c.b16 %v145, %v144
  %v149 = vpack.c.b16 %v147, %v146
  %v152 = vunpack.c.l.b16 %v138
  %v153 = vunpack.c.l.b16 %v139
  %v154 = vpack.c.b16 %v153, %v152
  %v157 = vsel %vm67, %v148, 0
  %v160 = vsel %vm67, %v149, 0
  %162 = vmatpush.bf16.msra.mxu0 0
  %163 = vmatpush.bf16.msra.mxu0 0
  %164 = vmatpush.bf16.msra.mxu0 0
  %165 = vmatpush.bf16.msra.mxu0 0
  %166 = vmatpush.bf16.msra.mxu0 0
  %167 = vmatpush.bf16.msra.mxu0 0
  %168 = vmatpush.bf16.msra.mxu0 0
  %169 = vmatpush.bf16.msra.mxu0 %v154
  %170 = vmatmul.bf16.gmra.mxu0 %v157
  %v171 = vpop.f32.mrf.mxu0
  %v172 = vadd.f32 0.0, %v171
  %v173 = vpop.f32.mrf.mxu0
  %v174 = vadd.f32 0.0, %v173
  %175 = vmatmul.bf16.gmra.mxu0 %v160
  %v176 = vpop.f32.mrf.mxu0
  %v177 = vadd.f32 0.0, %v176
  %v178 = vpop.f32.mrf.mxu0
  %v179 = vadd.f32 0.0, %v178
  %180 = vdwg.mxu0
  %v181 = vadd.f32 %v125, %v172
  %v182 = vadd.f32 %v127, %v174
  %v183 = vadd.f32 %v130, %v177
  %v184 = vadd.f32 %v132, %v179
  %v185 = vld [vmem:[%s3] sm:$0xf]
  %v186 = vld [vmem:[%s3 + $0x4] sm:$0xf]
  %v187 = vld [vmem:[%s3 + $0x8] sm:$0xf]
  %v188 = vld [vmem:[%s3 + $0xc] sm:$0xf]
  %v189 = vld [vmem:[%s8] sm:$0xf]
  %v190 = vld [vmem:[%s8 + $0x4] sm:$0xf]
  %v195 = vunpack.c.l.b16 %v185
  %v196 = vunpack.c.l.b16 %v186
  %v197 = vunpack.c.l.b16 %v187
  %v198 = vunpack.c.l.b16 %v188
  %v199 = vpack.c.b16 %v196, %v195
  %v200 = vpack.c.b16 %v198, %v197
  %v203 = vunpack.c.l.b16 %v189
  %v204 = vunpack.c.l.b16 %v190
  %v205 = vpack.c.b16 %v204, %v203
  %v208 = vsel %vm67, %v199, 0
  %v211 = vsel %vm67, %v200, 0
  %213 = vmatpush.bf16.msra.mxu0 0
  %214 = vmatpush.bf16.msra.mxu0 0
  %215 = vmatpush.bf16.msra.mxu0 0
  %216 = vmatpush.bf16.msra.mxu0 0
  %217 = vmatpush.bf16.msra.mxu0 0
  %218 = vmatpush.bf16.msra.mxu0 0
  %219 = vmatpush.bf16.msra.mxu0 0
  %220 = vmatpush.bf16.msra.mxu0 %v205
  %221 = vmatmul.bf16.gmra.mxu0 %v208
  %v222 = vpop.f32.mrf.mxu0
  %v223 = vadd.f32 0.0, %v222
  %v224 = vpop.f32.mrf.mxu0
  %v225 = vadd.f32 0.0, %v224
  %226 = vmatmul.bf16.gmra.mxu0 %v211
  %v227 = vpop.f32.mrf.mxu0
  %v228 = vadd.f32 0.0, %v227
  %v229 = vpop.f32.mrf.mxu0
  %v230 = vadd.f32 0.0, %v229
  %231 = vdwg.mxu0
  %v232 = vadd.f32 %v181, %v223
  %v233 = vadd.f32 %v182, %v225
  %v234 = vadd.f32 %v183, %v228
  %v235 = vadd.f32 %v184, %v230
  %v236 = vld [vmem:[%s4] sm:$0xf]
  %v237 = vld [vmem:[%s4 + $0x4] sm:$0xf]
  %v238 = vld [vmem:[%s4 + $0x8] sm:$0xf]
  %v239 = vld [vmem:[%s4 + $0xc] sm:$0xf]
  %v240 = vld [vmem:[%s9] sm:$0xf]
  %v241 = vld [vmem:[%s9 + $0x4] sm:$0xf]
  %v246 = vunpack.c.l.b16 %v236
  %v247 = vunpack.c.l.b16 %v237
  %v248 = vunpack.c.l.b16 %v238
  %v249 = vunpack.c.l.b16 %v239
  %v250 = vpack.c.b16 %v247, %v246
  %v251 = vpack.c.b16 %v249, %v248
  %v254 = vunpack.c.l.b16 %v240
  %v255 = vunpack.c.l.b16 %v241
  %v256 = vpack.c.b16 %v255, %v254
  %v259 = vsel %vm67, %v250, 0
  %v262 = vsel %vm67, %v251, 0
  %264 = vmatpush.bf16.msra.mxu0 0
  %265 = vmatpush.bf16.msra.mxu0 0
  %266 = vmatpush.bf16.msra.mxu0 0
  %267 = vmatpush.bf16.msra.mxu0 0
  %268 = vmatpush.bf16.msra.mxu0 0
  %269 = vmatpush.bf16.msra.mxu0 0
  %270 = vmatpush.bf16.msra.mxu0 0
  %271 = vmatpush.bf16.msra.mxu0 %v256
  %272 = vmatmul.bf16.gmra.mxu0 %v259
  %v273 = vpop.f32.mrf.mxu0
  %v274 = vadd.f32 0.0, %v273
  %v275 = vpop.f32.mrf.mxu0
  %v276 = vadd.f32 0.0, %v275
  %277 = vmatmul.bf16.gmra.mxu0 %v262
  %v278 = vpop.f32.mrf.mxu0
  %v279 = vadd.f32 0.0, %v278
  %v280 = vpop.f32.mrf.mxu0
  %v281 = vadd.f32 0.0, %v280
  %282 = vdwg.mxu0
  %v283 = vadd.f32 %v232, %v274
  %v284 = vadd.f32 %v233, %v276
  %v285 = vadd.f32 %v234, %v279
  %v286 = vadd.f32 %v235, %v281
  %v287 = vld [vmem:[%s10] sm:$0x1]
  %v289 = vperm.slane %v287, 0
  %v291 = vadd.f32 %v283, %v289
  %v292 = vadd.f32 %v284, %v289
  %v293 = vadd.f32 %v285, %v289
  %v294 = vadd.f32 %v286, %v289
  %v295 = vmax.f32 %v291, 0.0
  %v296 = vmax.f32 %v292, 0.0
  %v297 = vmax.f32 %v293, 0.0
  %v298 = vmax.f32 %v294, 0.0
  %v299 = vpack.c.bf16 %v295, %v295
  %v300 = vpack.c.bf16 %v296, %v296
  %v301 = vpack.c.bf16 %v297, %v297
  %v302 = vpack.c.bf16 %v298, %v298
  %vm303 = vcmask 60416
  %304 = vst.msk [vmem:[%s11] sm:$0xf] %vm303, %v299
  %305 = vst.msk [vmem:[%s11 + $0x4] sm:$0xf] %vm303, %v300
  %306 = vst.msk [vmem:[%s11 + $0x8] sm:$0xf] %vm303, %v301
  %307 = vst.msk [vmem:[%s11 + $0xc] sm:$0xf] %vm303, %v302
  // Predicated region
  $region46: #{_lambda_.26} parent=0 // pred_check
    _
  $region47: #{_lambda_.26} parent=0 // pred_check_branch
    %309 = sbr.rel (0) target = $region49
  $region48: #{_lambda_.26} parent=0 // pred_region
    _
  $region49: #{_lambda_.26} parent=0 // pred_fallthru
    _
  // Predicated region
  $region50: #{_lambda_.26} parent=0 // pred_check
    _
  $region51: #{_lambda_.26} parent=0 // pred_check_branch
    %311 = sbr.rel (0) target = $region53
  $region52: #{_lambda_.26} parent=0 // pred_region
    _
  $region53: #{_lambda_.26} parent=0 // pred_fallthru
    _

// kernel: _lambda_.27
$region0: #{_lambda_.27}
  #allocation0 [shape = 'u32[]', space=smem, size = 0x4, offset = 0x4, fixed_abs, tag = 'smem constant byte address 0x4 - core index']
  #allocation1 [shape = 'u32[72,128]{1,0:T(1,128)}', space=vmem, size = 0x9000, scoped, tag = 'internal scratch']
  #allocation2 [shape = 'f32[32,8]{1,0:T(8,128)}', space=vmem, size = 0x4000, scoped, tag = 'scratch operand']
  %s0 = inlined_call_operand.vmem [shape: bf16[32,8], index: 0, kind: input, shape index: {}]
  %s1 = inlined_call_operand.vmem [shape: bf16[8,8], index: 1, kind: input, shape index: {}]
  %s2 = inlined_call_operand.vmem [shape: f32[1,8], index: 2, kind: input, shape index: {}]
  %s3 = inlined_call_operand.vmem [shape: bf16[8,4], index: 3, kind: input, shape index: {}]
  %s4 = inlined_call_operand.vmem [shape: f32[1,4], index: 4, kind: input, shape index: {}]
  %s5 = inlined_call_operand.vmem [shape: f32[32,4], index: 5, kind: output, shape index: {}]
  %s6 = sld [smem:[#allocation0]]
  $region38: #{_lambda_.27} parent=0
    _
  %s8 = ssub.s32 1, %s6
  %s9 = scalar_select 0, %s8, %s6
  // Predicated region
  $region2: #{_lambda_.27} parent=0 // pred_check
    _
  $region3: #{_lambda_.27} parent=0 // pred_check_branch
    %11 = sbr.rel (0) target = $region5
  $region4: #{_lambda_.27} parent=0 // pred_region
    _
  $region5: #{_lambda_.27} parent=0 // pred_fallthru
    _
  // Predicated region
  $region6: #{_lambda_.27} parent=0 // pred_check
    _
  $region7: #{_lambda_.27} parent=0 // pred_check_branch
    %13 = sbr.rel (0) target = $region9
  $region8: #{_lambda_.27} parent=0 // pred_region
    _
  $region9: #{_lambda_.27} parent=0 // pred_fallthru
    _
  // Predicated region
  $region10: #{_lambda_.27} parent=0 // pred_check
    _
  $region11: #{_lambda_.27} parent=0 // pred_check_branch
    %15 = sbr.rel (0) target = $region13
  $region12: #{_lambda_.27} parent=0 // pred_region
    _
  $region13: #{_lambda_.27} parent=0 // pred_fallthru
    _
  // Predicated region
  $region14: #{_lambda_.27} parent=0 // pred_check
    _
  $region15: #{_lambda_.27} parent=0 // pred_check_branch
    %17 = sbr.rel (0) target = $region17
  $region16: #{_lambda_.27} parent=0 // pred_region
    _
  $region17: #{_lambda_.27} parent=0 // pred_fallthru
    _
  // Predicated region
  $region18: #{_lambda_.27} parent=0 // pred_check
    _
  $region19: #{_lambda_.27} parent=0 // pred_check_branch
    %19 = sbr.rel (0) target = $region21
  $region20: #{_lambda_.27} parent=0 // pred_region
    _
  $region21: #{_lambda_.27} parent=0 // pred_fallthru
    _
  %p21 = scmp.eq.s32.totalorder 0, 0
  // Predicated region
  $region22: #{_lambda_.27} parent=0 // pred_check
    %p22 = pneg %p21
  $region23: #{_lambda_.27} parent=0 // pred_check_branch
    %24 = sbr.rel (%p22) target = $region25
  $region24: #{_lambda_.27} parent=0 // pred_region
    %vm25 = vcmask 64512
    %26 = vst.msk [vmem:[#allocation2] sm:$0xff] %vm25, 0.0
    %27 = vst.msk [vmem:[#allocation2 + $0x8] sm:$0xff] %vm25, 0.0
    %28 = vst.msk [vmem:[#allocation2 + $0x10] sm:$0xff] %vm25, 0.0
    %29 = vst.msk [vmem:[#allocation2 + $0x18] sm:$0xff] %vm25, 0.0
  $region25: #{_lambda_.27} parent=0 // pred_fallthru
    _
  %v30 = vld [vmem:[#allocation2] sm:$0xff]
  %v31 = vld [vmem:[#allocation2 + $0x8] sm:$0xff]
  %v32 = vld [vmem:[#allocation2 + $0x10] sm:$0xff]
  %v33 = vld [vmem:[#allocation2 + $0x18] sm:$0xff]
  %v34 = vld [vmem:[%s0] sm:$0xf]
  %v35 = vld [vmem:[%s0 + $0x4] sm:$0xf]
  %v36 = vld [vmem:[%s0 + $0x8] sm:$0xf]
  %v37 = vld [vmem:[%s0 + $0xc] sm:$0xf]
  %v38 = vld [vmem:[%s1] sm:$0xf]
  %v43 = vunpack.c.l.b16 %v34
  %v44 = vunpack.c.l.b16 %v35
  %v45 = vunpack.c.l.b16 %v36
  %v46 = vunpack.c.l.b16 %v37
  %v47 = vpack.c.b16 %v44, %v43
  %v48 = vpack.c.b16 %v46, %v45
  %vm49 = vcmask 64512
  %v51 = vsel %vm49, %v47, 0
  %v54 = vsel %vm49, %v48, 0
  %vm56 = vcmask 1043456
  %v58 = vsel %vm56, %v38, 0
  %60 = vmatpush.bf16.msra.mxu0 0
  %61 = vmatpush.bf16.msra.mxu0 0
  %62 = vmatpush.bf16.msra.mxu0 0
  %63 = vmatpush.bf16.msra.mxu0 0
  %64 = vmatpush.bf16.msra.mxu0 0
  %65 = vmatpush.bf16.msra.mxu0 0
  %66 = vmatpush.bf16.msra.mxu0 0
  %67 = vmatpush.bf16.msra.mxu0 %v58
  %68 = vmatmul.bf16.gmra.mxu0 %v51
  %v69 = vpop.f32.mrf.mxu0
  %v70 = vadd.f32 0.0, %v69
  %v71 = vpop.f32.mrf.mxu0
  %v72 = vadd.f32 0.0, %v71
  %73 = vmatmul.bf16.gmra.mxu0 %v54
  %v74 = vpop.f32.mrf.mxu0
  %v75 = vadd.f32 0.0, %v74
  %v76 = vpop.f32.mrf.mxu0
  %v77 = vadd.f32 0.0, %v76
  %78 = vdwg.mxu0
  %v79 = vadd.f32 %v30, %v70
  %v80 = vadd.f32 %v31, %v72
  %v81 = vadd.f32 %v32, %v75
  %v82 = vadd.f32 %v33, %v77
  %83 = vst.msk [vmem:[#allocation2] sm:$0xff] %vm49, %v79
  %84 = vst.msk [vmem:[#allocation2 + $0x8] sm:$0xff] %vm49, %v80
  %85 = vst.msk [vmem:[#allocation2 + $0x10] sm:$0xff] %vm49, %v81
  %86 = vst.msk [vmem:[#allocation2 + $0x18] sm:$0xff] %vm49, %v82
  // Predicated region
  $region26: #{_lambda_.27} parent=0 // pred_check
    %p87 = pneg %p21
  $region27: #{_lambda_.27} parent=0 // pred_check_branch
    %89 = sbr.rel (%p87) target = $region29
  $region28: #{_lambda_.27} parent=0 // pred_region
    %v90 = vld [vmem:[#allocation2] sm:$0xff]
    %v91 = vld [vmem:[#allocation2 + $0x8] sm:$0xff]
    %v92 = vld [vmem:[#allocation2 + $0x10] sm:$0xff]
    %v93 = vld [vmem:[#allocation2 + $0x18] sm:$0xff]
    %v94 = vld [vmem:[%s2] sm:$0x1]
    %v96 = vperm.slane %v94, 0
    %v98 = vadd.f32 %v90, %v96
    %v99 = vadd.f32 %v91, %v96
    %v100 = vadd.f32 %v92, %v96
    %v101 = vadd.f32 %v93, %v96
    %v102 = vmax.f32 %v98, 0.0
    %v103 = vmax.f32 %v99, 0.0
    %v104 = vmax.f32 %v100, 0.0
    %v105 = vmax.f32 %v101, 0.0
    %v106 = vpack.c.bf16 %v103, %v102
    %v107 = vpack.c.bf16 %v105, %v104
    %v108 = vld [vmem:[%s3] sm:$0xf]
    %v109 = vld [vmem:[%s4] sm:$0x1]
    %v111 = vperm.slane %v109, 0
    %v114 = vsel %vm49, %v106, 0
    %v117 = vsel %vm49, %v107, 0
    %v120 = vsel %vm56, %v108, 0
    %122 = vmatpush.bf16.msra.mxu0 0
    %123 = vmatpush.bf16.msra.mxu0 0
    %124 = vmatpush.bf16.msra.mxu0 0
    %125 = vmatpush.bf16.msra.mxu0 0
    %126 = vmatpush.bf16.msra.mxu0 0
    %127 = vmatpush.bf16.msra.mxu0 0
    %128 = vmatpush.bf16.msra.mxu0 0
    %129 = vmatpush.bf16.msra.mxu0 %v120
    %130 = vmatmul.bf16.gmra.mxu0 %v114
    %v131 = vpop.f32.mrf.mxu0
    %v132 = vadd.f32 %v111, %v131
    %v133 = vpop.f32.mrf.mxu0
    %v134 = vadd.f32 %v111, %v133
    %135 = vmatmul.bf16.gmra.mxu0 %v117
    %v136 = vpop.f32.mrf.mxu0
    %v137 = vadd.f32 %v111, %v136
    %v138 = vpop.f32.mrf.mxu0
    %v139 = vadd.f32 %v111, %v138
    %140 = vdwg.mxu0
    %vm141 = vcmask 31744
    %142 = vst.msk [vmem:[%s5] sm:$0xff] %vm141, %v132
    %143 = vst.msk [vmem:[%s5 + $0x8] sm:$0xff] %vm141, %v134
    %144 = vst.msk [vmem:[%s5 + $0x10] sm:$0xff] %vm141, %v137
    %145 = vst.msk [vmem:[%s5 + $0x18] sm:$0xff] %vm141, %v139
  $region29: #{_lambda_.27} parent=0 // pred_fallthru
    _
  // Predicated region
  $region30: #{_lambda_.27} parent=0 // pred_check
    _
  $region31: #{_lambda_.27} parent=0 // pred_check_branch
    %147 = sbr.rel (0) target = $region33
  $region32: #{_lambda_.27} parent=0 // pred_region
    _
  $region33: #{_lambda_.27} parent=0 // pred_fallthru
    _
  // Predicated region
  $region34: #{_lambda_.27} parent=0 // pred_check
    _
  $region35: #{_lambda_.27} parent=0 // pred_check_branch
    %149 = sbr.rel (0) target = $region37
  $region36: #{_lambda_.27} parent=0 // pred_region
    _
  $region37: #{_lambda_.27} parent=0 // pred_fallthru
    _

// kernel: _lambda_.19
$region0: #{_lambda_.19}
  #allocation0 [shape = 'u32[]', space=smem, size = 0x4, offset = 0x4, fixed_abs, tag = 'smem constant byte address 0x4 - core index']
  #allocation1 [shape = 'u32[72,128]{1,0:T(1,128)}', space=vmem, size = 0x9000, scoped, tag = 'internal scratch']
  #allocation2 [shape = 'f32[32,64]{1,0:T(8,128)}', space=vmem, size = 0x4000, scoped, tag = 'scratch operand']
  %s0 = inlined_call_operand.vmem [shape: bf16[32,64], index: 0, kind: input, shape index: {}]
  %s1 = inlined_call_operand.vmem [shape: bf16[64,64], index: 1, kind: input, shape index: {}]
  %s2 = inlined_call_operand.vmem [shape: f32[1,64], index: 2, kind: input, shape index: {}]
  %s3 = inlined_call_operand.vmem [shape: bf16[64,8], index: 3, kind: input, shape index: {}]
  %s4 = inlined_call_operand.vmem [shape: f32[1,8], index: 4, kind: input, shape index: {}]
  %s5 = inlined_call_operand.hbm [shape: f32[32,8], index: 5, kind: output, shape index: {}]
  %s6 = sld [smem:[#allocation0]]
  $region38: #{_lambda_.19} parent=0
    _
  %s8 = ssub.s32 1, %s6
  %s9 = scalar_select 0, %s8, %s6
  $region1: #{_lambda_.19} parent=0
    #allocation3 [shape = 'u8[16384]{0}', space=vmem, size = 0x4000, scoped, tag = 'output window, operand 0, single buffered']
    #allocation4 [shape = 's32[1]{0}', space=sflag, size = 0x4, scoped, tag = 'scoped memory for _lambda_.19']
    %10 = vsyncpa [#allocation4], 0
    // Predicated region
    $region2: #{_lambda_.19} parent=1 // pred_check
      _
    $region3: #{_lambda_.19} parent=1 // pred_check_branch
      %12 = sbr.rel (0) target = $region5
    $region4: #{_lambda_.19} parent=1 // pred_region
      _
    $region5: #{_lambda_.19} parent=1 // pred_fallthru
      _
    // Predicated region
    $region6: #{_lambda_.19} parent=1 // pred_check
      _
    $region7: #{_lambda_.19} parent=1 // pred_check_branch
      %14 = sbr.rel (0) target = $region9
    $region8: #{_lambda_.19} parent=1 // pred_region
      _
    $region9: #{_lambda_.19} parent=1 // pred_fallthru
      _
    // Predicated region
    $region10: #{_lambda_.19} parent=1 // pred_check
      _
    $region11: #{_lambda_.19} parent=1 // pred_check_branch
      %16 = sbr.rel (0) target = $region13
    $region12: #{_lambda_.19} parent=1 // pred_region
      _
    $region13: #{_lambda_.19} parent=1 // pred_fallthru
      _
    // Predicated region
    $region14: #{_lambda_.19} parent=1 // pred_check
      _
    $region15: #{_lambda_.19} parent=1 // pred_check_branch
      %18 = sbr.rel (0) target = $region17
    $region16: #{_lambda_.19} parent=1 // pred_region
      _
    $region17: #{_lambda_.19} parent=1 // pred_fallthru
      _
    // Predicated region
    $region18: #{_lambda_.19} parent=1 // pred_check
      _
    $region19: #{_lambda_.19} parent=1 // pred_check_branch
      %20 = sbr.rel (0) target = $region21
    $region20: #{_lambda_.19} parent=1 // pred_region
      _
    $region21: #{_lambda_.19} parent=1 // pred_fallthru
      _
    %p22 = scmp.eq.s32.totalorder 0, 0
    // Predicated region
    $region22: #{_lambda_.19} parent=1 // pred_check
      %p23 = pneg %p22
    $region23: #{_lambda_.19} parent=1 // pred_check_branch
      %25 = sbr.rel (%p23) target = $region25
    $region24: #{_lambda_.19} parent=1 // pred_region
      %vm26 = vcmask 523264
      %27 = vst.msk [vmem:[#allocation2] sm:$0xff] %vm26, 0.0
      %28 = vst.msk [vmem:[#allocation2 + $0x8] sm:$0xff] %vm26, 0.0
      %29 = vst.msk [vmem:[#allocation2 + $0x10] sm:$0xff] %vm26, 0.0
      %30 = vst.msk [vmem:[#allocation2 + $0x18] sm:$0xff] %vm26, 0.0
    $region25: #{_lambda_.19} parent=1 // pred_fallthru
      _
    %v31 = vld [vmem:[#allocation2] sm:$0xff]
    %v32 = vld [vmem:[#allocation2 + $0x8] sm:$0xff]
    %v33 = vld [vmem:[#allocation2 + $0x10] sm:$0xff]
    %v34 = vld [vmem:[#allocation2 + $0x18] sm:$0xff]
    %v35 = vld [vmem:[%s0] sm:$0xf]
    %v36 = vld [vmem:[%s0 + $0x4] sm:$0xf]
    %v37 = vld [vmem:[%s0 + $0x8] sm:$0xf]
    %v38 = vld [vmem:[%s0 + $0xc] sm:$0xf]
    %v39 = vld [vmem:[%s1] sm:$0xf]
    %v40 = vld [vmem:[%s1 + $0x4] sm:$0xf]
    %v41 = vld [vmem:[%s1 + $0x8] sm:$0xf]
    %v42 = vld [vmem:[%s1 + $0xc] sm:$0xf]
    %v43 = vld [vmem:[%s1 + $0x10] sm:$0xf]
    %v44 = vld [vmem:[%s1 + $0x14] sm:$0xf]
    %v45 = vld [vmem:[%s1 + $0x18] sm:$0xf]
    %v46 = vld [vmem:[%s1 + $0x1c] sm:$0xf]
    %v51 = vunpack.c.l.b16 %v35
    %v52 = vunpack.c.l.b16 %v36
    %v53 = vunpack.c.l.b16 %v37
    %v54 = vunpack.c.l.b16 %v38
    %v55 = vpack.c.b16 %v52, %v51
    %v56 = vpack.c.b16 %v54, %v53
    %v65 = vunpack.c.l.b16 %v39
    %v66 = vunpack.c.l.b16 %v40
    %v67 = vunpack.c.l.b16 %v41
    %v68 = vunpack.c.l.b16 %v42
    %v69 = vunpack.c.l.b16 %v43
    %v70 = vunpack.c.l.b16 %v44
    %v71 = vunpack.c.l.b16 %v45
    %v72 = vunpack.c.l.b16 %v46
    %v73 = vpack.c.b16 %v66, %v65
    %v74 = vpack.c.b16 %v68, %v67
    %v75 = vpack.c.b16 %v70, %v69
    %v76 = vpack.c.b16 %v72, %v71
    %vm81 = vcmask 523264
    %v83 = vsel %vm81, %v55, 0
    %v86 = vsel %vm81, %v56, 0
    %88 = vmatpush.bf16.msra.mxu0 0
    %89 = vmatpush.bf16.msra.mxu0 0
    %90 = vmatpush.bf16.msra.mxu0 0
    %91 = vmatpush.bf16.msra.mxu0 0
    %92 = vmatpush.bf16.msra.mxu0 %v76
    %93 = vmatpush.bf16.msra.mxu0 %v75
    %94 = vmatpush.bf16.msra.mxu0 %v74
    %95 = vmatpush.bf16.msra.mxu0 %v73
    %96 = vmatmul.bf16.gmra.mxu0 %v83
    %v97 = vpop.f32.mrf.mxu0
    %v98 = vadd.f32 0.0, %v97
    %v99 = vpop.f32.mrf.mxu0
    %v100 = vadd.f32 0.0, %v99
    %101 = vmatmul.bf16.gmra.mxu0 %v86
    %v102 = vpop.f32.mrf.mxu0
    %v103 = vadd.f32 0.0, %v102
    %v104 = vpop.f32.mrf.mxu0
    %v105 = vadd.f32 0.0, %v104
    %106 = vdwg.mxu0
    %v107 = vadd.f32 %v31, %v98
    %v108 = vadd.f32 %v32, %v100
    %v109 = vadd.f32 %v33, %v103
    %v110 = vadd.f32 %v34, %v105
    %111 = vst.msk [vmem:[#allocation2] sm:$0xff] %vm81, %v107
    %112 = vst.msk [vmem:[#allocation2 + $0x8] sm:$0xff] %vm81, %v108
    %113 = vst.msk [vmem:[#allocation2 + $0x10] sm:$0xff] %vm81, %v109
    %114 = vst.msk [vmem:[#allocation2 + $0x18] sm:$0xff] %vm81, %v110
    // Predicated region
    $region26: #{_lambda_.19} parent=1 // pred_check
      %p115 = pneg %p22
    $region27: #{_lambda_.19} parent=1 // pred_check_branch
      %117 = sbr.rel (%p115) target = $region29
    $region28: #{_lambda_.19} parent=1 // pred_region
      %v118 = vld [vmem:[#allocation2] sm:$0xff]
      %v119 = vld [vmem:[#allocation2 + $0x8] sm:$0xff]
      %v120 = vld [vmem:[#allocation2 + $0x10] sm:$0xff]
      %v121 = vld [vmem:[#allocation2 + $0x18] sm:$0xff]
      %v122 = vld [vmem:[%s2] sm:$0x1]
      %v124 = vperm.slane %v122, 0
      %v126 = vadd.f32 %v118, %v124
      %v127 = vadd.f32 %v119, %v124
      %v128 = vadd.f32 %v120, %v124
      %v129 = vadd.f32 %v121, %v124
      %v130 = vmax.f32 %v126, 0.0
      %v131 = vmax.f32 %v127, 0.0
      %v132 = vmax.f32 %v128, 0.0
      %v133 = vmax.f32 %v129, 0.0
      %v134 = vpack.c.bf16 %v131, %v130
      %v135 = vpack.c.bf16 %v133, %v132
      %v136 = vld [vmem:[%s3] sm:$0xf]
      %v137 = vld [vmem:[%s3 + $0x4] sm:$0xf]
      %v138 = vld [vmem:[%s3 + $0x8] sm:$0xf]
      %v139 = vld [vmem:[%s3 + $0xc] sm:$0xf]
      %v140 = vld [vmem:[%s3 + $0x10] sm:$0xf]
      %v141 = vld [vmem:[%s3 + $0x14] sm:$0xf]
      %v142 = vld [vmem:[%s3 + $0x18] sm:$0xf]
      %v143 = vld [vmem:[%s3 + $0x1c] sm:$0xf]
      %v144 = vld [vmem:[%s4] sm:$0x1]
      %v146 = vperm.slane %v144, 0
      %v156 = vunpack.c.l.b16 %v136
      %v157 = vunpack.c.l.b16 %v137
      %v158 = vunpack.c.l.b16 %v138
      %v159 = vunpack.c.l.b16 %v139
      %v160 = vunpack.c.l.b16 %v140
      %v161 = vunpack.c.l.b16 %v141
      %v162 = vunpack.c.l.b16 %v142
      %v163 = vunpack.c.l.b16 %v143
      %v164 = vpack.c.b16 %v157, %v156
      %v165 = vpack.c.b16 %v159, %v158
      %v166 = vpack.c.b16 %v161, %v160
      %v167 = vpack.c.b16 %v163, %v162
      %v173 = vsel %vm81, %v134, 0
      %v176 = vsel %vm81, %v135, 0
      %178 = vmatpush.bf16.msra.mxu0 0
      %179 = vmatpush.bf16.msra.mxu0 0
      %180 = vmatpush.bf16.msra.mxu0 0
      %181 = vmatpush.bf16.msra.mxu0 0
      %182 = vmatpush.bf16.msra.mxu0 %v167
      %183 = vmatpush.bf16.msra.mxu0 %v166
      %184 = vmatpush.bf16.msra.mxu0 %v165
      %185 = vmatpush.bf16.msra.mxu0 %v164
      %186 = vmatmul.bf16.gmra.mxu0 %v173
      %v187 = vpop.f32.mrf.mxu0
      %v188 = vadd.f32 %v146, %v187
      %v189 = vpop.f32.mrf.mxu0
      %v190 = vadd.f32 %v146, %v189
      %191 = vmatmul.bf16.gmra.mxu0 %v176
      %v192 = vpop.f32.mrf.mxu0
      %v193 = vadd.f32 %v146, %v192
      %v194 = vpop.f32.mrf.mxu0
      %v195 = vadd.f32 %v146, %v194
      %196 = vdwg.mxu0
      %v197 = vmul.f32 %v188, %v188
      %v198 = vmul.f32 %v190, %v190
      %v199 = vmul.f32 %v193, %v193
      %v200 = vmul.f32 %v195, %v195
      %vm201 = vcmask 64512
      %v202 = vsel %vm201, %v197, 0.0
      %203 = vadd.xlane.f32.xlu0 %v202
      %v204 = vpop.xlane.xlu0 %203
      %v205 = vsel %vm201, %v198, 0.0
      %206 = vadd.xlane.f32.xlu0 %v205
      %v207 = vpop.xlane.xlu0 %206
      %v208 = vsel %vm201, %v199, 0.0
      %209 = vadd.xlane.f32.xlu0 %v208
      %v210 = vpop.xlane.xlu0 %209
      %v211 = vsel %vm201, %v200, 0.0
      %212 = vadd.xlane.f32.xlu0 %v211
      %v213 = vpop.xlane.xlu0 %212
      %v214 = vmax.f32 %v204, 1e-24
      %v215 = vmax.f32 %v207, 1e-24
      %v216 = vmax.f32 %v210, 1e-24
      %v217 = vmax.f32 %v213, 1e-24
      %v218 = vrsqrt.pop %v214
      %v219 = vmul.f32 %v218, %v214
      %v220 = vmul.f32 %v219, %v218
      %v221 = vmul.f32 0.5, %v220
      %v222 = vsub.f32 1.5, %v221
      %v223 = vmul.f32 %v218, %v222
      %vm224 = vweird.f32 %v214
      %vm225 = vweird.f32 %v218
      %vm226 = vmor %vm224, %vm225
      %v227 = vsel %vm226, %v218, %v223
      %v228 = vrsqrt.pop %v215
      %v229 = vmul.f32 %v228, %v215
      %v230 = vmul.f32 %v229, %v228
      %v231 = vmul.f32 0.5, %v230
      %v232 = vsub.f32 1.5, %v231
      %v233 = vmul.f32 %v228, %v232
      %vm234 = vweird.f32 %v215
      %vm235 = vweird.f32 %v228
      %vm236 = vmor %vm234, %vm235
      %v237 = vsel %vm236, %v228, %v233
      %v238 = vrsqrt.pop %v216
      %v239 = vmul.f32 %v238, %v216
      %v240 = vmul.f32 %v239, %v238
      %v241 = vmul.f32 0.5, %v240
      %v242 = vsub.f32 1.5, %v241
      %v243 = vmul.f32 %v238, %v242
      %vm244 = vweird.f32 %v216
      %vm245 = vweird.f32 %v238
      %vm246 = vmor %vm244, %vm245
      %v247 = vsel %vm246, %v238, %v243
      %v248 = vrsqrt.pop %v217
      %v249 = vmul.f32 %v248, %v217
      %v250 = vmul.f32 %v249, %v248
      %v251 = vmul.f32 0.5, %v250
      %v252 = vsub.f32 1.5, %v251
      %v253 = vmul.f32 %v248, %v252
      %vm254 = vweird.f32 %v217
      %vm255 = vweird.f32 %v248
      %vm256 = vmor %vm254, %vm255
      %v257 = vsel %vm256, %v248, %v253
      %v258 = vmul.f32 %v188, %v227
      %v259 = vmul.f32 %v190, %v237
      %v260 = vmul.f32 %v193, %v247
      %v261 = vmul.f32 %v195, %v257
      %262 = vst.msk [vmem:[#allocation3] sm:$0xff] %vm201, %v258
      %263 = vst.msk [vmem:[#allocation3 + $0x8] sm:$0xff] %vm201, %v259
      %264 = vst.msk [vmem:[#allocation3 + $0x10] sm:$0xff] %vm201, %v260
      %265 = vst.msk [vmem:[#allocation3 + $0x18] sm:$0xff] %vm201, %v261
    $region29: #{_lambda_.19} parent=1 // pred_fallthru
      _
    // Predicated region
    $region30: #{_lambda_.19} parent=1 // pred_check
      _
    $region31: #{_lambda_.19} parent=1 // pred_check_branch
      %267 = sbr.rel (0) target = $region33
    $region32: #{_lambda_.19} parent=1 // pred_region
      %269 = vsyncadd [#allocation4], 0
      %s270 = sshll.u32 [#allocation3], 4
      %s271 = int_to_ptr.vmem [resolvable:$true] %s270
      %s272 = sshll.u32 %s5, 4
      %s273 = int_to_ptr.hbm [resolvable:$true] %s272
      %278 = dma.vmem_to_hbm [thread:$0]  %s271, 512, %s273, [#allocation4], 128, 128, 8
    $region33: #{_lambda_.19} parent=1 // pred_fallthru
      _
    // Predicated region
    $region34: #{_lambda_.19} parent=1 // pred_check
      _
    $region35: #{_lambda_.19} parent=1 // pred_check_branch
      %280 = sbr.rel (0) target = $region37
    $region36: #{_lambda_.19} parent=1 // pred_region
      %282 = dma.done [#allocation4], 512
    $region37: #{_lambda_.19} parent=1 // pred_fallthru
      _
    %283 = vsyncpa [#allocation4], 1

</llo_original>
